<compile_context>
chip_gen: v5e
topology: v5e:2x2
jax: 0.10.0
libtpu: 0.0.40
codegen_flags: <defaults>
</compile_context>

<pallas_src>
import jax
import jax.numpy as jnp
import numpy as np
from jax.experimental import pallas as pl
from jax.experimental.pallas import tpu as pltpu


_EPS = 1e-5


# ---------------------------------------------------------------------------
# Generation-aware knobs
# ---------------------------------------------------------------------------
def _target_contraction():
    """Tap-stacking target = MXU contraction depth (256 on v6e/v7x, 128 <=v5)."""
    try:
        kind = jax.devices()[0].device_kind.lower()
    except Exception:
        return 256
    for old in ("v2", "v3", "v4", "v5"):
        if old in kind:
            return 128
    return 256


def _pick_block_batch(n, l):
    """Samples packed per grid step.

    Keep >= min(4, n) grid steps (>= 2 per TensorCore on a 2-core v7x, and
    room to pipeline elsewhere) and bound rows-per-step so the in-kernel
    intermediates stay comfortably inside VMEM on every generation.
    """
    min_steps = min(4, n)
    max_rows = 2048
    best = 1
    for nb in range(1, n + 1):
        if n % nb or (n // nb) < min_steps:
            continue
        if nb > 1 and nb * l > max_rows:
            continue
        best = nb
    return best


def _const_spec(a):
    nd = a.ndim
    return pl.BlockSpec(tuple(a.shape), lambda *_: (0,) * nd)


# ---------------------------------------------------------------------------
# Fused kernel: resblock1 -> resblock2 -> resblock3 -> GAP -> FC
# ---------------------------------------------------------------------------
def _make_fused_kernel(kss, L, nb, sc_flags, target_k):
    R = nb * L                      # packed rows per grid step (matmul M dim)

    def shift_rows(h, d):
        # out[r] = h[r + d]; rows shifted past the packed block become zero.
        if d == 0:
            return h
        c = h.shape[1]
        z = jnp.zeros((abs(d), c), h.dtype)
        if d > 0:
            return jnp.concatenate([h[d:, :], z], axis=0)
        return jnp.concatenate([z, h[: R + d, :]], axis=0)

    def conv_bn(hb, lpos, w_ref, b_ref, ks, relu):
        # hb: (R, C) bf16; w_ref: (ks*C, C_out) bf16 (BN scale folded);
        # b_ref: (1, C_out) f32 folded-BN bias.  'same' padding (odd ks).
        c = hb.shape[1]
        pad = ks // 2
        # Taps stacked per matmul so the contraction ~ fills the MXU depth.
        # (Narrow channel counts keep per-tap matmuls: avoids sub-8-lane
        #  concatenation; the first conv is a negligible fraction of work.)
        gsz = max(1, target_k // c) if c % 8 == 0 else 1
        acc = None
        for k0 in range(0, ks, gsz):
            taps = list(range(k0, min(k0 + gsz, ks)))
            parts = []
            for k in taps:
                d = k - pad
                hk = shift_rows(hb, d)
                if d != 0 and nb > 1:
                    # zero rows whose source would cross a sample boundary
                    valid = (lpos + d >= 0) & (lpos + d < L)
                    hk = jnp.where(valid, hk, jnp.zeros_like(hk))
                parts.append(hk)
            lhs = parts[0] if len(parts) == 1 else jnp.concatenate(parts, axis=1)
            wg = w_ref[taps[0] * c:(taps[-1] + 1) * c, :]
            y = jnp.dot(lhs, wg, preferred_element_type=jnp.float32)
            acc = y if acc is None else acc + y
        acc = acc + b_ref[...]
        return jnp.maximum(acc, 0.0) if relu else acc

    def res_block(h32, lpos, refs, sc_conv):
        w1, b1, w2, b2, w3, b3, wsc, bsc = refs
        hb = h32.astype(jnp.bfloat16)
        y = conv_bn(hb, lpos, w1, b1, kss[0], True)
        y = conv_bn(y.astype(jnp.bfloat16), lpos, w2, b2, kss[1], True)
        y = conv_bn(y.astype(jnp.bfloat16), lpos, w3, b3, kss[2], False)
        if sc_conv:                               # 1x1 conv + BN shortcut
            sc = jnp.dot(hb, wsc[...], preferred_element_type=jnp.float32) + bsc[...]
        else:                                     # BN-only shortcut (f32 input)
            sc = h32 * wsc[...] + bsc[...]
        return jnp.maximum(y + sc, 0.0)           # (R, nf) f32

    def kernel(*refs):
        x_ref = refs[0]
        blk = refs[1:25]                          # 3 blocks x 8 weight refs
        wfc_ref, bfc_ref = refs[25], refs[26]
        emb_ref, out_ref = refs[27], refs[28]

        # local (within-sample) time position of every packed row
        lpos = jax.lax.broadcasted_iota(jnp.int32, (R, 1), 0) % L

        h = x_ref[0].astype(jnp.float32)                      # (R, c_in)
        h = res_block(h, lpos, blk[0:8], sc_flags[0])         # (R, 64)
        h = res_block(h, lpos, blk[8:16], sc_flags[1])        # (R, 128)
        z = res_block(h, lpos, blk[16:24], sc_flags[2])       # (R, 128)

        # Global average pool over time, per sample (never leaves VMEM).
        if nb == 1:
            pooled = jnp.mean(z, axis=0, keepdims=True)       # (1, 128)
        else:
            rs = jax.lax.broadcasted_iota(jnp.int32, (nb, R), 1) // L
            si = jax.lax.broadcasted_iota(jnp.int32, (nb, R), 0)
            sel = jnp.where(rs == si, 1.0 / L, 0.0)           # (nb, R) f32
            pooled = jnp.dot(sel, z, preferred_element_type=jnp.float32)

        # One batched FC matmul; logits lane-padded to 128 (unmasked stores).
        logits = jnp.dot(pooled.astype(jnp.bfloat16), wfc_ref[...],
                         preferred_element_type=jnp.float32) + bfc_ref[...]
        emb_ref[0] = pooled.astype(emb_ref.dtype)
        out_ref[0] = logits.astype(out_ref.dtype)

    return kernel


# ---------------------------------------------------------------------------
# Deterministic synthetic parameters (mirrors the PyTorch module shapes),
# with eval-mode BN folded into the conv weights at prep time.
# ---------------------------------------------------------------------------
def _bn_params(key, c):
    kg, kb, km, kv = jax.random.split(key, 4)
    gamma = jax.random.uniform(kg, (c,), jnp.float32, 0.5, 1.5)
    beta = jax.random.normal(kb, (c,), jnp.float32) * 0.1
    mean = jax.random.normal(km, (c,), jnp.float32) * 0.1
    var = jax.random.uniform(kv, (c,), jnp.float32, 0.5, 1.5)
    scale = gamma / jnp.sqrt(var + _EPS)
    bias = beta - mean * scale
    return scale, bias


def _conv_bn_params(key, c_in, c_out, k):
    """Conv1d weight with BN scale folded in; laid out as (k*c_in, c_out) bf16."""
    kw, kbn = jax.random.split(key)
    w = jax.random.normal(kw, (c_out, c_in, k), jnp.float32) / np.sqrt(c_in * k)
    scale, bias = _bn_params(kbn, c_out)
    w = w * scale[:, None, None]                             # fold BN scale
    w_col = jnp.transpose(w, (2, 1, 0)).reshape(k * c_in, c_out)   # tap-major
    return w_col.astype(jnp.bfloat16), bias.reshape(1, c_out)


def _resblock_params(key, ni, nf, kss):
    k1, k2, k3, ks = jax.random.split(key, 4)
    p = {}
    p["w1"], p["b1"] = _conv_bn_params(k1, ni, nf, kss[0])
    p["w2"], p["b2"] = _conv_bn_params(k2, nf, nf, kss[1])
    p["w3"], p["b3"] = _conv_bn_params(k3, nf, nf, kss[2])
    if ni != nf:
        p["wsc"], p["bsc"] = _conv_bn_params(ks, ni, nf, 1)  # 1x1 conv + BN (bf16)
    else:
        scale, bias = _bn_params(ks, ni)                     # BN-only shortcut (f32)
        p["wsc"], p["bsc"] = scale.reshape(1, ni), bias.reshape(1, ni)
    return p


def init_resnet_params(key, c_in, c_out, nf=64, kss=(7, 5, 3)):
    k1, k2, k3, kf = jax.random.split(key, 4)
    w_fc = jax.random.normal(kf, (c_out, nf * 2), jnp.float32) / np.sqrt(nf * 2)
    return {
        "rb1": _resblock_params(k1, c_in, nf, kss),
        "rb2": _resblock_params(k2, nf, nf * 2, kss),
        "rb3": _resblock_params(k3, nf * 2, nf * 2, kss),
        "fc_wt": jnp.transpose(w_fc),                   # (nf*2, c_out)
        "fc_b": jnp.zeros((1, c_out), jnp.float32),
    }


# ---------------------------------------------------------------------------
# Forward
# ---------------------------------------------------------------------------
def resnet_forward(x_ncl, params, kss=(7, 5, 3)):
    """x_ncl: (N, C_in, L) — same layout as the PyTorch module's Conv1d input."""
    N, c_in, L = x_ncl.shape
    nb = _pick_block_batch(N, L)
    steps = N // nb
    R = nb * L

    # channels -> lanes; pack nb samples' rows into the matmul M dimension
    x = jnp.transpose(x_ncl, (0, 2, 1)).reshape(steps, R, c_in)

    flat, sc_flags = [], []
    for name in ("rb1", "rb2", "rb3"):
        p = params[name]
        flat += [p["w1"], p["b1"], p["w2"], p["b2"], p["w3"], p["b3"],
                 p["wsc"], p["bsc"]]
        sc_flags.append(p["wsc"].dtype == jnp.bfloat16)   # conv shortcut vs BN-only

    nf2 = params["rb3"]["b3"].shape[1]
    wfc = params["fc_wt"]                                 # (nf2, c_out) f32
    bfc = params["fc_b"]                                  # (1, c_out) f32
    c_out = wfc.shape[1]
    cpad = ((c_out + 127) // 128) * 128                   # lane-dense logits
    wfc_p = jnp.pad(wfc, ((0, 0), (0, cpad - c_out))).astype(jnp.bfloat16)
    bfc_p = jnp.pad(bfc, ((0, 0), (0, cpad - c_out)))
    flat += [wfc_p, bfc_p]

    in_specs = [pl.BlockSpec((1, R, c_in), lambda g: (g, 0, 0))]
    in_specs += [_const_spec(a) for a in flat]
    out_specs = (pl.BlockSpec((1, nb, nf2), lambda g: (g, 0, 0)),
                 pl.BlockSpec((1, nb, cpad), lambda g: (g, 0, 0)))
    out_shape = (jax.ShapeDtypeStruct((steps, nb, nf2), jnp.float32),
                 jax.ShapeDtypeStruct((steps, nb, cpad), jnp.float32))

    kernel = _make_fused_kernel(tuple(kss), L, nb, tuple(sc_flags),
                                _target_contraction())

    emb, logits = pl.pallas_call(
        kernel,
        out_shape=out_shape,
        grid=(steps,),
        in_specs=in_specs,
        out_specs=out_specs,
        compiler_params=pltpu.CompilerParams(
            dimension_semantics=("parallel",),
            vmem_limit_bytes=48 * 1024 * 1024),
    )(x, *flat)

    emb = emb.reshape(N, nf2)
    logits = logits.reshape(N, cpad)[:, :c_out]
    return {"origin_out": logits, "x_embeddings": emb}


# ---------------------------------------------------------------------------
if __name__ == "__main__":
    key = jax.random.PRNGKey(0)
    kx, kp = jax.random.split(key)

    N, c_in, c_out, L = 2, 4, 3, 16
    x = jax.random.normal(kx, (N, c_in, L), jnp.float32)
    params = init_resnet_params(kp, c_in, c_out)

    fwd = jax.jit(resnet_forward)
    result = fwd(x, params)
    jax.block_until_ready(result)

    assert result["origin_out"].shape == (N, c_out)
    assert result["x_embeddings"].shape == (N, 128)
    print("KERNEL_OK")
</pallas_src>

<mosaic_0001>
module attributes {stable_mosaic.version = 11 : i64} {
  func.func @kernel(%arg0: i32, %arg1: memref<1x16x4xf32, #tpu.memory_space<vmem>>, %arg2: memref<28x64xbf16, #tpu.memory_space<vmem>>, %arg3: memref<1x64xf32, #tpu.memory_space<vmem>>, %arg4: memref<320x64xbf16, #tpu.memory_space<vmem>>, %arg5: memref<1x64xf32, #tpu.memory_space<vmem>>, %arg6: memref<192x64xbf16, #tpu.memory_space<vmem>>, %arg7: memref<1x64xf32, #tpu.memory_space<vmem>>, %arg8: memref<4x64xbf16, #tpu.memory_space<vmem>>, %arg9: memref<1x64xf32, #tpu.memory_space<vmem>>, %arg10: memref<448x128xbf16, #tpu.memory_space<vmem>>, %arg11: memref<1x128xf32, #tpu.memory_space<vmem>>, %arg12: memref<640x128xbf16, #tpu.memory_space<vmem>>, %arg13: memref<1x128xf32, #tpu.memory_space<vmem>>, %arg14: memref<384x128xbf16, #tpu.memory_space<vmem>>, %arg15: memref<1x128xf32, #tpu.memory_space<vmem>>, %arg16: memref<64x128xbf16, #tpu.memory_space<vmem>>, %arg17: memref<1x128xf32, #tpu.memory_space<vmem>>, %arg18: memref<896x128xbf16, #tpu.memory_space<vmem>>, %arg19: memref<1x128xf32, #tpu.memory_space<vmem>>, %arg20: memref<640x128xbf16, #tpu.memory_space<vmem>>, %arg21: memref<1x128xf32, #tpu.memory_space<vmem>>, %arg22: memref<384x128xbf16, #tpu.memory_space<vmem>>, %arg23: memref<1x128xf32, #tpu.memory_space<vmem>>, %arg24: memref<1x128xf32, #tpu.memory_space<vmem>>, %arg25: memref<1x128xf32, #tpu.memory_space<vmem>>, %arg26: memref<128x128xbf16, #tpu.memory_space<vmem>>, %arg27: memref<1x128xf32, #tpu.memory_space<vmem>>, %arg28: memref<1x1x128xf32, #tpu.memory_space<vmem>>, %arg29: memref<1x1x128xf32, #tpu.memory_space<vmem>>) attributes {dimension_semantics = [#tpu.dimension_semantics<parallel>], iteration_bounds = array<i64: 2>, scalar_prefetch = 0 : i64, scratch_operands = 0 : i64, tpu.core_type = #tpu.core_type<tc>, window_params = [{transform_indices = @transform_0, window_bounds = array<i64: 1, 16, 4>}, {pipeline_mode = #tpu.pipeline_mode<synchronous>, transform_indices = @transform_1, window_bounds = array<i64: 28, 64>}, {pipeline_mode = #tpu.pipeline_mode<synchronous>, transform_indices = @transform_2, window_bounds = array<i64: 1, 64>}, {pipeline_mode = #tpu.pipeline_mode<synchronous>, transform_indices = @transform_3, window_bounds = array<i64: 320, 64>}, {pipeline_mode = #tpu.pipeline_mode<synchronous>, transform_indices = @transform_4, window_bounds = array<i64: 1, 64>}, {pipeline_mode = #tpu.pipeline_mode<synchronous>, transform_indices = @transform_5, window_bounds = array<i64: 192, 64>}, {pipeline_mode = #tpu.pipeline_mode<synchronous>, transform_indices = @transform_6, window_bounds = array<i64: 1, 64>}, {pipeline_mode = #tpu.pipeline_mode<synchronous>, transform_indices = @transform_7, window_bounds = array<i64: 4, 64>}, {pipeline_mode = #tpu.pipeline_mode<synchronous>, transform_indices = @transform_8, window_bounds = array<i64: 1, 64>}, {pipeline_mode = #tpu.pipeline_mode<synchronous>, transform_indices = @transform_9, window_bounds = array<i64: 448, 128>}, {pipeline_mode = #tpu.pipeline_mode<synchronous>, transform_indices = @transform_10, window_bounds = array<i64: 1, 128>}, {pipeline_mode = #tpu.pipeline_mode<synchronous>, transform_indices = @transform_11, window_bounds = array<i64: 640, 128>}, {pipeline_mode = #tpu.pipeline_mode<synchronous>, transform_indices = @transform_12, window_bounds = array<i64: 1, 128>}, {pipeline_mode = #tpu.pipeline_mode<synchronous>, transform_indices = @transform_13, window_bounds = array<i64: 384, 128>}, {pipeline_mode = #tpu.pipeline_mode<synchronous>, transform_indices = @transform_14, window_bounds = array<i64: 1, 128>}, {pipeline_mode = #tpu.pipeline_mode<synchronous>, transform_indices = @transform_15, window_bounds = array<i64: 64, 128>}, {pipeline_mode = #tpu.pipeline_mode<synchronous>, transform_indices = @transform_16, window_bounds = array<i64: 1, 128>}, {pipeline_mode = #tpu.pipeline_mode<synchronous>, transform_indices = @transform_17, window_bounds = array<i64: 896, 128>}, {pipeline_mode = #tpu.pipeline_mode<synchronous>, transform_indices = @transform_18, window_bounds = array<i64: 1, 128>}, {pipeline_mode = #tpu.pipeline_mode<synchronous>, transform_indices = @transform_19, window_bounds = array<i64: 640, 128>}, {pipeline_mode = #tpu.pipeline_mode<synchronous>, transform_indices = @transform_20, window_bounds = array<i64: 1, 128>}, {pipeline_mode = #tpu.pipeline_mode<synchronous>, transform_indices = @transform_21, window_bounds = array<i64: 384, 128>}, {pipeline_mode = #tpu.pipeline_mode<synchronous>, transform_indices = @transform_22, window_bounds = array<i64: 1, 128>}, {pipeline_mode = #tpu.pipeline_mode<synchronous>, transform_indices = @transform_23, window_bounds = array<i64: 1, 128>}, {pipeline_mode = #tpu.pipeline_mode<synchronous>, transform_indices = @transform_24, window_bounds = array<i64: 1, 128>}, {pipeline_mode = #tpu.pipeline_mode<synchronous>, transform_indices = @transform_25, window_bounds = array<i64: 128, 128>}, {pipeline_mode = #tpu.pipeline_mode<synchronous>, transform_indices = @transform_26, window_bounds = array<i64: 1, 128>}, {transform_indices = @transform_27, window_bounds = array<i64: 1, 1, 128>}, {transform_indices = @transform_28, window_bounds = array<i64: 1, 1, 128>}]} {
    %c0 = arith.constant 0 : index
    %c0_0 = arith.constant 0 : index
    %c0_1 = arith.constant 0 : index
    %0 = vector.load %arg1[%c0, %c0_0, %c0_1] : memref<1x16x4xf32, #tpu.memory_space<vmem>>, vector<1x16x4xf32>
    %1 = vector.shape_cast %0 : vector<1x16x4xf32> to vector<16x4xf32>
    %2 = arith.truncf %1 : vector<16x4xf32> to vector<16x4xbf16>
    %cst = arith.constant 0.000000e+00 : bf16
    %3 = vector.broadcast %cst : bf16 to vector<3x4xbf16>
    %4 = vector.extract_strided_slice %2 {offsets = [0, 0], sizes = [13, 4], strides = [1, 1]} : vector<16x4xbf16> to vector<13x4xbf16>
    %5 = tpu.concatenate %3, %4 in 0 : vector<3x4xbf16>, vector<13x4xbf16> -> vector<16x4xbf16>
    %c0_2 = arith.constant 0 : index
    %c0_3 = arith.constant 0 : index
    %6 = vector.load %arg2[%c0_2, %c0_3] : memref<28x64xbf16, #tpu.memory_space<vmem>>, vector<4x64xbf16>
    %cst_4 = arith.constant dense<0.000000e+00> : vector<16x64xf32>
    %7 = tpu.matmul %5, %6, %cst_4 {dimension_numbers = #tpu.dot_dimension_numbers<[1], [0], [0], [1], [0, 0, 1, 1], [], []>} : vector<16x4xbf16>, vector<4x64xbf16>, vector<16x64xf32> -> vector<16x64xf32>
    %cst_5 = arith.constant 0.000000e+00 : bf16
    %8 = vector.broadcast %cst_5 : bf16 to vector<2x4xbf16>
    %9 = vector.extract_strided_slice %2 {offsets = [0, 0], sizes = [14, 4], strides = [1, 1]} : vector<16x4xbf16> to vector<14x4xbf16>
    %10 = tpu.concatenate %8, %9 in 0 : vector<2x4xbf16>, vector<14x4xbf16> -> vector<16x4xbf16>
    %c4 = arith.constant 4 : index
    %c0_6 = arith.constant 0 : index
    %11 = vector.load %arg2[%c4, %c0_6] : memref<28x64xbf16, #tpu.memory_space<vmem>>, vector<4x64xbf16>
    %cst_7 = arith.constant dense<0.000000e+00> : vector<16x64xf32>
    %12 = tpu.matmul %10, %11, %cst_7 {dimension_numbers = #tpu.dot_dimension_numbers<[1], [0], [0], [1], [0, 0, 1, 1], [], []>} : vector<16x4xbf16>, vector<4x64xbf16>, vector<16x64xf32> -> vector<16x64xf32>
    %13 = arith.addf %7, %12 : vector<16x64xf32>
    %cst_8 = arith.constant 0.000000e+00 : bf16
    %14 = vector.broadcast %cst_8 : bf16 to vector<1x4xbf16>
    %15 = vector.extract_strided_slice %2 {offsets = [0, 0], sizes = [15, 4], strides = [1, 1]} : vector<16x4xbf16> to vector<15x4xbf16>
    %16 = tpu.concatenate %14, %15 in 0 : vector<1x4xbf16>, vector<15x4xbf16> -> vector<16x4xbf16>
    %c8 = arith.constant 8 : index
    %c0_9 = arith.constant 0 : index
    %17 = vector.load %arg2[%c8, %c0_9] : memref<28x64xbf16, #tpu.memory_space<vmem>>, vector<4x64xbf16>
    %cst_10 = arith.constant dense<0.000000e+00> : vector<16x64xf32>
    %18 = tpu.matmul %16, %17, %cst_10 {dimension_numbers = #tpu.dot_dimension_numbers<[1], [0], [0], [1], [0, 0, 1, 1], [], []>} : vector<16x4xbf16>, vector<4x64xbf16>, vector<16x64xf32> -> vector<16x64xf32>
    %19 = arith.addf %13, %18 : vector<16x64xf32>
    %c12 = arith.constant 12 : index
    %c0_11 = arith.constant 0 : index
    %20 = vector.load %arg2[%c12, %c0_11] : memref<28x64xbf16, #tpu.memory_space<vmem>>, vector<4x64xbf16>
    %cst_12 = arith.constant dense<0.000000e+00> : vector<16x64xf32>
    %21 = tpu.matmul %2, %20, %cst_12 {dimension_numbers = #tpu.dot_dimension_numbers<[1], [0], [0], [1], [0, 0, 1, 1], [], []>} : vector<16x4xbf16>, vector<4x64xbf16>, vector<16x64xf32> -> vector<16x64xf32>
    %22 = arith.addf %19, %21 : vector<16x64xf32>
    %cst_13 = arith.constant 0.000000e+00 : bf16
    %23 = vector.broadcast %cst_13 : bf16 to vector<1x4xbf16>
    %24 = vector.extract_strided_slice %2 {offsets = [1, 0], sizes = [15, 4], strides = [1, 1]} : vector<16x4xbf16> to vector<15x4xbf16>
    %25 = tpu.concatenate %24, %23 in 0 : vector<15x4xbf16>, vector<1x4xbf16> -> vector<16x4xbf16>
    %c16 = arith.constant 16 : index
    %c0_14 = arith.constant 0 : index
    %26 = vector.load %arg2[%c16, %c0_14] : memref<28x64xbf16, #tpu.memory_space<vmem>>, vector<4x64xbf16>
    %cst_15 = arith.constant dense<0.000000e+00> : vector<16x64xf32>
    %27 = tpu.matmul %25, %26, %cst_15 {dimension_numbers = #tpu.dot_dimension_numbers<[1], [0], [0], [1], [0, 0, 1, 1], [], []>} : vector<16x4xbf16>, vector<4x64xbf16>, vector<16x64xf32> -> vector<16x64xf32>
    %28 = arith.addf %22, %27 : vector<16x64xf32>
    %cst_16 = arith.constant 0.000000e+00 : bf16
    %29 = vector.broadcast %cst_16 : bf16 to vector<2x4xbf16>
    %30 = vector.extract_strided_slice %2 {offsets = [2, 0], sizes = [14, 4], strides = [1, 1]} : vector<16x4xbf16> to vector<14x4xbf16>
    %31 = tpu.concatenate %30, %29 in 0 : vector<14x4xbf16>, vector<2x4xbf16> -> vector<16x4xbf16>
    %c20 = arith.constant 20 : index
    %c0_17 = arith.constant 0 : index
    %32 = vector.load %arg2[%c20, %c0_17] : memref<28x64xbf16, #tpu.memory_space<vmem>>, vector<4x64xbf16>
    %cst_18 = arith.constant dense<0.000000e+00> : vector<16x64xf32>
    %33 = tpu.matmul %31, %32, %cst_18 {dimension_numbers = #tpu.dot_dimension_numbers<[1], [0], [0], [1], [0, 0, 1, 1], [], []>} : vector<16x4xbf16>, vector<4x64xbf16>, vector<16x64xf32> -> vector<16x64xf32>
    %34 = arith.addf %28, %33 : vector<16x64xf32>
    %cst_19 = arith.constant 0.000000e+00 : bf16
    %35 = vector.broadcast %cst_19 : bf16 to vector<3x4xbf16>
    %36 = vector.extract_strided_slice %2 {offsets = [3, 0], sizes = [13, 4], strides = [1, 1]} : vector<16x4xbf16> to vector<13x4xbf16>
    %37 = tpu.concatenate %36, %35 in 0 : vector<13x4xbf16>, vector<3x4xbf16> -> vector<16x4xbf16>
    %c24 = arith.constant 24 : index
    %c0_20 = arith.constant 0 : index
    %38 = vector.load %arg2[%c24, %c0_20] : memref<28x64xbf16, #tpu.memory_space<vmem>>, vector<4x64xbf16>
    %cst_21 = arith.constant dense<0.000000e+00> : vector<16x64xf32>
    %39 = tpu.matmul %37, %38, %cst_21 {dimension_numbers = #tpu.dot_dimension_numbers<[1], [0], [0], [1], [0, 0, 1, 1], [], []>} : vector<16x4xbf16>, vector<4x64xbf16>, vector<16x64xf32> -> vector<16x64xf32>
    %40 = arith.addf %34, %39 : vector<16x64xf32>
    %c0_22 = arith.constant 0 : index
    %c0_23 = arith.constant 0 : index
    %41 = vector.load %arg3[%c0_22, %c0_23] : memref<1x64xf32, #tpu.memory_space<vmem>>, vector<1x64xf32>
    %42 = vector.broadcast %41 : vector<1x64xf32> to vector<16x64xf32>
    %43 = arith.addf %40, %42 : vector<16x64xf32>
    %cst_24 = arith.constant 0.000000e+00 : f32
    %44 = vector.broadcast %cst_24 : f32 to vector<16x64xf32>
    %45 = arith.maximumf %43, %44 : vector<16x64xf32>
    %46 = arith.truncf %45 : vector<16x64xf32> to vector<16x64xbf16>
    %cst_25 = arith.constant 0.000000e+00 : bf16
    %47 = vector.broadcast %cst_25 : bf16 to vector<2x64xbf16>
    %48 = vector.extract_strided_slice %46 {offsets = [0, 0], sizes = [14, 64], strides = [1, 1]} : vector<16x64xbf16> to vector<14x64xbf16>
    %49 = tpu.concatenate %47, %48 in 0 : vector<2x64xbf16>, vector<14x64xbf16> -> vector<16x64xbf16>
    %cst_26 = arith.constant 0.000000e+00 : bf16
    %50 = vector.broadcast %cst_26 : bf16 to vector<1x64xbf16>
    %51 = vector.extract_strided_slice %46 {offsets = [0, 0], sizes = [15, 64], strides = [1, 1]} : vector<16x64xbf16> to vector<15x64xbf16>
    %52 = tpu.concatenate %50, %51 in 0 : vector<1x64xbf16>, vector<15x64xbf16> -> vector<16x64xbf16>
    %cst_27 = arith.constant 0.000000e+00 : bf16
    %53 = vector.broadcast %cst_27 : bf16 to vector<1x64xbf16>
    %54 = vector.extract_strided_slice %46 {offsets = [1, 0], sizes = [15, 64], strides = [1, 1]} : vector<16x64xbf16> to vector<15x64xbf16>
    %55 = tpu.concatenate %54, %53 in 0 : vector<15x64xbf16>, vector<1x64xbf16> -> vector<16x64xbf16>
    %56 = tpu.concatenate %49, %52, %46, %55 in 1 : vector<16x64xbf16>, vector<16x64xbf16>, vector<16x64xbf16>, vector<16x64xbf16> -> vector<16x256xbf16>
    %c0_28 = arith.constant 0 : index
    %c0_29 = arith.constant 0 : index
    %57 = vector.load %arg4[%c0_28, %c0_29] : memref<320x64xbf16, #tpu.memory_space<vmem>>, vector<256x64xbf16>
    %cst_30 = arith.constant dense<0.000000e+00> : vector<16x64xf32>
    %58 = tpu.matmul %56, %57, %cst_30 {dimension_numbers = #tpu.dot_dimension_numbers<[1], [0], [0], [1], [0, 0, 1, 1], [], []>} : vector<16x256xbf16>, vector<256x64xbf16>, vector<16x64xf32> -> vector<16x64xf32>
    %cst_31 = arith.constant 0.000000e+00 : bf16
    %59 = vector.broadcast %cst_31 : bf16 to vector<2x64xbf16>
    %60 = vector.extract_strided_slice %46 {offsets = [2, 0], sizes = [14, 64], strides = [1, 1]} : vector<16x64xbf16> to vector<14x64xbf16>
    %61 = tpu.concatenate %60, %59 in 0 : vector<14x64xbf16>, vector<2x64xbf16> -> vector<16x64xbf16>
    %c256 = arith.constant 256 : index
    %c0_32 = arith.constant 0 : index
    %62 = vector.load %arg4[%c256, %c0_32] : memref<320x64xbf16, #tpu.memory_space<vmem>>, vector<64x64xbf16>
    %cst_33 = arith.constant dense<0.000000e+00> : vector<16x64xf32>
    %63 = tpu.matmul %61, %62, %cst_33 {dimension_numbers = #tpu.dot_dimension_numbers<[1], [0], [0], [1], [0, 0, 1, 1], [], []>} : vector<16x64xbf16>, vector<64x64xbf16>, vector<16x64xf32> -> vector<16x64xf32>
    %64 = arith.addf %58, %63 : vector<16x64xf32>
    %c0_34 = arith.constant 0 : index
    %c0_35 = arith.constant 0 : index
    %65 = vector.load %arg5[%c0_34, %c0_35] : memref<1x64xf32, #tpu.memory_space<vmem>>, vector<1x64xf32>
    %66 = vector.broadcast %65 : vector<1x64xf32> to vector<16x64xf32>
    %67 = arith.addf %64, %66 : vector<16x64xf32>
    %cst_36 = arith.constant 0.000000e+00 : f32
    %68 = vector.broadcast %cst_36 : f32 to vector<16x64xf32>
    %69 = arith.maximumf %67, %68 : vector<16x64xf32>
    %70 = arith.truncf %69 : vector<16x64xf32> to vector<16x64xbf16>
    %cst_37 = arith.constant 0.000000e+00 : bf16
    %71 = vector.broadcast %cst_37 : bf16 to vector<1x64xbf16>
    %72 = vector.extract_strided_slice %70 {offsets = [0, 0], sizes = [15, 64], strides = [1, 1]} : vector<16x64xbf16> to vector<15x64xbf16>
    %73 = tpu.concatenate %71, %72 in 0 : vector<1x64xbf16>, vector<15x64xbf16> -> vector<16x64xbf16>
    %cst_38 = arith.constant 0.000000e+00 : bf16
    %74 = vector.broadcast %cst_38 : bf16 to vector<1x64xbf16>
    %75 = vector.extract_strided_slice %70 {offsets = [1, 0], sizes = [15, 64], strides = [1, 1]} : vector<16x64xbf16> to vector<15x64xbf16>
    %76 = tpu.concatenate %75, %74 in 0 : vector<15x64xbf16>, vector<1x64xbf16> -> vector<16x64xbf16>
    %77 = tpu.concatenate %73, %70, %76 in 1 : vector<16x64xbf16>, vector<16x64xbf16>, vector<16x64xbf16> -> vector<16x192xbf16>
    %c0_39 = arith.constant 0 : index
    %c0_40 = arith.constant 0 : index
    %78 = vector.load %arg6[%c0_39, %c0_40] : memref<192x64xbf16, #tpu.memory_space<vmem>>, vector<192x64xbf16>
    %cst_41 = arith.constant dense<0.000000e+00> : vector<16x64xf32>
    %79 = tpu.matmul %77, %78, %cst_41 {dimension_numbers = #tpu.dot_dimension_numbers<[1], [0], [0], [1], [0, 0, 1, 1], [], []>} : vector<16x192xbf16>, vector<192x64xbf16>, vector<16x64xf32> -> vector<16x64xf32>
    %c0_42 = arith.constant 0 : index
    %c0_43 = arith.constant 0 : index
    %80 = vector.load %arg7[%c0_42, %c0_43] : memref<1x64xf32, #tpu.memory_space<vmem>>, vector<1x64xf32>
    %81 = vector.broadcast %80 : vector<1x64xf32> to vector<16x64xf32>
    %82 = arith.addf %79, %81 : vector<16x64xf32>
    %c0_44 = arith.constant 0 : index
    %c0_45 = arith.constant 0 : index
    %83 = vector.load %arg8[%c0_44, %c0_45] : memref<4x64xbf16, #tpu.memory_space<vmem>>, vector<4x64xbf16>
    %cst_46 = arith.constant dense<0.000000e+00> : vector<16x64xf32>
    %84 = tpu.matmul %2, %83, %cst_46 {dimension_numbers = #tpu.dot_dimension_numbers<[1], [0], [0], [1], [0, 0, 1, 1], [], []>} : vector<16x4xbf16>, vector<4x64xbf16>, vector<16x64xf32> -> vector<16x64xf32>
    %c0_47 = arith.constant 0 : index
    %c0_48 = arith.constant 0 : index
    %85 = vector.load %arg9[%c0_47, %c0_48] : memref<1x64xf32, #tpu.memory_space<vmem>>, vector<1x64xf32>
    %86 = vector.broadcast %85 : vector<1x64xf32> to vector<16x64xf32>
    %87 = arith.addf %84, %86 : vector<16x64xf32>
    %88 = arith.addf %82, %87 : vector<16x64xf32>
    %cst_49 = arith.constant 0.000000e+00 : f32
    %89 = vector.broadcast %cst_49 : f32 to vector<16x64xf32>
    %90 = arith.maximumf %88, %89 : vector<16x64xf32>
    %91 = arith.truncf %90 : vector<16x64xf32> to vector<16x64xbf16>
    %cst_50 = arith.constant 0.000000e+00 : bf16
    %92 = vector.broadcast %cst_50 : bf16 to vector<3x64xbf16>
    %93 = vector.extract_strided_slice %91 {offsets = [0, 0], sizes = [13, 64], strides = [1, 1]} : vector<16x64xbf16> to vector<13x64xbf16>
    %94 = tpu.concatenate %92, %93 in 0 : vector<3x64xbf16>, vector<13x64xbf16> -> vector<16x64xbf16>
    %cst_51 = arith.constant 0.000000e+00 : bf16
    %95 = vector.broadcast %cst_51 : bf16 to vector<2x64xbf16>
    %96 = vector.extract_strided_slice %91 {offsets = [0, 0], sizes = [14, 64], strides = [1, 1]} : vector<16x64xbf16> to vector<14x64xbf16>
    %97 = tpu.concatenate %95, %96 in 0 : vector<2x64xbf16>, vector<14x64xbf16> -> vector<16x64xbf16>
    %cst_52 = arith.constant 0.000000e+00 : bf16
    %98 = vector.broadcast %cst_52 : bf16 to vector<1x64xbf16>
    %99 = vector.extract_strided_slice %91 {offsets = [0, 0], sizes = [15, 64], strides = [1, 1]} : vector<16x64xbf16> to vector<15x64xbf16>
    %100 = tpu.concatenate %98, %99 in 0 : vector<1x64xbf16>, vector<15x64xbf16> -> vector<16x64xbf16>
    %101 = tpu.concatenate %94, %97, %100, %91 in 1 : vector<16x64xbf16>, vector<16x64xbf16>, vector<16x64xbf16>, vector<16x64xbf16> -> vector<16x256xbf16>
    %c0_53 = arith.constant 0 : index
    %c0_54 = arith.constant 0 : index
    %102 = vector.load %arg10[%c0_53, %c0_54] : memref<448x128xbf16, #tpu.memory_space<vmem>>, vector<256x128xbf16>
    %cst_55 = arith.constant dense<0.000000e+00> : vector<16x128xf32>
    %103 = tpu.matmul %101, %102, %cst_55 {dimension_numbers = #tpu.dot_dimension_numbers<[1], [0], [0], [1], [0, 0, 1, 1], [], []>} : vector<16x256xbf16>, vector<256x128xbf16>, vector<16x128xf32> -> vector<16x128xf32>
    %cst_56 = arith.constant 0.000000e+00 : bf16
    %104 = vector.broadcast %cst_56 : bf16 to vector<1x64xbf16>
    %105 = vector.extract_strided_slice %91 {offsets = [1, 0], sizes = [15, 64], strides = [1, 1]} : vector<16x64xbf16> to vector<15x64xbf16>
    %106 = tpu.concatenate %105, %104 in 0 : vector<15x64xbf16>, vector<1x64xbf16> -> vector<16x64xbf16>
    %cst_57 = arith.constant 0.000000e+00 : bf16
    %107 = vector.broadcast %cst_57 : bf16 to vector<2x64xbf16>
    %108 = vector.extract_strided_slice %91 {offsets = [2, 0], sizes = [14, 64], strides = [1, 1]} : vector<16x64xbf16> to vector<14x64xbf16>
    %109 = tpu.concatenate %108, %107 in 0 : vector<14x64xbf16>, vector<2x64xbf16> -> vector<16x64xbf16>
    %cst_58 = arith.constant 0.000000e+00 : bf16
    %110 = vector.broadcast %cst_58 : bf16 to vector<3x64xbf16>
    %111 = vector.extract_strided_slice %91 {offsets = [3, 0], sizes = [13, 64], strides = [1, 1]} : vector<16x64xbf16> to vector<13x64xbf16>
    %112 = tpu.concatenate %111, %110 in 0 : vector<13x64xbf16>, vector<3x64xbf16> -> vector<16x64xbf16>
    %113 = tpu.concatenate %106, %109, %112 in 1 : vector<16x64xbf16>, vector<16x64xbf16>, vector<16x64xbf16> -> vector<16x192xbf16>
    %c256_59 = arith.constant 256 : index
    %c0_60 = arith.constant 0 : index
    %114 = vector.load %arg10[%c256_59, %c0_60] : memref<448x128xbf16, #tpu.memory_space<vmem>>, vector<192x128xbf16>
    %cst_61 = arith.constant dense<0.000000e+00> : vector<16x128xf32>
    %115 = tpu.matmul %113, %114, %cst_61 {dimension_numbers = #tpu.dot_dimension_numbers<[1], [0], [0], [1], [0, 0, 1, 1], [], []>} : vector<16x192xbf16>, vector<192x128xbf16>, vector<16x128xf32> -> vector<16x128xf32>
    %116 = arith.addf %103, %115 : vector<16x128xf32>
    %c0_62 = arith.constant 0 : index
    %c0_63 = arith.constant 0 : index
    %117 = vector.load %arg11[%c0_62, %c0_63] : memref<1x128xf32, #tpu.memory_space<vmem>>, vector<1x128xf32>
    %118 = vector.broadcast %117 : vector<1x128xf32> to vector<16x128xf32>
    %119 = arith.addf %116, %118 : vector<16x128xf32>
    %cst_64 = arith.constant 0.000000e+00 : f32
    %120 = vector.broadcast %cst_64 : f32 to vector<16x128xf32>
    %121 = arith.maximumf %119, %120 : vector<16x128xf32>
    %122 = arith.truncf %121 : vector<16x128xf32> to vector<16x128xbf16>
    %cst_65 = arith.constant 0.000000e+00 : bf16
    %123 = vector.broadcast %cst_65 : bf16 to vector<2x128xbf16>
    %124 = vector.extract_strided_slice %122 {offsets = [0, 0], sizes = [14, 128], strides = [1, 1]} : vector<16x128xbf16> to vector<14x128xbf16>
    %125 = tpu.concatenate %123, %124 in 0 : vector<2x128xbf16>, vector<14x128xbf16> -> vector<16x128xbf16>
    %cst_66 = arith.constant 0.000000e+00 : bf16
    %126 = vector.broadcast %cst_66 : bf16 to vector<1x128xbf16>
    %127 = vector.extract_strided_slice %122 {offsets = [0, 0], sizes = [15, 128], strides = [1, 1]} : vector<16x128xbf16> to vector<15x128xbf16>
    %128 = tpu.concatenate %126, %127 in 0 : vector<1x128xbf16>, vector<15x128xbf16> -> vector<16x128xbf16>
    %129 = tpu.concatenate %125, %128 in 1 : vector<16x128xbf16>, vector<16x128xbf16> -> vector<16x256xbf16>
    %c0_67 = arith.constant 0 : index
    %c0_68 = arith.constant 0 : index
    %130 = vector.load %arg12[%c0_67, %c0_68] : memref<640x128xbf16, #tpu.memory_space<vmem>>, vector<256x128xbf16>
    %cst_69 = arith.constant dense<0.000000e+00> : vector<16x128xf32>
    %131 = tpu.matmul %129, %130, %cst_69 {dimension_numbers = #tpu.dot_dimension_numbers<[1], [0], [0], [1], [0, 0, 1, 1], [], []>} : vector<16x256xbf16>, vector<256x128xbf16>, vector<16x128xf32> -> vector<16x128xf32>
    %cst_70 = arith.constant 0.000000e+00 : bf16
    %132 = vector.broadcast %cst_70 : bf16 to vector<1x128xbf16>
    %133 = vector.extract_strided_slice %122 {offsets = [1, 0], sizes = [15, 128], strides = [1, 1]} : vector<16x128xbf16> to vector<15x128xbf16>
    %134 = tpu.concatenate %133, %132 in 0 : vector<15x128xbf16>, vector<1x128xbf16> -> vector<16x128xbf16>
    %135 = tpu.concatenate %122, %134 in 1 : vector<16x128xbf16>, vector<16x128xbf16> -> vector<16x256xbf16>
    %c256_71 = arith.constant 256 : index
    %c0_72 = arith.constant 0 : index
    %136 = vector.load %arg12[%c256_71, %c0_72] : memref<640x128xbf16, #tpu.memory_space<vmem>>, vector<256x128xbf16>
    %cst_73 = arith.constant dense<0.000000e+00> : vector<16x128xf32>
    %137 = tpu.matmul %135, %136, %cst_73 {dimension_numbers = #tpu.dot_dimension_numbers<[1], [0], [0], [1], [0, 0, 1, 1], [], []>} : vector<16x256xbf16>, vector<256x128xbf16>, vector<16x128xf32> -> vector<16x128xf32>
    %138 = arith.addf %131, %137 : vector<16x128xf32>
    %cst_74 = arith.constant 0.000000e+00 : bf16
    %139 = vector.broadcast %cst_74 : bf16 to vector<2x128xbf16>
    %140 = vector.extract_strided_slice %122 {offsets = [2, 0], sizes = [14, 128], strides = [1, 1]} : vector<16x128xbf16> to vector<14x128xbf16>
    %141 = tpu.concatenate %140, %139 in 0 : vector<14x128xbf16>, vector<2x128xbf16> -> vector<16x128xbf16>
    %c512 = arith.constant 512 : index
    %c0_75 = arith.constant 0 : index
    %142 = vector.load %arg12[%c512, %c0_75] : memref<640x128xbf16, #tpu.memory_space<vmem>>, vector<128x128xbf16>
    %cst_76 = arith.constant dense<0.000000e+00> : vector<16x128xf32>
    %143 = tpu.matmul %141, %142, %cst_76 {dimension_numbers = #tpu.dot_dimension_numbers<[1], [0], [0], [1], [0, 0, 1, 1], [], []>} : vector<16x128xbf16>, vector<128x128xbf16>, vector<16x128xf32> -> vector<16x128xf32>
    %144 = arith.addf %138, %143 : vector<16x128xf32>
    %c0_77 = arith.constant 0 : index
    %c0_78 = arith.constant 0 : index
    %145 = vector.load %arg13[%c0_77, %c0_78] : memref<1x128xf32, #tpu.memory_space<vmem>>, vector<1x128xf32>
    %146 = vector.broadcast %145 : vector<1x128xf32> to vector<16x128xf32>
    %147 = arith.addf %144, %146 : vector<16x128xf32>
    %cst_79 = arith.constant 0.000000e+00 : f32
    %148 = vector.broadcast %cst_79 : f32 to vector<16x128xf32>
    %149 = arith.maximumf %147, %148 : vector<16x128xf32>
    %150 = arith.truncf %149 : vector<16x128xf32> to vector<16x128xbf16>
    %cst_80 = arith.constant 0.000000e+00 : bf16
    %151 = vector.broadcast %cst_80 : bf16 to vector<1x128xbf16>
    %152 = vector.extract_strided_slice %150 {offsets = [0, 0], sizes = [15, 128], strides = [1, 1]} : vector<16x128xbf16> to vector<15x128xbf16>
    %153 = tpu.concatenate %151, %152 in 0 : vector<1x128xbf16>, vector<15x128xbf16> -> vector<16x128xbf16>
    %154 = tpu.concatenate %153, %150 in 1 : vector<16x128xbf16>, vector<16x128xbf16> -> vector<16x256xbf16>
    %c0_81 = arith.constant 0 : index
    %c0_82 = arith.constant 0 : index
    %155 = vector.load %arg14[%c0_81, %c0_82] : memref<384x128xbf16, #tpu.memory_space<vmem>>, vector<256x128xbf16>
    %cst_83 = arith.constant dense<0.000000e+00> : vector<16x128xf32>
    %156 = tpu.matmul %154, %155, %cst_83 {dimension_numbers = #tpu.dot_dimension_numbers<[1], [0], [0], [1], [0, 0, 1, 1], [], []>} : vector<16x256xbf16>, vector<256x128xbf16>, vector<16x128xf32> -> vector<16x128xf32>
    %cst_84 = arith.constant 0.000000e+00 : bf16
    %157 = vector.broadcast %cst_84 : bf16 to vector<1x128xbf16>
    %158 = vector.extract_strided_slice %150 {offsets = [1, 0], sizes = [15, 128], strides = [1, 1]} : vector<16x128xbf16> to vector<15x128xbf16>
    %159 = tpu.concatenate %158, %157 in 0 : vector<15x128xbf16>, vector<1x128xbf16> -> vector<16x128xbf16>
    %c256_85 = arith.constant 256 : index
    %c0_86 = arith.constant 0 : index
    %160 = vector.load %arg14[%c256_85, %c0_86] : memref<384x128xbf16, #tpu.memory_space<vmem>>, vector<128x128xbf16>
    %cst_87 = arith.constant dense<0.000000e+00> : vector<16x128xf32>
    %161 = tpu.matmul %159, %160, %cst_87 {dimension_numbers = #tpu.dot_dimension_numbers<[1], [0], [0], [1], [0, 0, 1, 1], [], []>} : vector<16x128xbf16>, vector<128x128xbf16>, vector<16x128xf32> -> vector<16x128xf32>
    %162 = arith.addf %156, %161 : vector<16x128xf32>
    %c0_88 = arith.constant 0 : index
    %c0_89 = arith.constant 0 : index
    %163 = vector.load %arg15[%c0_88, %c0_89] : memref<1x128xf32, #tpu.memory_space<vmem>>, vector<1x128xf32>
    %164 = vector.broadcast %163 : vector<1x128xf32> to vector<16x128xf32>
    %165 = arith.addf %162, %164 : vector<16x128xf32>
    %c0_90 = arith.constant 0 : index
    %c0_91 = arith.constant 0 : index
    %166 = vector.load %arg16[%c0_90, %c0_91] : memref<64x128xbf16, #tpu.memory_space<vmem>>, vector<64x128xbf16>
    %cst_92 = arith.constant dense<0.000000e+00> : vector<16x128xf32>
    %167 = tpu.matmul %91, %166, %cst_92 {dimension_numbers = #tpu.dot_dimension_numbers<[1], [0], [0], [1], [0, 0, 1, 1], [], []>} : vector<16x64xbf16>, vector<64x128xbf16>, vector<16x128xf32> -> vector<16x128xf32>
    %c0_93 = arith.constant 0 : index
    %c0_94 = arith.constant 0 : index
    %168 = vector.load %arg17[%c0_93, %c0_94] : memref<1x128xf32, #tpu.memory_space<vmem>>, vector<1x128xf32>
    %169 = vector.broadcast %168 : vector<1x128xf32> to vector<16x128xf32>
    %170 = arith.addf %167, %169 : vector<16x128xf32>
    %171 = arith.addf %165, %170 : vector<16x128xf32>
    %cst_95 = arith.constant 0.000000e+00 : f32
    %172 = vector.broadcast %cst_95 : f32 to vector<16x128xf32>
    %173 = arith.maximumf %171, %172 : vector<16x128xf32>
    %174 = arith.truncf %173 : vector<16x128xf32> to vector<16x128xbf16>
    %cst_96 = arith.constant 0.000000e+00 : bf16
    %175 = vector.broadcast %cst_96 : bf16 to vector<3x128xbf16>
    %176 = vector.extract_strided_slice %174 {offsets = [0, 0], sizes = [13, 128], strides = [1, 1]} : vector<16x128xbf16> to vector<13x128xbf16>
    %177 = tpu.concatenate %175, %176 in 0 : vector<3x128xbf16>, vector<13x128xbf16> -> vector<16x128xbf16>
    %cst_97 = arith.constant 0.000000e+00 : bf16
    %178 = vector.broadcast %cst_97 : bf16 to vector<2x128xbf16>
    %179 = vector.extract_strided_slice %174 {offsets = [0, 0], sizes = [14, 128], strides = [1, 1]} : vector<16x128xbf16> to vector<14x128xbf16>
    %180 = tpu.concatenate %178, %179 in 0 : vector<2x128xbf16>, vector<14x128xbf16> -> vector<16x128xbf16>
    %181 = tpu.concatenate %177, %180 in 1 : vector<16x128xbf16>, vector<16x128xbf16> -> vector<16x256xbf16>
    %c0_98 = arith.constant 0 : index
    %c0_99 = arith.constant 0 : index
    %182 = vector.load %arg18[%c0_98, %c0_99] : memref<896x128xbf16, #tpu.memory_space<vmem>>, vector<256x128xbf16>
    %cst_100 = arith.constant dense<0.000000e+00> : vector<16x128xf32>
    %183 = tpu.matmul %181, %182, %cst_100 {dimension_numbers = #tpu.dot_dimension_numbers<[1], [0], [0], [1], [0, 0, 1, 1], [], []>} : vector<16x256xbf16>, vector<256x128xbf16>, vector<16x128xf32> -> vector<16x128xf32>
    %cst_101 = arith.constant 0.000000e+00 : bf16
    %184 = vector.broadcast %cst_101 : bf16 to vector<1x128xbf16>
    %185 = vector.extract_strided_slice %174 {offsets = [0, 0], sizes = [15, 128], strides = [1, 1]} : vector<16x128xbf16> to vector<15x128xbf16>
    %186 = tpu.concatenate %184, %185 in 0 : vector<1x128xbf16>, vector<15x128xbf16> -> vector<16x128xbf16>
    %187 = tpu.concatenate %186, %174 in 1 : vector<16x128xbf16>, vector<16x128xbf16> -> vector<16x256xbf16>
    %c256_102 = arith.constant 256 : index
    %c0_103 = arith.constant 0 : index
    %188 = vector.load %arg18[%c256_102, %c0_103] : memref<896x128xbf16, #tpu.memory_space<vmem>>, vector<256x128xbf16>
    %cst_104 = arith.constant dense<0.000000e+00> : vector<16x128xf32>
    %189 = tpu.matmul %187, %188, %cst_104 {dimension_numbers = #tpu.dot_dimension_numbers<[1], [0], [0], [1], [0, 0, 1, 1], [], []>} : vector<16x256xbf16>, vector<256x128xbf16>, vector<16x128xf32> -> vector<16x128xf32>
    %190 = arith.addf %183, %189 : vector<16x128xf32>
    %cst_105 = arith.constant 0.000000e+00 : bf16
    %191 = vector.broadcast %cst_105 : bf16 to vector<1x128xbf16>
    %192 = vector.extract_strided_slice %174 {offsets = [1, 0], sizes = [15, 128], strides = [1, 1]} : vector<16x128xbf16> to vector<15x128xbf16>
    %193 = tpu.concatenate %192, %191 in 0 : vector<15x128xbf16>, vector<1x128xbf16> -> vector<16x128xbf16>
    %cst_106 = arith.constant 0.000000e+00 : bf16
    %194 = vector.broadcast %cst_106 : bf16 to vector<2x128xbf16>
    %195 = vector.extract_strided_slice %174 {offsets = [2, 0], sizes = [14, 128], strides = [1, 1]} : vector<16x128xbf16> to vector<14x128xbf16>
    %196 = tpu.concatenate %195, %194 in 0 : vector<14x128xbf16>, vector<2x128xbf16> -> vector<16x128xbf16>
    %197 = tpu.concatenate %193, %196 in 1 : vector<16x128xbf16>, vector<16x128xbf16> -> vector<16x256xbf16>
    %c512_107 = arith.constant 512 : index
    %c0_108 = arith.constant 0 : index
    %198 = vector.load %arg18[%c512_107, %c0_108] : memref<896x128xbf16, #tpu.memory_space<vmem>>, vector<256x128xbf16>
    %cst_109 = arith.constant dense<0.000000e+00> : vector<16x128xf32>
    %199 = tpu.matmul %197, %198, %cst_109 {dimension_numbers = #tpu.dot_dimension_numbers<[1], [0], [0], [1], [0, 0, 1, 1], [], []>} : vector<16x256xbf16>, vector<256x128xbf16>, vector<16x128xf32> -> vector<16x128xf32>
    %200 = arith.addf %190, %199 : vector<16x128xf32>
    %cst_110 = arith.constant 0.000000e+00 : bf16
    %201 = vector.broadcast %cst_110 : bf16 to vector<3x128xbf16>
    %202 = vector.extract_strided_slice %174 {offsets = [3, 0], sizes = [13, 128], strides = [1, 1]} : vector<16x128xbf16> to vector<13x128xbf16>
    %203 = tpu.concatenate %202, %201 in 0 : vector<13x128xbf16>, vector<3x128xbf16> -> vector<16x128xbf16>
    %c768 = arith.constant 768 : index
    %c0_111 = arith.constant 0 : index
    %204 = vector.load %arg18[%c768, %c0_111] : memref<896x128xbf16, #tpu.memory_space<vmem>>, vector<128x128xbf16>
    %cst_112 = arith.constant dense<0.000000e+00> : vector<16x128xf32>
    %205 = tpu.matmul %203, %204, %cst_112 {dimension_numbers = #tpu.dot_dimension_numbers<[1], [0], [0], [1], [0, 0, 1, 1], [], []>} : vector<16x128xbf16>, vector<128x128xbf16>, vector<16x128xf32> -> vector<16x128xf32>
    %206 = arith.addf %200, %205 : vector<16x128xf32>
    %c0_113 = arith.constant 0 : index
    %c0_114 = arith.constant 0 : index
    %207 = vector.load %arg19[%c0_113, %c0_114] : memref<1x128xf32, #tpu.memory_space<vmem>>, vector<1x128xf32>
    %208 = vector.broadcast %207 : vector<1x128xf32> to vector<16x128xf32>
    %209 = arith.addf %206, %208 : vector<16x128xf32>
    %cst_115 = arith.constant 0.000000e+00 : f32
    %210 = vector.broadcast %cst_115 : f32 to vector<16x128xf32>
    %211 = arith.maximumf %209, %210 : vector<16x128xf32>
    %212 = arith.truncf %211 : vector<16x128xf32> to vector<16x128xbf16>
    %cst_116 = arith.constant 0.000000e+00 : bf16
    %213 = vector.broadcast %cst_116 : bf16 to vector<2x128xbf16>
    %214 = vector.extract_strided_slice %212 {offsets = [0, 0], sizes = [14, 128], strides = [1, 1]} : vector<16x128xbf16> to vector<14x128xbf16>
    %215 = tpu.concatenate %213, %214 in 0 : vector<2x128xbf16>, vector<14x128xbf16> -> vector<16x128xbf16>
    %cst_117 = arith.constant 0.000000e+00 : bf16
    %216 = vector.broadcast %cst_117 : bf16 to vector<1x128xbf16>
    %217 = vector.extract_strided_slice %212 {offsets = [0, 0], sizes = [15, 128], strides = [1, 1]} : vector<16x128xbf16> to vector<15x128xbf16>
    %218 = tpu.concatenate %216, %217 in 0 : vector<1x128xbf16>, vector<15x128xbf16> -> vector<16x128xbf16>
    %219 = tpu.concatenate %215, %218 in 1 : vector<16x128xbf16>, vector<16x128xbf16> -> vector<16x256xbf16>
    %c0_118 = arith.constant 0 : index
    %c0_119 = arith.constant 0 : index
    %220 = vector.load %arg20[%c0_118, %c0_119] : memref<640x128xbf16, #tpu.memory_space<vmem>>, vector<256x128xbf16>
    %cst_120 = arith.constant dense<0.000000e+00> : vector<16x128xf32>
    %221 = tpu.matmul %219, %220, %cst_120 {dimension_numbers = #tpu.dot_dimension_numbers<[1], [0], [0], [1], [0, 0, 1, 1], [], []>} : vector<16x256xbf16>, vector<256x128xbf16>, vector<16x128xf32> -> vector<16x128xf32>
    %cst_121 = arith.constant 0.000000e+00 : bf16
    %222 = vector.broadcast %cst_121 : bf16 to vector<1x128xbf16>
    %223 = vector.extract_strided_slice %212 {offsets = [1, 0], sizes = [15, 128], strides = [1, 1]} : vector<16x128xbf16> to vector<15x128xbf16>
    %224 = tpu.concatenate %223, %222 in 0 : vector<15x128xbf16>, vector<1x128xbf16> -> vector<16x128xbf16>
    %225 = tpu.concatenate %212, %224 in 1 : vector<16x128xbf16>, vector<16x128xbf16> -> vector<16x256xbf16>
    %c256_122 = arith.constant 256 : index
    %c0_123 = arith.constant 0 : index
    %226 = vector.load %arg20[%c256_122, %c0_123] : memref<640x128xbf16, #tpu.memory_space<vmem>>, vector<256x128xbf16>
    %cst_124 = arith.constant dense<0.000000e+00> : vector<16x128xf32>
    %227 = tpu.matmul %225, %226, %cst_124 {dimension_numbers = #tpu.dot_dimension_numbers<[1], [0], [0], [1], [0, 0, 1, 1], [], []>} : vector<16x256xbf16>, vector<256x128xbf16>, vector<16x128xf32> -> vector<16x128xf32>
    %228 = arith.addf %221, %227 : vector<16x128xf32>
    %cst_125 = arith.constant 0.000000e+00 : bf16
    %229 = vector.broadcast %cst_125 : bf16 to vector<2x128xbf16>
    %230 = vector.extract_strided_slice %212 {offsets = [2, 0], sizes = [14, 128], strides = [1, 1]} : vector<16x128xbf16> to vector<14x128xbf16>
    %231 = tpu.concatenate %230, %229 in 0 : vector<14x128xbf16>, vector<2x128xbf16> -> vector<16x128xbf16>
    %c512_126 = arith.constant 512 : index
    %c0_127 = arith.constant 0 : index
    %232 = vector.load %arg20[%c512_126, %c0_127] : memref<640x128xbf16, #tpu.memory_space<vmem>>, vector<128x128xbf16>
    %cst_128 = arith.constant dense<0.000000e+00> : vector<16x128xf32>
    %233 = tpu.matmul %231, %232, %cst_128 {dimension_numbers = #tpu.dot_dimension_numbers<[1], [0], [0], [1], [0, 0, 1, 1], [], []>} : vector<16x128xbf16>, vector<128x128xbf16>, vector<16x128xf32> -> vector<16x128xf32>
    %234 = arith.addf %228, %233 : vector<16x128xf32>
    %c0_129 = arith.constant 0 : index
    %c0_130 = arith.constant 0 : index
    %235 = vector.load %arg21[%c0_129, %c0_130] : memref<1x128xf32, #tpu.memory_space<vmem>>, vector<1x128xf32>
    %236 = vector.broadcast %235 : vector<1x128xf32> to vector<16x128xf32>
    %237 = arith.addf %234, %236 : vector<16x128xf32>
    %cst_131 = arith.constant 0.000000e+00 : f32
    %238 = vector.broadcast %cst_131 : f32 to vector<16x128xf32>
    %239 = arith.maximumf %237, %238 : vector<16x128xf32>
    %240 = arith.truncf %239 : vector<16x128xf32> to vector<16x128xbf16>
    %cst_132 = arith.constant 0.000000e+00 : bf16
    %241 = vector.broadcast %cst_132 : bf16 to vector<1x128xbf16>
    %242 = vector.extract_strided_slice %240 {offsets = [0, 0], sizes = [15, 128], strides = [1, 1]} : vector<16x128xbf16> to vector<15x128xbf16>
    %243 = tpu.concatenate %241, %242 in 0 : vector<1x128xbf16>, vector<15x128xbf16> -> vector<16x128xbf16>
    %244 = tpu.concatenate %243, %240 in 1 : vector<16x128xbf16>, vector<16x128xbf16> -> vector<16x256xbf16>
    %c0_133 = arith.constant 0 : index
    %c0_134 = arith.constant 0 : index
    %245 = vector.load %arg22[%c0_133, %c0_134] : memref<384x128xbf16, #tpu.memory_space<vmem>>, vector<256x128xbf16>
    %cst_135 = arith.constant dense<0.000000e+00> : vector<16x128xf32>
    %246 = tpu.matmul %244, %245, %cst_135 {dimension_numbers = #tpu.dot_dimension_numbers<[1], [0], [0], [1], [0, 0, 1, 1], [], []>} : vector<16x256xbf16>, vector<256x128xbf16>, vector<16x128xf32> -> vector<16x128xf32>
    %cst_136 = arith.constant 0.000000e+00 : bf16
    %247 = vector.broadcast %cst_136 : bf16 to vector<1x128xbf16>
    %248 = vector.extract_strided_slice %240 {offsets = [1, 0], sizes = [15, 128], strides = [1, 1]} : vector<16x128xbf16> to vector<15x128xbf16>
    %249 = tpu.concatenate %248, %247 in 0 : vector<15x128xbf16>, vector<1x128xbf16> -> vector<16x128xbf16>
    %c256_137 = arith.constant 256 : index
    %c0_138 = arith.constant 0 : index
    %250 = vector.load %arg22[%c256_137, %c0_138] : memref<384x128xbf16, #tpu.memory_space<vmem>>, vector<128x128xbf16>
    %cst_139 = arith.constant dense<0.000000e+00> : vector<16x128xf32>
    %251 = tpu.matmul %249, %250, %cst_139 {dimension_numbers = #tpu.dot_dimension_numbers<[1], [0], [0], [1], [0, 0, 1, 1], [], []>} : vector<16x128xbf16>, vector<128x128xbf16>, vector<16x128xf32> -> vector<16x128xf32>
    %252 = arith.addf %246, %251 : vector<16x128xf32>
    %c0_140 = arith.constant 0 : index
    %c0_141 = arith.constant 0 : index
    %253 = vector.load %arg23[%c0_140, %c0_141] : memref<1x128xf32, #tpu.memory_space<vmem>>, vector<1x128xf32>
    %254 = vector.broadcast %253 : vector<1x128xf32> to vector<16x128xf32>
    %255 = arith.addf %252, %254 : vector<16x128xf32>
    %c0_142 = arith.constant 0 : index
    %c0_143 = arith.constant 0 : index
    %256 = vector.load %arg24[%c0_142, %c0_143] : memref<1x128xf32, #tpu.memory_space<vmem>>, vector<1x128xf32>
    %257 = vector.broadcast %256 : vector<1x128xf32> to vector<16x128xf32>
    %258 = arith.mulf %173, %257 : vector<16x128xf32>
    %c0_144 = arith.constant 0 : index
    %c0_145 = arith.constant 0 : index
    %259 = vector.load %arg25[%c0_144, %c0_145] : memref<1x128xf32, #tpu.memory_space<vmem>>, vector<1x128xf32>
    %260 = vector.broadcast %259 : vector<1x128xf32> to vector<16x128xf32>
    %261 = arith.addf %258, %260 : vector<16x128xf32>
    %262 = arith.addf %255, %261 : vector<16x128xf32>
    %cst_146 = arith.constant 0.000000e+00 : f32
    %263 = vector.broadcast %cst_146 : f32 to vector<16x128xf32>
    %264 = arith.maximumf %262, %263 : vector<16x128xf32>
    %cst_147 = arith.constant dense<0.000000e+00> : vector<128xf32>
    %265 = vector.multi_reduction <add>, %264, %cst_147 [0] : vector<16x128xf32> to vector<128xf32>
    %266 = vector.shape_cast %265 : vector<128xf32> to vector<1x128xf32>
    %cst_148 = arith.constant 1.600000e+01 : f32
    %267 = vector.broadcast %cst_148 : f32 to vector<1x128xf32>
    %268 = arith.divf %266, %267 : vector<1x128xf32>
    %269 = arith.truncf %268 : vector<1x128xf32> to vector<1x128xbf16>
    %c0_149 = arith.constant 0 : index
    %c0_150 = arith.constant 0 : index
    %270 = vector.load %arg26[%c0_149, %c0_150] : memref<128x128xbf16, #tpu.memory_space<vmem>>, vector<128x128xbf16>
    %cst_151 = arith.constant dense<0.000000e+00> : vector<1x128xf32>
    %271 = tpu.matmul %269, %270, %cst_151 {dimension_numbers = #tpu.dot_dimension_numbers<[1], [0], [0], [1], [0, 0, 1, 1], [], []>} : vector<1x128xbf16>, vector<128x128xbf16>, vector<1x128xf32> -> vector<1x128xf32>
    %c0_152 = arith.constant 0 : index
    %c0_153 = arith.constant 0 : index
    %272 = vector.load %arg27[%c0_152, %c0_153] : memref<1x128xf32, #tpu.memory_space<vmem>>, vector<1x128xf32>
    %273 = arith.addf %271, %272 : vector<1x128xf32>
    %c0_154 = arith.constant 0 : index
    %c0_155 = arith.constant 0 : index
    %c0_156 = arith.constant 0 : index
    %274 = vector.load %arg28[%c0_154, %c0_155, %c0_156] : memref<1x1x128xf32, #tpu.memory_space<vmem>>, vector<1x1x128xf32>
    %275 = vector.shape_cast %274 : vector<1x1x128xf32> to vector<1x128xf32>
    %276 = vector.shape_cast %268 : vector<1x128xf32> to vector<1x1x128xf32>
    tpu.vector_store %arg28[%c0_154, %c0_155, %c0_156], %276 {strides = array<i32>} : memref<1x1x128xf32, #tpu.memory_space<vmem>>, vector<1x1x128xf32>,
    %c0_157 = arith.constant 0 : index
    %c0_158 = arith.constant 0 : index
    %c0_159 = arith.constant 0 : index
    %277 = vector.load %arg29[%c0_157, %c0_158, %c0_159] : memref<1x1x128xf32, #tpu.memory_space<vmem>>, vector<1x1x128xf32>
    %278 = vector.shape_cast %277 : vector<1x1x128xf32> to vector<1x128xf32>
    %279 = vector.shape_cast %273 : vector<1x128xf32> to vector<1x1x128xf32>
    tpu.vector_store %arg29[%c0_157, %c0_158, %c0_159], %279 {strides = array<i32>} : memref<1x1x128xf32, #tpu.memory_space<vmem>>, vector<1x1x128xf32>,
    return
  }
  func.func @transform_0(%arg0: i32) -> (i32, i32, i32) {
    %c0_i32 = arith.constant 0 : i32
    %c0_i32_0 = arith.constant 0 : i32
    %c0_i32_1 = arith.constant 0 : i32
    return %arg0, %c0_i32, %c0_i32_0 : i32, i32, i32
  }
  func.func @transform_1(%arg0: i32) -> (i32, i32) {
    %c0_i32 = arith.constant 0 : i32
    %c0_i32_0 = arith.constant 0 : i32
    %c0_i32_1 = arith.constant 0 : i32
    return %c0_i32, %c0_i32_0 : i32, i32
  }
  func.func @transform_2(%arg0: i32) -> (i32, i32) {
    %c0_i32 = arith.constant 0 : i32
    %c0_i32_0 = arith.constant 0 : i32
    %c0_i32_1 = arith.constant 0 : i32
    return %c0_i32, %c0_i32_0 : i32, i32
  }
  func.func @transform_3(%arg0: i32) -> (i32, i32) {
    %c0_i32 = arith.constant 0 : i32
    %c0_i32_0 = arith.constant 0 : i32
    %c0_i32_1 = arith.constant 0 : i32
    return %c0_i32, %c0_i32_0 : i32, i32
  }
  func.func @transform_4(%arg0: i32) -> (i32, i32) {
    %c0_i32 = arith.constant 0 : i32
    %c0_i32_0 = arith.constant 0 : i32
    %c0_i32_1 = arith.constant 0 : i32
    return %c0_i32, %c0_i32_0 : i32, i32
  }
  func.func @transform_5(%arg0: i32) -> (i32, i32) {
    %c0_i32 = arith.constant 0 : i32
    %c0_i32_0 = arith.constant 0 : i32
    %c0_i32_1 = arith.constant 0 : i32
    return %c0_i32, %c0_i32_0 : i32, i32
  }
  func.func @transform_6(%arg0: i32) -> (i32, i32) {
    %c0_i32 = arith.constant 0 : i32
    %c0_i32_0 = arith.constant 0 : i32
    %c0_i32_1 = arith.constant 0 : i32
    return %c0_i32, %c0_i32_0 : i32, i32
  }
  func.func @transform_7(%arg0: i32) -> (i32, i32) {
    %c0_i32 = arith.constant 0 : i32
    %c0_i32_0 = arith.constant 0 : i32
    %c0_i32_1 = arith.constant 0 : i32
    return %c0_i32, %c0_i32_0 : i32, i32
  }
  func.func @transform_8(%arg0: i32) -> (i32, i32) {
    %c0_i32 = arith.constant 0 : i32
    %c0_i32_0 = arith.constant 0 : i32
    %c0_i32_1 = arith.constant 0 : i32
    return %c0_i32, %c0_i32_0 : i32, i32
  }
  func.func @transform_9(%arg0: i32) -> (i32, i32) {
    %c0_i32 = arith.constant 0 : i32
    %c0_i32_0 = arith.constant 0 : i32
    %c0_i32_1 = arith.constant 0 : i32
    return %c0_i32, %c0_i32_0 : i32, i32
  }
  func.func @transform_10(%arg0: i32) -> (i32, i32) {
    %c0_i32 = arith.constant 0 : i32
    %c0_i32_0 = arith.constant 0 : i32
    %c0_i32_1 = arith.constant 0 : i32
    return %c0_i32, %c0_i32_0 : i32, i32
  }
  func.func @transform_11(%arg0: i32) -> (i32, i32) {
    %c0_i32 = arith.constant 0 : i32
    %c0_i32_0 = arith.constant 0 : i32
    %c0_i32_1 = arith.constant 0 : i32
    return %c0_i32, %c0_i32_0 : i32, i32
  }
  func.func @transform_12(%arg0: i32) -> (i32, i32) {
    %c0_i32 = arith.constant 0 : i32
    %c0_i32_0 = arith.constant 0 : i32
    %c0_i32_1 = arith.constant 0 : i32
    return %c0_i32, %c0_i32_0 : i32, i32
  }
  func.func @transform_13(%arg0: i32) -> (i32, i32) {
    %c0_i32 = arith.constant 0 : i32
    %c0_i32_0 = arith.constant 0 : i32
    %c0_i32_1 = arith.constant 0 : i32
    return %c0_i32, %c0_i32_0 : i32, i32
  }
  func.func @transform_14(%arg0: i32) -> (i32, i32) {
    %c0_i32 = arith.constant 0 : i32
    %c0_i32_0 = arith.constant 0 : i32
    %c0_i32_1 = arith.constant 0 : i32
    return %c0_i32, %c0_i32_0 : i32, i32
  }
  func.func @transform_15(%arg0: i32) -> (i32, i32) {
    %c0_i32 = arith.constant 0 : i32
    %c0_i32_0 = arith.constant 0 : i32
    %c0_i32_1 = arith.constant 0 : i32
    return %c0_i32, %c0_i32_0 : i32, i32
  }
  func.func @transform_16(%arg0: i32) -> (i32, i32) {
    %c0_i32 = arith.constant 0 : i32
    %c0_i32_0 = arith.constant 0 : i32
    %c0_i32_1 = arith.constant 0 : i32
    return %c0_i32, %c0_i32_0 : i32, i32
  }
  func.func @transform_17(%arg0: i32) -> (i32, i32) {
    %c0_i32 = arith.constant 0 : i32
    %c0_i32_0 = arith.constant 0 : i32
    %c0_i32_1 = arith.constant 0 : i32
    return %c0_i32, %c0_i32_0 : i32, i32
  }
  func.func @transform_18(%arg0: i32) -> (i32, i32) {
    %c0_i32 = arith.constant 0 : i32
    %c0_i32_0 = arith.constant 0 : i32
    %c0_i32_1 = arith.constant 0 : i32
    return %c0_i32, %c0_i32_0 : i32, i32
  }
  func.func @transform_19(%arg0: i32) -> (i32, i32) {
    %c0_i32 = arith.constant 0 : i32
    %c0_i32_0 = arith.constant 0 : i32
    %c0_i32_1 = arith.constant 0 : i32
    return %c0_i32, %c0_i32_0 : i32, i32
  }
  func.func @transform_20(%arg0: i32) -> (i32, i32) {
    %c0_i32 = arith.constant 0 : i32
    %c0_i32_0 = arith.constant 0 : i32
    %c0_i32_1 = arith.constant 0 : i32
    return %c0_i32, %c0_i32_0 : i32, i32
  }
  func.func @transform_21(%arg0: i32) -> (i32, i32) {
    %c0_i32 = arith.constant 0 : i32
    %c0_i32_0 = arith.constant 0 : i32
    %c0_i32_1 = arith.constant 0 : i32
    return %c0_i32, %c0_i32_0 : i32, i32
  }
  func.func @transform_22(%arg0: i32) -> (i32, i32) {
    %c0_i32 = arith.constant 0 : i32
    %c0_i32_0 = arith.constant 0 : i32
    %c0_i32_1 = arith.constant 0 : i32
    return %c0_i32, %c0_i32_0 : i32, i32
  }
  func.func @transform_23(%arg0: i32) -> (i32, i32) {
    %c0_i32 = arith.constant 0 : i32
    %c0_i32_0 = arith.constant 0 : i32
    %c0_i32_1 = arith.constant 0 : i32
    return %c0_i32, %c0_i32_0 : i32, i32
  }
  func.func @transform_24(%arg0: i32) -> (i32, i32) {
    %c0_i32 = arith.constant 0 : i32
    %c0_i32_0 = arith.constant 0 : i32
    %c0_i32_1 = arith.constant 0 : i32
    return %c0_i32, %c0_i32_0 : i32, i32
  }
  func.func @transform_25(%arg0: i32) -> (i32, i32) {
    %c0_i32 = arith.constant 0 : i32
    %c0_i32_0 = arith.constant 0 : i32
    %c0_i32_1 = arith.constant 0 : i32
    return %c0_i32, %c0_i32_0 : i32, i32
  }
  func.func @transform_26(%arg0: i32) -> (i32, i32) {
    %c0_i32 = arith.constant 0 : i32
    %c0_i32_0 = arith.constant 0 : i32
    %c0_i32_1 = arith.constant 0 : i32
    return %c0_i32, %c0_i32_0 : i32, i32
  }
  func.func @transform_27(%arg0: i32) -> (i32, i32, i32) {
    %c0_i32 = arith.constant 0 : i32
    %c0_i32_0 = arith.constant 0 : i32
    %c0_i32_1 = arith.constant 0 : i32
    return %arg0, %c0_i32, %c0_i32_0 : i32, i32, i32
  }
  func.func @transform_28(%arg0: i32) -> (i32, i32, i32) {
    %c0_i32 = arith.constant 0 : i32
    %c0_i32_0 = arith.constant 0 : i32
    %c0_i32_1 = arith.constant 0 : i32
    return %arg0, %c0_i32, %c0_i32_0 : i32, i32, i32
  }
}

</mosaic_0001>

<llo_original>
// kernel: resnet_forward.1
$region0: #{resnet_forward.1}
  #allocation0 [shape = 'u32[]', space=smem, size = 0x4, offset = 0x4, fixed_abs, tag = 'smem constant byte address 0x4 - core index']
  #allocation1 [shape = 'u32[72,128]{1,0:T(1,128)}', space=vmem, size = 0x9000, scoped, tag = 'internal scratch']
  %s0 = inlined_call_operand.vmem [shape: f32[2,16,4], index: 0, kind: input, shape index: {}]
  %s1 = inlined_call_operand.vmem [shape: bf16[28,64], index: 1, kind: input, shape index: {}]
  %s2 = inlined_call_operand.vmem [shape: f32[1,64], index: 2, kind: input, shape index: {}]
  %s3 = inlined_call_operand.vmem [shape: bf16[320,64], index: 3, kind: input, shape index: {}]
  %s4 = inlined_call_operand.vmem [shape: f32[1,64], index: 4, kind: input, shape index: {}]
  %s5 = inlined_call_operand.vmem [shape: bf16[192,64], index: 5, kind: input, shape index: {}]
  %s6 = inlined_call_operand.vmem [shape: f32[1,64], index: 6, kind: input, shape index: {}]
  %s7 = inlined_call_operand.vmem [shape: bf16[4,64], index: 7, kind: input, shape index: {}]
  %s8 = inlined_call_operand.vmem [shape: f32[1,64], index: 8, kind: input, shape index: {}]
  %s9 = inlined_call_operand.hbm [shape: bf16[448,128], index: 9, kind: input, shape index: {}]
  %s10 = inlined_call_operand.vmem [shape: f32[1,128], index: 10, kind: input, shape index: {}]
  %s11 = inlined_call_operand.vmem [shape: bf16[640,128], index: 11, kind: input, shape index: {}]
  %s12 = inlined_call_operand.vmem [shape: f32[1,128], index: 12, kind: input, shape index: {}]
  %s13 = inlined_call_operand.hbm [shape: bf16[384,128], index: 13, kind: input, shape index: {}]
  %s14 = inlined_call_operand.vmem [shape: f32[1,128], index: 14, kind: input, shape index: {}]
  %s15 = inlined_call_operand.vmem [shape: bf16[64,128], index: 15, kind: input, shape index: {}]
  %s16 = inlined_call_operand.vmem [shape: f32[1,128], index: 16, kind: input, shape index: {}]
  %s17 = inlined_call_operand.hbm [shape: bf16[896,128], index: 17, kind: input, shape index: {}]
  %s18 = inlined_call_operand.vmem [shape: f32[1,128], index: 18, kind: input, shape index: {}]
  %s19 = inlined_call_operand.hbm [shape: bf16[640,128], index: 19, kind: input, shape index: {}]
  %s20 = inlined_call_operand.vmem [shape: f32[1,128], index: 20, kind: input, shape index: {}]
  %s21 = inlined_call_operand.hbm [shape: bf16[384,128], index: 21, kind: input, shape index: {}]
  %s22 = inlined_call_operand.vmem [shape: f32[1,128], index: 22, kind: input, shape index: {}]
  %s23 = inlined_call_operand.vmem [shape: f32[1,128], index: 23, kind: input, shape index: {}]
  %s24 = inlined_call_operand.vmem [shape: f32[1,128], index: 24, kind: input, shape index: {}]
  %s25 = inlined_call_operand.vmem [shape: bf16[128,128], index: 25, kind: input, shape index: {}]
  %s26 = inlined_call_operand.vmem [shape: f32[1,128], index: 26, kind: input, shape index: {}]
  %s27 = inlined_call_operand.hbm [shape: f32[2,1,128], index: 27, kind: output, shape index: {0}]
  %s28 = inlined_call_operand.hbm [shape: f32[2,1,128], index: 28, kind: output, shape index: {1}]
  %29 = xla_tuple %s27, %s28
  %s30 = sld [smem:[#allocation0]]
  $region169: #{resnet_forward.1} parent=0
    _
  %s32 = ssub.s32 1, %s30
  %s33 = scalar_select 0, %s32, %s30
  $region1: #{resnet_forward.1} parent=0
    #allocation2 [shape = 'u8[114688]{0}', space=vmem, size = 0x1c000, scoped, tag = 'input window, operand 9, single buffered']
    #allocation3 [shape = 's32[2]{0}', space=sflag, size = 0x8, scoped, tag = 'scoped memory for resnet_forward.1']
    #allocation4 [shape = 's32[2]{0}', space=sflag, size = 0x8, scoped, tag = 'scoped memory for resnet_forward.1']
    #allocation5 [shape = 'u8[98304]{0}', space=vmem, size = 0x18000, scoped, tag = 'input window, operand 13, single buffered']
    #allocation6 [shape = 's32[1]{0}', space=sflag, size = 0x4, scoped, tag = 'scoped memory for resnet_forward.1']
    #allocation7 [shape = 'u8[229376]{0}', space=vmem, size = 0x38000, scoped, tag = 'input window, operand 17, single buffered']
    #allocation8 [shape = 'u8[163840]{0}', space=vmem, size = 0x28000, scoped, tag = 'input window, operand 19, single buffered']
    #allocation9 [shape = 's32[1]{0}', space=sflag, size = 0x4, scoped, tag = 'scoped memory for resnet_forward.1']
    #allocation10 [shape = 'u8[98304]{0}', space=vmem, size = 0x18000, scoped, tag = 'input window, operand 21, single buffered']
    #allocation11 [shape = 'u8[1024]{0}', space=vmem, size = 0x400, scoped, tag = 'output window, operand 0']
    #allocation12 [shape = 'u8[1024]{0}', space=vmem, size = 0x400, scoped, tag = 'output window, operand 1']
    #allocation13 [shape = 's32[2]{0}', space=sflag, size = 0x8, scoped, tag = 'scoped memory for resnet_forward.1']
    %34 = vsyncpa [#allocation3], 0
    %35 = vsyncpa [#allocation6], 0
    %36 = vsyncpa [#allocation9], 0
    %37 = vsyncpa [#allocation4], 0
    %s38 = scalar_lea.sflag [#allocation4], 1
    %39 = vsyncpa %s38, 0
    %40 = vsyncpa [#allocation13], 0
    %s41 = scalar_lea.sflag [#allocation13], 1
    %42 = vsyncpa %s41, 0
    loop: start=0, step=1, limit=4
    $region2: #{resnet_forward.1} parent=1 // loop_pre_header
      _
    $region3: #{resnet_forward.1} parent=1 // loop_header
      %s44 = sphi 0, %s48
      %p45 = scmp.ge.s32.totalorder %s44, 4
      %s54 = sphi 0, %s56
      %s57 = sphi 0, %s54
      %s58 = sphi 0, %s57
      %s74 = sphi 0, %s58
      %s78 = sphi 0, %s78
      %s80 = sphi 0, %s78
      %s81 = sphi 0, %s80
      %s95 = sphi 0, %s81
      %s99 = sphi 0, %s99
      %s101 = sphi 0, %s99
      %s102 = sphi 0, %s101
      %s116 = sphi 0, %s102
      %s120 = sphi 0, %s120
      %s122 = sphi 0, %s120
      %s123 = sphi 0, %s122
      %s137 = sphi 0, %s123
      %s141 = sphi 0, %s141
      %s143 = sphi 0, %s141
      %s144 = sphi 0, %s143
      %s158 = sphi 0, %s144
      %s162 = sphi 0, %s162
      %s164 = sphi 0, %s162
      %s165 = sphi 0, %s164
      %s179 = sphi 0, %s165
      %s183 = sphi 0, %s183
      %s185 = sphi 0, %s183
      %s186 = sphi 0, %s185
      %s200 = sphi 0, %s186
      %s204 = sphi 0, %s204
      %s206 = sphi 0, %s204
      %s207 = sphi 0, %s206
      %s221 = sphi 0, %s207
      %s225 = sphi 0, %s225
      %s227 = sphi 0, %s225
      %s228 = sphi 0, %s227
      %s242 = sphi 0, %s228
      %s246 = sphi 0, %s246
      %s248 = sphi 0, %s246
      %s249 = sphi 0, %s248
      %s263 = sphi 0, %s249
      %s267 = sphi 0, %s267
      %s269 = sphi 0, %s267
      %s270 = sphi 0, %s269
      %s284 = sphi 0, %s270
      %s288 = sphi 0, %s288
      %s290 = sphi 0, %s288
      %s291 = sphi 0, %s290
      %s305 = sphi 0, %s291
      %s309 = sphi 0, %s309
      %s311 = sphi 0, %s309
      %s312 = sphi 0, %s311
      %s326 = sphi 0, %s312
      %s330 = sphi 0, %s330
      %s332 = sphi 0, %s330
      %s333 = sphi 0, %s332
      %s347 = sphi 0, %s333
      %s351 = sphi 0, %s351
      %s353 = sphi 0, %s351
      %s354 = sphi 0, %s353
      %s368 = sphi 0, %s354
      %s372 = sphi 0, %s372
      %s374 = sphi 0, %s372
      %s375 = sphi 0, %s374
      %s389 = sphi 0, %s375
      %s393 = sphi 0, %s393
      %s395 = sphi 0, %s393
      %s396 = sphi 0, %s395
      %s410 = sphi 0, %s396
      %s414 = sphi 0, %s414
      %s416 = sphi 0, %s414
      %s417 = sphi 0, %s416
      %s431 = sphi 0, %s417
      %s435 = sphi 0, %s435
      %s437 = sphi 0, %s435
      %s438 = sphi 0, %s437
      %s452 = sphi 0, %s438
      %s456 = sphi 0, %s456
      %s458 = sphi 0, %s456
      %s459 = sphi 0, %s458
      %s473 = sphi 0, %s459
      %s477 = sphi 0, %s477
      %s479 = sphi 0, %s477
      %s480 = sphi 0, %s479
      %s494 = sphi 0, %s480
      %s498 = sphi 0, %s498
      %s500 = sphi 0, %s498
      %s501 = sphi 0, %s500
      %s515 = sphi 0, %s501
      %s519 = sphi 0, %s519
      %s521 = sphi 0, %s519
      %s522 = sphi 0, %s521
      %s536 = sphi 0, %s522
      %s540 = sphi 0, %s540
      %s542 = sphi 0, %s540
      %s543 = sphi 0, %s542
      %s557 = sphi 0, %s543
      %s561 = sphi 0, %s561
      %s563 = sphi 0, %s561
      %s564 = sphi 0, %s563
      %s578 = sphi 0, %s564
      %s582 = sphi 0, %s582
      %s584 = sphi 0, %s582
      %s585 = sphi 0, %s584
      %s599 = sphi 0, %s585
      %s603 = sphi 0, %s603
      %s605 = sphi 0, %s603
      %s606 = sphi 0, %s605
      %s620 = sphi 0, %s606
      %s626 = sphi 0, %s628
      %s629 = sphi 0, %s626
      %s630 = sphi 0, %s629
      %s646 = sphi 0, %s630
      %s652 = sphi 0, %s654
      %s655 = sphi 0, %s652
      %s656 = sphi 0, %s655
      %s672 = sphi 0, %s656
    $region4: #{resnet_forward.1} parent=1 // loop_header_branch
      %47 = sbr.rel (%p45) target = $region8
    $region5: #{resnet_forward.1} parent=1 // loop_body
      %s49 = ssub.s32 %s44, 1
      %s50 = ssub.s32 %s44, 2
      %s51 = sadd.s32 %s44, 1
      %s52 = ssub.s32 %s44, %s51
      %p53 = scmp.eq.s32.totalorder %s52, 0
      %s55 = sadd.s32 %s54, 1
      %s56 = scalar_select %p53, %s54, %s55
      %p59 = pneg %p53
      %p60 = scmp.eq.s32.totalorder %s44, 1
      %p61 = por %p59, %p60
      %p62 = scmp.ne.s32.totalorder %s54, %s57
      %p63 = scmp.eq.s32.totalorder %s44, 0
      %p64 = por %p62, %p63
      %p65 = scmp.ne.s32.totalorder %s54, %s57
      %p66 = scmp.eq.s32.totalorder %s49, 1
      %p67 = por %p65, %p66
      %p68 = scmp.ne.s32.totalorder %s57, %s58
      %p69 = scmp.eq.s32.totalorder %s49, 0
      %p70 = por %p68, %p69
      %p71 = scmp.ne.s32.totalorder %s57, %s58
      %p72 = scmp.eq.s32.totalorder %s50, 1
      %p73 = por %p71, %p72
      %p75 = scmp.ne.s32.totalorder %s58, %s74
      %p76 = scmp.eq.s32.totalorder %s50, 0
      %p77 = por %p75, %p76
      %s79 = sadd.s32 %s78, 1
      %p82 = scmp.eq.s32.totalorder %s44, 1
      %p83 = scmp.ne.s32.totalorder %s78, %s80
      %p84 = scmp.eq.s32.totalorder %s44, 0
      %p85 = por %p83, %p84
      %p86 = scmp.ne.s32.totalorder %s78, %s80
      %p87 = scmp.eq.s32.totalorder %s49, 1
      %p88 = por %p86, %p87
      %p89 = scmp.ne.s32.totalorder %s80, %s81
      %p90 = scmp.eq.s32.totalorder %s49, 0
      %p91 = por %p89, %p90
      %p92 = scmp.ne.s32.totalorder %s80, %s81
      %p93 = scmp.eq.s32.totalorder %s50, 1
      %p94 = por %p92, %p93
      %p96 = scmp.ne.s32.totalorder %s81, %s95
      %p97 = scmp.eq.s32.totalorder %s50, 0
      %p98 = por %p96, %p97
      %s100 = sadd.s32 %s99, 1
      %p103 = scmp.eq.s32.totalorder %s44, 1
      %p104 = scmp.ne.s32.totalorder %s99, %s101
      %p105 = scmp.eq.s32.totalorder %s44, 0
      %p106 = por %p104, %p105
      %p107 = scmp.ne.s32.totalorder %s99, %s101
      %p108 = scmp.eq.s32.totalorder %s49, 1
      %p109 = por %p107, %p108
      %p110 = scmp.ne.s32.totalorder %s101, %s102
      %p111 = scmp.eq.s32.totalorder %s49, 0
      %p112 = por %p110, %p111
      %p113 = scmp.ne.s32.totalorder %s101, %s102
      %p114 = scmp.eq.s32.totalorder %s50, 1
      %p115 = por %p113, %p114
      %p117 = scmp.ne.s32.totalorder %s102, %s116
      %p118 = scmp.eq.s32.totalorder %s50, 0
      %p119 = por %p117, %p118
      %s121 = sadd.s32 %s120, 1
      %p124 = scmp.eq.s32.totalorder %s44, 1
      %p125 = scmp.ne.s32.totalorder %s120, %s122
      %p126 = scmp.eq.s32.totalorder %s44, 0
      %p127 = por %p125, %p126
      %p128 = scmp.ne.s32.totalorder %s120, %s122
      %p129 = scmp.eq.s32.totalorder %s49, 1
      %p130 = por %p128, %p129
      %p131 = scmp.ne.s32.totalorder %s122, %s123
      %p132 = scmp.eq.s32.totalorder %s49, 0
      %p133 = por %p131, %p132
      %p134 = scmp.ne.s32.totalorder %s122, %s123
      %p135 = scmp.eq.s32.totalorder %s50, 1
      %p136 = por %p134, %p135
      %p138 = scmp.ne.s32.totalorder %s123, %s137
      %p139 = scmp.eq.s32.totalorder %s50, 0
      %p140 = por %p138, %p139
      %s142 = sadd.s32 %s141, 1
      %p145 = scmp.eq.s32.totalorder %s44, 1
      %p146 = scmp.ne.s32.totalorder %s141, %s143
      %p147 = scmp.eq.s32.totalorder %s44, 0
      %p148 = por %p146, %p147
      %p149 = scmp.ne.s32.totalorder %s141, %s143
      %p150 = scmp.eq.s32.totalorder %s49, 1
      %p151 = por %p149, %p150
      %p152 = scmp.ne.s32.totalorder %s143, %s144
      %p153 = scmp.eq.s32.totalorder %s49, 0
      %p154 = por %p152, %p153
      %p155 = scmp.ne.s32.totalorder %s143, %s144
      %p156 = scmp.eq.s32.totalorder %s50, 1
      %p157 = por %p155, %p156
      %p159 = scmp.ne.s32.totalorder %s144, %s158
      %p160 = scmp.eq.s32.totalorder %s50, 0
      %p161 = por %p159, %p160
      %s163 = sadd.s32 %s162, 1
      %p166 = scmp.eq.s32.totalorder %s44, 1
      %p167 = scmp.ne.s32.totalorder %s162, %s164
      %p168 = scmp.eq.s32.totalorder %s44, 0
      %p169 = por %p167, %p168
      %p170 = scmp.ne.s32.totalorder %s162, %s164
      %p171 = scmp.eq.s32.totalorder %s49, 1
      %p172 = por %p170, %p171
      %p173 = scmp.ne.s32.totalorder %s164, %s165
      %p174 = scmp.eq.s32.totalorder %s49, 0
      %p175 = por %p173, %p174
      %p176 = scmp.ne.s32.totalorder %s164, %s165
      %p177 = scmp.eq.s32.totalorder %s50, 1
      %p178 = por %p176, %p177
      %p180 = scmp.ne.s32.totalorder %s165, %s179
      %p181 = scmp.eq.s32.totalorder %s50, 0
      %p182 = por %p180, %p181
      %s184 = sadd.s32 %s183, 1
      %p187 = scmp.eq.s32.totalorder %s44, 1
      %p188 = scmp.ne.s32.totalorder %s183, %s185
      %p189 = scmp.eq.s32.totalorder %s44, 0
      %p190 = por %p188, %p189
      %p191 = scmp.ne.s32.totalorder %s183, %s185
      %p192 = scmp.eq.s32.totalorder %s49, 1
      %p193 = por %p191, %p192
      %p194 = scmp.ne.s32.totalorder %s185, %s186
      %p195 = scmp.eq.s32.totalorder %s49, 0
      %p196 = por %p194, %p195
      %p197 = scmp.ne.s32.totalorder %s185, %s186
      %p198 = scmp.eq.s32.totalorder %s50, 1
      %p199 = por %p197, %p198
      %p201 = scmp.ne.s32.totalorder %s186, %s200
      %p202 = scmp.eq.s32.totalorder %s50, 0
      %p203 = por %p201, %p202
      %s205 = sadd.s32 %s204, 1
      %p208 = scmp.eq.s32.totalorder %s44, 1
      %p209 = scmp.ne.s32.totalorder %s204, %s206
      %p210 = scmp.eq.s32.totalorder %s44, 0
      %p211 = por %p209, %p210
      %p212 = scmp.ne.s32.totalorder %s204, %s206
      %p213 = scmp.eq.s32.totalorder %s49, 1
      %p214 = por %p212, %p213
      %p215 = scmp.ne.s32.totalorder %s206, %s207
      %p216 = scmp.eq.s32.totalorder %s49, 0
      %p217 = por %p215, %p216
      %p218 = scmp.ne.s32.totalorder %s206, %s207
      %p219 = scmp.eq.s32.totalorder %s50, 1
      %p220 = por %p218, %p219
      %p222 = scmp.ne.s32.totalorder %s207, %s221
      %p223 = scmp.eq.s32.totalorder %s50, 0
      %p224 = por %p222, %p223
      %s226 = sadd.s32 %s225, 1
      %p229 = scmp.eq.s32.totalorder %s44, 1
      %p230 = scmp.ne.s32.totalorder %s225, %s227
      %p231 = scmp.eq.s32.totalorder %s44, 0
      %p232 = por %p230, %p231
      %p233 = scmp.ne.s32.totalorder %s225, %s227
      %p234 = scmp.eq.s32.totalorder %s49, 1
      %p235 = por %p233, %p234
      %p236 = scmp.ne.s32.totalorder %s227, %s228
      %p237 = scmp.eq.s32.totalorder %s49, 0
      %p238 = por %p236, %p237
      %p239 = scmp.ne.s32.totalorder %s227, %s228
      %p240 = scmp.eq.s32.totalorder %s50, 1
      %p241 = por %p239, %p240
      %p243 = scmp.ne.s32.totalorder %s228, %s242
      %p244 = scmp.eq.s32.totalorder %s50, 0
      %p245 = por %p243, %p244
      %s247 = sadd.s32 %s246, 1
      %p250 = scmp.eq.s32.totalorder %s44, 1
      %p251 = scmp.ne.s32.totalorder %s246, %s248
      %p252 = scmp.eq.s32.totalorder %s44, 0
      %p253 = por %p251, %p252
      %p254 = scmp.ne.s32.totalorder %s246, %s248
      %p255 = scmp.eq.s32.totalorder %s49, 1
      %p256 = por %p254, %p255
      %p257 = scmp.ne.s32.totalorder %s248, %s249
      %p258 = scmp.eq.s32.totalorder %s49, 0
      %p259 = por %p257, %p258
      %p260 = scmp.ne.s32.totalorder %s248, %s249
      %p261 = scmp.eq.s32.totalorder %s50, 1
      %p262 = por %p260, %p261
      %p264 = scmp.ne.s32.totalorder %s249, %s263
      %p265 = scmp.eq.s32.totalorder %s50, 0
      %p266 = por %p264, %p265
      %s268 = sadd.s32 %s267, 1
      %p271 = scmp.eq.s32.totalorder %s44, 1
      %p272 = scmp.ne.s32.totalorder %s267, %s269
      %p273 = scmp.eq.s32.totalorder %s44, 0
      %p274 = por %p272, %p273
      %p275 = scmp.ne.s32.totalorder %s267, %s269
      %p276 = scmp.eq.s32.totalorder %s49, 1
      %p277 = por %p275, %p276
      %p278 = scmp.ne.s32.totalorder %s269, %s270
      %p279 = scmp.eq.s32.totalorder %s49, 0
      %p280 = por %p278, %p279
      %p281 = scmp.ne.s32.totalorder %s269, %s270
      %p282 = scmp.eq.s32.totalorder %s50, 1
      %p283 = por %p281, %p282
      %p285 = scmp.ne.s32.totalorder %s270, %s284
      %p286 = scmp.eq.s32.totalorder %s50, 0
      %p287 = por %p285, %p286
      %s289 = sadd.s32 %s288, 1
      %p292 = scmp.eq.s32.totalorder %s44, 1
      %p293 = scmp.ne.s32.totalorder %s288, %s290
      %p294 = scmp.eq.s32.totalorder %s44, 0
      %p295 = por %p293, %p294
      %p296 = scmp.ne.s32.totalorder %s288, %s290
      %p297 = scmp.eq.s32.totalorder %s49, 1
      %p298 = por %p296, %p297
      %p299 = scmp.ne.s32.totalorder %s290, %s291
      %p300 = scmp.eq.s32.totalorder %s49, 0
      %p301 = por %p299, %p300
      %p302 = scmp.ne.s32.totalorder %s290, %s291
      %p303 = scmp.eq.s32.totalorder %s50, 1
      %p304 = por %p302, %p303
      %p306 = scmp.ne.s32.totalorder %s291, %s305
      %p307 = scmp.eq.s32.totalorder %s50, 0
      %p308 = por %p306, %p307
      %s310 = sadd.s32 %s309, 1
      %p313 = scmp.eq.s32.totalorder %s44, 1
      %p314 = scmp.ne.s32.totalorder %s309, %s311
      %p315 = scmp.eq.s32.totalorder %s44, 0
      %p316 = por %p314, %p315
      %p317 = scmp.ne.s32.totalorder %s309, %s311
      %p318 = scmp.eq.s32.totalorder %s49, 1
      %p319 = por %p317, %p318
      %p320 = scmp.ne.s32.totalorder %s311, %s312
      %p321 = scmp.eq.s32.totalorder %s49, 0
      %p322 = por %p320, %p321
      %p323 = scmp.ne.s32.totalorder %s311, %s312
      %p324 = scmp.eq.s32.totalorder %s50, 1
      %p325 = por %p323, %p324
      %p327 = scmp.ne.s32.totalorder %s312, %s326
      %p328 = scmp.eq.s32.totalorder %s50, 0
      %p329 = por %p327, %p328
      %s331 = sadd.s32 %s330, 1
      %p334 = scmp.eq.s32.totalorder %s44, 1
      %p335 = scmp.ne.s32.totalorder %s330, %s332
      %p336 = scmp.eq.s32.totalorder %s44, 0
      %p337 = por %p335, %p336
      %p338 = scmp.ne.s32.totalorder %s330, %s332
      %p339 = scmp.eq.s32.totalorder %s49, 1
      %p340 = por %p338, %p339
      %p341 = scmp.ne.s32.totalorder %s332, %s333
      %p342 = scmp.eq.s32.totalorder %s49, 0
      %p343 = por %p341, %p342
      %p344 = scmp.ne.s32.totalorder %s332, %s333
      %p345 = scmp.eq.s32.totalorder %s50, 1
      %p346 = por %p344, %p345
      %p348 = scmp.ne.s32.totalorder %s333, %s347
      %p349 = scmp.eq.s32.totalorder %s50, 0
      %p350 = por %p348, %p349
      %s352 = sadd.s32 %s351, 1
      %p355 = scmp.eq.s32.totalorder %s44, 1
      %p356 = scmp.ne.s32.totalorder %s351, %s353
      %p357 = scmp.eq.s32.totalorder %s44, 0
      %p358 = por %p356, %p357
      %p359 = scmp.ne.s32.totalorder %s351, %s353
      %p360 = scmp.eq.s32.totalorder %s49, 1
      %p361 = por %p359, %p360
      %p362 = scmp.ne.s32.totalorder %s353, %s354
      %p363 = scmp.eq.s32.totalorder %s49, 0
      %p364 = por %p362, %p363
      %p365 = scmp.ne.s32.totalorder %s353, %s354
      %p366 = scmp.eq.s32.totalorder %s50, 1
      %p367 = por %p365, %p366
      %p369 = scmp.ne.s32.totalorder %s354, %s368
      %p370 = scmp.eq.s32.totalorder %s50, 0
      %p371 = por %p369, %p370
      %s373 = sadd.s32 %s372, 1
      %p376 = scmp.eq.s32.totalorder %s44, 1
      %p377 = scmp.ne.s32.totalorder %s372, %s374
      %p378 = scmp.eq.s32.totalorder %s44, 0
      %p379 = por %p377, %p378
      %p380 = scmp.ne.s32.totalorder %s372, %s374
      %p381 = scmp.eq.s32.totalorder %s49, 1
      %p382 = por %p380, %p381
      %p383 = scmp.ne.s32.totalorder %s374, %s375
      %p384 = scmp.eq.s32.totalorder %s49, 0
      %p385 = por %p383, %p384
      %p386 = scmp.ne.s32.totalorder %s374, %s375
      %p387 = scmp.eq.s32.totalorder %s50, 1
      %p388 = por %p386, %p387
      %p390 = scmp.ne.s32.totalorder %s375, %s389
      %p391 = scmp.eq.s32.totalorder %s50, 0
      %p392 = por %p390, %p391
      %s394 = sadd.s32 %s393, 1
      %p397 = scmp.eq.s32.totalorder %s44, 1
      %p398 = scmp.ne.s32.totalorder %s393, %s395
      %p399 = scmp.eq.s32.totalorder %s44, 0
      %p400 = por %p398, %p399
      %p401 = scmp.ne.s32.totalorder %s393, %s395
      %p402 = scmp.eq.s32.totalorder %s49, 1
      %p403 = por %p401, %p402
      %p404 = scmp.ne.s32.totalorder %s395, %s396
      %p405 = scmp.eq.s32.totalorder %s49, 0
      %p406 = por %p404, %p405
      %p407 = scmp.ne.s32.totalorder %s395, %s396
      %p408 = scmp.eq.s32.totalorder %s50, 1
      %p409 = por %p407, %p408
      %p411 = scmp.ne.s32.totalorder %s396, %s410
      %p412 = scmp.eq.s32.totalorder %s50, 0
      %p413 = por %p411, %p412
      %s415 = sadd.s32 %s414, 1
      %p418 = scmp.eq.s32.totalorder %s44, 1
      %p419 = scmp.ne.s32.totalorder %s414, %s416
      %p420 = scmp.eq.s32.totalorder %s44, 0
      %p421 = por %p419, %p420
      %p422 = scmp.ne.s32.totalorder %s414, %s416
      %p423 = scmp.eq.s32.totalorder %s49, 1
      %p424 = por %p422, %p423
      %p425 = scmp.ne.s32.totalorder %s416, %s417
      %p426 = scmp.eq.s32.totalorder %s49, 0
      %p427 = por %p425, %p426
      %p428 = scmp.ne.s32.totalorder %s416, %s417
      %p429 = scmp.eq.s32.totalorder %s50, 1
      %p430 = por %p428, %p429
      %p432 = scmp.ne.s32.totalorder %s417, %s431
      %p433 = scmp.eq.s32.totalorder %s50, 0
      %p434 = por %p432, %p433
      %s436 = sadd.s32 %s435, 1
      %p439 = scmp.eq.s32.totalorder %s44, 1
      %p440 = scmp.ne.s32.totalorder %s435, %s437
      %p441 = scmp.eq.s32.totalorder %s44, 0
      %p442 = por %p440, %p441
      %p443 = scmp.ne.s32.totalorder %s435, %s437
      %p444 = scmp.eq.s32.totalorder %s49, 1
      %p445 = por %p443, %p444
      %p446 = scmp.ne.s32.totalorder %s437, %s438
      %p447 = scmp.eq.s32.totalorder %s49, 0
      %p448 = por %p446, %p447
      %p449 = scmp.ne.s32.totalorder %s437, %s438
      %p450 = scmp.eq.s32.totalorder %s50, 1
      %p451 = por %p449, %p450
      %p453 = scmp.ne.s32.totalorder %s438, %s452
      %p454 = scmp.eq.s32.totalorder %s50, 0
      %p455 = por %p453, %p454
      %s457 = sadd.s32 %s456, 1
      %p460 = scmp.eq.s32.totalorder %s44, 1
      %p461 = scmp.ne.s32.totalorder %s456, %s458
      %p462 = scmp.eq.s32.totalorder %s44, 0
      %p463 = por %p461, %p462
      %p464 = scmp.ne.s32.totalorder %s456, %s458
      %p465 = scmp.eq.s32.totalorder %s49, 1
      %p466 = por %p464, %p465
      %p467 = scmp.ne.s32.totalorder %s458, %s459
      %p468 = scmp.eq.s32.totalorder %s49, 0
      %p469 = por %p467, %p468
      %p470 = scmp.ne.s32.totalorder %s458, %s459
      %p471 = scmp.eq.s32.totalorder %s50, 1
      %p472 = por %p470, %p471
      %p474 = scmp.ne.s32.totalorder %s459, %s473
      %p475 = scmp.eq.s32.totalorder %s50, 0
      %p476 = por %p474, %p475
      %s478 = sadd.s32 %s477, 1
      %p481 = scmp.eq.s32.totalorder %s44, 1
      %p482 = scmp.ne.s32.totalorder %s477, %s479
      %p483 = scmp.eq.s32.totalorder %s44, 0
      %p484 = por %p482, %p483
      %p485 = scmp.ne.s32.totalorder %s477, %s479
      %p486 = scmp.eq.s32.totalorder %s49, 1
      %p487 = por %p485, %p486
      %p488 = scmp.ne.s32.totalorder %s479, %s480
      %p489 = scmp.eq.s32.totalorder %s49, 0
      %p490 = por %p488, %p489
      %p491 = scmp.ne.s32.totalorder %s479, %s480
      %p492 = scmp.eq.s32.totalorder %s50, 1
      %p493 = por %p491, %p492
      %p495 = scmp.ne.s32.totalorder %s480, %s494
      %p496 = scmp.eq.s32.totalorder %s50, 0
      %p497 = por %p495, %p496
      %s499 = sadd.s32 %s498, 1
      %p502 = scmp.eq.s32.totalorder %s44, 1
      %p503 = scmp.ne.s32.totalorder %s498, %s500
      %p504 = scmp.eq.s32.totalorder %s44, 0
      %p505 = por %p503, %p504
      %p506 = scmp.ne.s32.totalorder %s498, %s500
      %p507 = scmp.eq.s32.totalorder %s49, 1
      %p508 = por %p506, %p507
      %p509 = scmp.ne.s32.totalorder %s500, %s501
      %p510 = scmp.eq.s32.totalorder %s49, 0
      %p511 = por %p509, %p510
      %p512 = scmp.ne.s32.totalorder %s500, %s501
      %p513 = scmp.eq.s32.totalorder %s50, 1
      %p514 = por %p512, %p513
      %p516 = scmp.ne.s32.totalorder %s501, %s515
      %p517 = scmp.eq.s32.totalorder %s50, 0
      %p518 = por %p516, %p517
      %s520 = sadd.s32 %s519, 1
      %p523 = scmp.eq.s32.totalorder %s44, 1
      %p524 = scmp.ne.s32.totalorder %s519, %s521
      %p525 = scmp.eq.s32.totalorder %s44, 0
      %p526 = por %p524, %p525
      %p527 = scmp.ne.s32.totalorder %s519, %s521
      %p528 = scmp.eq.s32.totalorder %s49, 1
      %p529 = por %p527, %p528
      %p530 = scmp.ne.s32.totalorder %s521, %s522
      %p531 = scmp.eq.s32.totalorder %s49, 0
      %p532 = por %p530, %p531
      %p533 = scmp.ne.s32.totalorder %s521, %s522
      %p534 = scmp.eq.s32.totalorder %s50, 1
      %p535 = por %p533, %p534
      %p537 = scmp.ne.s32.totalorder %s522, %s536
      %p538 = scmp.eq.s32.totalorder %s50, 0
      %p539 = por %p537, %p538
      %s541 = sadd.s32 %s540, 1
      %p544 = scmp.eq.s32.totalorder %s44, 1
      %p545 = scmp.ne.s32.totalorder %s540, %s542
      %p546 = scmp.eq.s32.totalorder %s44, 0
      %p547 = por %p545, %p546
      %p548 = scmp.ne.s32.totalorder %s540, %s542
      %p549 = scmp.eq.s32.totalorder %s49, 1
      %p550 = por %p548, %p549
      %p551 = scmp.ne.s32.totalorder %s542, %s543
      %p552 = scmp.eq.s32.totalorder %s49, 0
      %p553 = por %p551, %p552
      %p554 = scmp.ne.s32.totalorder %s542, %s543
      %p555 = scmp.eq.s32.totalorder %s50, 1
      %p556 = por %p554, %p555
      %p558 = scmp.ne.s32.totalorder %s543, %s557
      %p559 = scmp.eq.s32.totalorder %s50, 0
      %p560 = por %p558, %p559
      %s562 = sadd.s32 %s561, 1
      %p565 = scmp.eq.s32.totalorder %s44, 1
      %p566 = scmp.ne.s32.totalorder %s561, %s563
      %p567 = scmp.eq.s32.totalorder %s44, 0
      %p568 = por %p566, %p567
      %p569 = scmp.ne.s32.totalorder %s561, %s563
      %p570 = scmp.eq.s32.totalorder %s49, 1
      %p571 = por %p569, %p570
      %p572 = scmp.ne.s32.totalorder %s563, %s564
      %p573 = scmp.eq.s32.totalorder %s49, 0
      %p574 = por %p572, %p573
      %p575 = scmp.ne.s32.totalorder %s563, %s564
      %p576 = scmp.eq.s32.totalorder %s50, 1
      %p577 = por %p575, %p576
      %p579 = scmp.ne.s32.totalorder %s564, %s578
      %p580 = scmp.eq.s32.totalorder %s50, 0
      %p581 = por %p579, %p580
      %s583 = sadd.s32 %s582, 1
      %p586 = scmp.eq.s32.totalorder %s44, 1
      %p587 = scmp.ne.s32.totalorder %s582, %s584
      %p588 = scmp.eq.s32.totalorder %s44, 0
      %p589 = por %p587, %p588
      %p590 = scmp.ne.s32.totalorder %s582, %s584
      %p591 = scmp.eq.s32.totalorder %s49, 1
      %p592 = por %p590, %p591
      %p593 = scmp.ne.s32.totalorder %s584, %s585
      %p594 = scmp.eq.s32.totalorder %s49, 0
      %p595 = por %p593, %p594
      %p596 = scmp.ne.s32.totalorder %s584, %s585
      %p597 = scmp.eq.s32.totalorder %s50, 1
      %p598 = por %p596, %p597
      %p600 = scmp.ne.s32.totalorder %s585, %s599
      %p601 = scmp.eq.s32.totalorder %s50, 0
      %p602 = por %p600, %p601
      %s604 = sadd.s32 %s603, 1
      %p607 = scmp.eq.s32.totalorder %s44, 1
      %p608 = scmp.ne.s32.totalorder %s603, %s605
      %p609 = scmp.eq.s32.totalorder %s44, 0
      %p610 = por %p608, %p609
      %p611 = scmp.ne.s32.totalorder %s603, %s605
      %p612 = scmp.eq.s32.totalorder %s49, 1
      %p613 = por %p611, %p612
      %p614 = scmp.ne.s32.totalorder %s605, %s606
      %p615 = scmp.eq.s32.totalorder %s49, 0
      %p616 = por %p614, %p615
      %p617 = scmp.ne.s32.totalorder %s605, %s606
      %p618 = scmp.eq.s32.totalorder %s50, 1
      %p619 = por %p617, %p618
      %p621 = scmp.ne.s32.totalorder %s606, %s620
      %p622 = scmp.eq.s32.totalorder %s50, 0
      %p623 = por %p621, %p622
      %s624 = ssub.s32 %s44, %s51
      %p625 = scmp.eq.s32.totalorder %s624, 0
      %s627 = sadd.s32 %s626, 1
      %s628 = scalar_select %p625, %s626, %s627
      %p631 = pneg %p625
      %p632 = scmp.eq.s32.totalorder %s44, 1
      %p633 = por %p631, %p632
      %p634 = scmp.ne.s32.totalorder %s626, %s629
      %p635 = scmp.eq.s32.totalorder %s44, 0
      %p636 = por %p634, %p635
      %p637 = scmp.ne.s32.totalorder %s626, %s629
      %p638 = scmp.eq.s32.totalorder %s49, 1
      %p639 = por %p637, %p638
      %p640 = scmp.ne.s32.totalorder %s629, %s630
      %p641 = scmp.eq.s32.totalorder %s49, 0
      %p642 = por %p640, %p641
      %p643 = scmp.ne.s32.totalorder %s629, %s630
      %p644 = scmp.eq.s32.totalorder %s50, 1
      %p645 = por %p643, %p644
      %p647 = scmp.ne.s32.totalorder %s630, %s646
      %p648 = scmp.eq.s32.totalorder %s50, 0
      %p649 = por %p647, %p648
      %s650 = ssub.s32 %s44, %s51
      %p651 = scmp.eq.s32.totalorder %s650, 0
      %s653 = sadd.s32 %s652, 1
      %s654 = scalar_select %p651, %s652, %s653
      %p657 = pneg %p651
      %p658 = scmp.eq.s32.totalorder %s44, 1
      %p659 = por %p657, %p658
      %p660 = scmp.ne.s32.totalorder %s652, %s655
      %p661 = scmp.eq.s32.totalorder %s44, 0
      %p662 = por %p660, %p661
      %p663 = scmp.ne.s32.totalorder %s652, %s655
      %p664 = scmp.eq.s32.totalorder %s49, 1
      %p665 = por %p663, %p664
      %p666 = scmp.ne.s32.totalorder %s655, %s656
      %p667 = scmp.eq.s32.totalorder %s49, 0
      %p668 = por %p666, %p667
      %p669 = scmp.ne.s32.totalorder %s655, %s656
      %p670 = scmp.eq.s32.totalorder %s50, 1
      %p671 = por %p669, %p670
      %p673 = scmp.ne.s32.totalorder %s656, %s672
      %p674 = scmp.eq.s32.totalorder %s50, 0
      %p675 = por %p673, %p674
      %p676 = scmp.le.s32.totalorder 1, %s44
      %p677 = scmp.lt.s32.totalorder %s44, 3
      %p678 = pnand %p676, %p677
      %p679 = pneg %p678
      // Predicated region
      $region9: #{resnet_forward.1} parent=5 // pred_check
        _
      $region10: #{resnet_forward.1} parent=5 // pred_check_branch
        %681 = sbr.rel (%p678) target = $region12
      $region11: #{resnet_forward.1} parent=5 // pred_region
        %s682 = ssub.s32 %s44, 1
        // Predicated region
        $region13: #{resnet_forward.1} parent=11 // pred_check
          %p683 = pneg %p91
        $region14: #{resnet_forward.1} parent=11 // pred_check_branch
          %685 = sbr.rel (%p683) target = $region16
        $region15: #{resnet_forward.1} parent=11 // pred_region
          _
        $region16: #{resnet_forward.1} parent=11 // pred_fallthru
          _
        // Predicated region
        $region17: #{resnet_forward.1} parent=11 // pred_check
          %p686 = pneg %p112
        $region18: #{resnet_forward.1} parent=11 // pred_check_branch
          %688 = sbr.rel (%p686) target = $region20
        $region19: #{resnet_forward.1} parent=11 // pred_region
          _
        $region20: #{resnet_forward.1} parent=11 // pred_fallthru
          _
        // Predicated region
        $region21: #{resnet_forward.1} parent=11 // pred_check
          %p689 = pneg %p133
        $region22: #{resnet_forward.1} parent=11 // pred_check_branch
          %691 = sbr.rel (%p689) target = $region24
        $region23: #{resnet_forward.1} parent=11 // pred_region
          _
        $region24: #{resnet_forward.1} parent=11 // pred_fallthru
          _
        // Predicated region
        $region25: #{resnet_forward.1} parent=11 // pred_check
          %p692 = pneg %p154
        $region26: #{resnet_forward.1} parent=11 // pred_check_branch
          %694 = sbr.rel (%p692) target = $region28
        $region27: #{resnet_forward.1} parent=11 // pred_region
          _
        $region28: #{resnet_forward.1} parent=11 // pred_fallthru
          _
        // Predicated region
        $region29: #{resnet_forward.1} parent=11 // pred_check
          %p695 = pneg %p175
        $region30: #{resnet_forward.1} parent=11 // pred_check_branch
          %697 = sbr.rel (%p695) target = $region32
        $region31: #{resnet_forward.1} parent=11 // pred_region
          _
        $region32: #{resnet_forward.1} parent=11 // pred_fallthru
          _
        // Predicated region
        $region33: #{resnet_forward.1} parent=11 // pred_check
          %p698 = pneg %p196
        $region34: #{resnet_forward.1} parent=11 // pred_check_branch
          %700 = sbr.rel (%p698) target = $region36
        $region35: #{resnet_forward.1} parent=11 // pred_region
          _
        $region36: #{resnet_forward.1} parent=11 // pred_fallthru
          _
        // Predicated region
        $region37: #{resnet_forward.1} parent=11 // pred_check
          %p701 = pneg %p217
        $region38: #{resnet_forward.1} parent=11 // pred_check_branch
          %703 = sbr.rel (%p701) target = $region40
        $region39: #{resnet_forward.1} parent=11 // pred_region
          _
        $region40: #{resnet_forward.1} parent=11 // pred_fallthru
          _
        // Predicated region
        $region41: #{resnet_forward.1} parent=11 // pred_check
          %p704 = pneg %p238
        $region42: #{resnet_forward.1} parent=11 // pred_check_branch
          %706 = sbr.rel (%p704) target = $region44
        $region43: #{resnet_forward.1} parent=11 // pred_region
          _
        $region44: #{resnet_forward.1} parent=11 // pred_fallthru
          _
        // Predicated region
        $region45: #{resnet_forward.1} parent=11 // pred_check
          %p707 = pneg %p259
        $region46: #{resnet_forward.1} parent=11 // pred_check_branch
          %709 = sbr.rel (%p707) target = $region48
        $region47: #{resnet_forward.1} parent=11 // pred_region
          %711 = vsyncadd [#allocation3], 0
          %s712 = sshll.u32 %s9, 4
          %s713 = int_to_ptr.hbm [resolvable:$true] %s712
          %s714 = sshll.u32 [#allocation2], 4
          %s715 = int_to_ptr.vmem [resolvable:$true] %s714
          %720 = dma.hbm_to_vmem [thread:$0]  %s713, 3584, %s715, [#allocation3], 64, 64, 4
        $region48: #{resnet_forward.1} parent=11 // pred_fallthru
          _
        // Predicated region
        $region49: #{resnet_forward.1} parent=11 // pred_check
          %p721 = pneg %p280
        $region50: #{resnet_forward.1} parent=11 // pred_check_branch
          %723 = sbr.rel (%p721) target = $region52
        $region51: #{resnet_forward.1} parent=11 // pred_region
          _
        $region52: #{resnet_forward.1} parent=11 // pred_fallthru
          _
        // Predicated region
        $region53: #{resnet_forward.1} parent=11 // pred_check
          %p724 = pneg %p301
        $region54: #{resnet_forward.1} parent=11 // pred_check_branch
          %726 = sbr.rel (%p724) target = $region56
        $region55: #{resnet_forward.1} parent=11 // pred_region
          _
        $region56: #{resnet_forward.1} parent=11 // pred_fallthru
          _
        // Predicated region
        $region57: #{resnet_forward.1} parent=11 // pred_check
          %p727 = pneg %p322
        $region58: #{resnet_forward.1} parent=11 // pred_check_branch
          %729 = sbr.rel (%p727) target = $region60
        $region59: #{resnet_forward.1} parent=11 // pred_region
          _
        $region60: #{resnet_forward.1} parent=11 // pred_fallthru
          _
        // Predicated region
        $region61: #{resnet_forward.1} parent=11 // pred_check
          %p730 = pneg %p343
        $region62: #{resnet_forward.1} parent=11 // pred_check_branch
          %732 = sbr.rel (%p730) target = $region64
        $region63: #{resnet_forward.1} parent=11 // pred_region
          %734 = vsyncadd [#allocation6], 0
          %s735 = sshll.u32 %s13, 4
          %s736 = int_to_ptr.hbm [resolvable:$true] %s735
          %s737 = sshll.u32 [#allocation5], 4
          %s738 = int_to_ptr.vmem [resolvable:$true] %s737
          %743 = dma.hbm_to_vmem [thread:$0]  %s736, 3072, %s738, [#allocation6], 64, 64, 4
        $region64: #{resnet_forward.1} parent=11 // pred_fallthru
          _
        // Predicated region
        $region65: #{resnet_forward.1} parent=11 // pred_check
          %p744 = pneg %p364
        $region66: #{resnet_forward.1} parent=11 // pred_check_branch
          %746 = sbr.rel (%p744) target = $region68
        $region67: #{resnet_forward.1} parent=11 // pred_region
          _
        $region68: #{resnet_forward.1} parent=11 // pred_fallthru
          _
        // Predicated region
        $region69: #{resnet_forward.1} parent=11 // pred_check
          %p747 = pneg %p385
        $region70: #{resnet_forward.1} parent=11 // pred_check_branch
          %749 = sbr.rel (%p747) target = $region72
        $region71: #{resnet_forward.1} parent=11 // pred_region
          _
        $region72: #{resnet_forward.1} parent=11 // pred_fallthru
          _
        // Predicated region
        $region73: #{resnet_forward.1} parent=11 // pred_check
          %p750 = pneg %p406
        $region74: #{resnet_forward.1} parent=11 // pred_check_branch
          %752 = sbr.rel (%p750) target = $region76
        $region75: #{resnet_forward.1} parent=11 // pred_region
          _
        $region76: #{resnet_forward.1} parent=11 // pred_fallthru
          _
        // Predicated region
        $region77: #{resnet_forward.1} parent=11 // pred_check
          %p753 = pneg %p427
        $region78: #{resnet_forward.1} parent=11 // pred_check_branch
          %755 = sbr.rel (%p753) target = $region80
        $region79: #{resnet_forward.1} parent=11 // pred_region
          %757 = vsyncadd [#allocation6], 0
          %s758 = sshll.u32 %s17, 4
          %s759 = int_to_ptr.hbm [resolvable:$true] %s758
          %s760 = sshll.u32 [#allocation7], 4
          %s761 = int_to_ptr.vmem [resolvable:$true] %s760
          %766 = dma.hbm_to_vmem [thread:$0]  %s759, 7168, %s761, [#allocation6], 64, 64, 4
        $region80: #{resnet_forward.1} parent=11 // pred_fallthru
          _
        // Predicated region
        $region81: #{resnet_forward.1} parent=11 // pred_check
          %p767 = pneg %p448
        $region82: #{resnet_forward.1} parent=11 // pred_check_branch
          %769 = sbr.rel (%p767) target = $region84
        $region83: #{resnet_forward.1} parent=11 // pred_region
          _
        $region84: #{resnet_forward.1} parent=11 // pred_fallthru
          _
        // Predicated region
        $region85: #{resnet_forward.1} parent=11 // pred_check
          %p770 = pneg %p469
        $region86: #{resnet_forward.1} parent=11 // pred_check_branch
          %772 = sbr.rel (%p770) target = $region88
        $region87: #{resnet_forward.1} parent=11 // pred_region
          %774 = vsyncadd [#allocation9], 0
          %s775 = sshll.u32 %s19, 4
          %s776 = int_to_ptr.hbm [resolvable:$true] %s775
          %s777 = sshll.u32 [#allocation8], 4
          %s778 = int_to_ptr.vmem [resolvable:$true] %s777
          %783 = dma.hbm_to_vmem [thread:$0]  %s776, 5120, %s778, [#allocation9], 64, 64, 4
        $region88: #{resnet_forward.1} parent=11 // pred_fallthru
          _
        // Predicated region
        $region89: #{resnet_forward.1} parent=11 // pred_check
          %p784 = pneg %p490
        $region90: #{resnet_forward.1} parent=11 // pred_check_branch
          %786 = sbr.rel (%p784) target = $region92
        $region91: #{resnet_forward.1} parent=11 // pred_region
          _
        $region92: #{resnet_forward.1} parent=11 // pred_fallthru
          _
        // Predicated region
        $region93: #{resnet_forward.1} parent=11 // pred_check
          %p787 = pneg %p511
        $region94: #{resnet_forward.1} parent=11 // pred_check_branch
          %789 = sbr.rel (%p787) target = $region96
        $region95: #{resnet_forward.1} parent=11 // pred_region
          %791 = vsyncadd [#allocation9], 0
          %s792 = sshll.u32 %s21, 4
          %s793 = int_to_ptr.hbm [resolvable:$true] %s792
          %s794 = sshll.u32 [#allocation10], 4
          %s795 = int_to_ptr.vmem [resolvable:$true] %s794
          %800 = dma.hbm_to_vmem [thread:$0]  %s793, 3072, %s795, [#allocation9], 64, 64, 4
        $region96: #{resnet_forward.1} parent=11 // pred_fallthru
          _
        // Predicated region
        $region97: #{resnet_forward.1} parent=11 // pred_check
          %p801 = pneg %p532
        $region98: #{resnet_forward.1} parent=11 // pred_check_branch
          %803 = sbr.rel (%p801) target = $region100
        $region99: #{resnet_forward.1} parent=11 // pred_region
          _
        $region100: #{resnet_forward.1} parent=11 // pred_fallthru
          _
        // Predicated region
        $region101: #{resnet_forward.1} parent=11 // pred_check
          %p804 = pneg %p553
        $region102: #{resnet_forward.1} parent=11 // pred_check_branch
          %806 = sbr.rel (%p804) target = $region104
        $region103: #{resnet_forward.1} parent=11 // pred_region
          _
        $region104: #{resnet_forward.1} parent=11 // pred_fallthru
          _
        // Predicated region
        $region105: #{resnet_forward.1} parent=11 // pred_check
          %p807 = pneg %p574
        $region106: #{resnet_forward.1} parent=11 // pred_check_branch
          %809 = sbr.rel (%p807) target = $region108
        $region107: #{resnet_forward.1} parent=11 // pred_region
          _
        $region108: #{resnet_forward.1} parent=11 // pred_fallthru
          _
        // Predicated region
        $region109: #{resnet_forward.1} parent=11 // pred_check
          %p810 = pneg %p595
        $region110: #{resnet_forward.1} parent=11 // pred_check_branch
          %812 = sbr.rel (%p810) target = $region112
        $region111: #{resnet_forward.1} parent=11 // pred_region
          _
        $region112: #{resnet_forward.1} parent=11 // pred_fallthru
          _
        // Predicated region
        $region113: #{resnet_forward.1} parent=11 // pred_check
          %p813 = pneg %p616
        $region114: #{resnet_forward.1} parent=11 // pred_check_branch
          %815 = sbr.rel (%p813) target = $region116
        $region115: #{resnet_forward.1} parent=11 // pred_region
          _
        $region116: #{resnet_forward.1} parent=11 // pred_fallthru
          _
      $region12: #{resnet_forward.1} parent=5 // pred_fallthru
        _
      %p816 = scmp.lt.s32.totalorder %s44, 2
      // Predicated region
      $region117: #{resnet_forward.1} parent=5 // pred_check
        %p817 = pneg %p816
      $region118: #{resnet_forward.1} parent=5 // pred_check_branch
        %819 = sbr.rel (%p817) target = $region120
      $region119: #{resnet_forward.1} parent=5 // pred_region
        // Predicated region
        $region121: #{resnet_forward.1} parent=119 // pred_check
          %p820 = pneg %p64
        $region122: #{resnet_forward.1} parent=119 // pred_check_branch
          %822 = sbr.rel (%p820) target = $region124
        $region123: #{resnet_forward.1} parent=119 // pred_region
          %p823 = scmp.lt.s32.totalorder %s44, 1
          %s824 = scalar_select %p823, %s44, 1
          %s825 = smul.addr %s824, 2
          %s826 = smul.addr %s825, 8
          %s827 = scalar_lea.vmem %s0, %s826
        $region124: #{resnet_forward.1} parent=119 // pred_fallthru
          _
      $region120: #{resnet_forward.1} parent=5 // pred_fallthru
        _
      %p828 = scmp.le.s32.totalorder 1, %s44
      %p829 = scmp.lt.s32.totalorder %s44, 3
      %p830 = pnand %p828, %p829
      %p831 = pneg %p830
      // Predicated region
      $region125: #{resnet_forward.1} parent=5 // pred_check
        _
      $region126: #{resnet_forward.1} parent=5 // pred_check_branch
        %833 = sbr.rel (%p830) target = $region128
      $region127: #{resnet_forward.1} parent=5 // pred_region
        %s834 = ssub.s32 %s44, 1
        // Predicated region
        $region129: #{resnet_forward.1} parent=127 // pred_check
          %p835 = pneg %p259
        $region130: #{resnet_forward.1} parent=127 // pred_check_branch
          %837 = sbr.rel (%p835) target = $region132
        $region131: #{resnet_forward.1} parent=127 // pred_region
          %839 = dma.done [#allocation3], 3584
        $region132: #{resnet_forward.1} parent=127 // pred_fallthru
          _
        // Predicated region
        $region133: #{resnet_forward.1} parent=127 // pred_check
          %p840 = pneg %p343
        $region134: #{resnet_forward.1} parent=127 // pred_check_branch
          %842 = sbr.rel (%p840) target = $region136
        $region135: #{resnet_forward.1} parent=127 // pred_region
          %844 = dma.done [#allocation6], 3072
        $region136: #{resnet_forward.1} parent=127 // pred_fallthru
          _
        // Predicated region
        $region137: #{resnet_forward.1} parent=127 // pred_check
          %p845 = pneg %p427
        $region138: #{resnet_forward.1} parent=127 // pred_check_branch
          %847 = sbr.rel (%p845) target = $region140
        $region139: #{resnet_forward.1} parent=127 // pred_region
          %849 = dma.done [#allocation6], 7168
        $region140: #{resnet_forward.1} parent=127 // pred_fallthru
          _
        // Predicated region
        $region141: #{resnet_forward.1} parent=127 // pred_check
          %p850 = pneg %p469
        $region142: #{resnet_forward.1} parent=127 // pred_check_branch
          %852 = sbr.rel (%p850) target = $region144
        $region143: #{resnet_forward.1} parent=127 // pred_region
          %854 = dma.done [#allocation9], 5120
        $region144: #{resnet_forward.1} parent=127 // pred_fallthru
          _
        // Predicated region
        $region145: #{resnet_forward.1} parent=127 // pred_check
          %p855 = pneg %p511
        $region146: #{resnet_forward.1} parent=127 // pred_check_branch
          %857 = sbr.rel (%p855) target = $region148
        $region147: #{resnet_forward.1} parent=127 // pred_region
          %859 = dma.done [#allocation9], 3072
        $region148: #{resnet_forward.1} parent=127 // pred_fallthru
          _
        %p860 = scmp.lt.s32.totalorder %s49, 1
        %s861 = scalar_select %p860, %s49, 1
        %s862 = smul.addr %s861, 2
        %s863 = smul.addr %s862, 8
        %s864 = scalar_lea.vmem %s0, %s863
        %p865 = pneg %p70
        %p866 = pneg %p67
        %p867 = pneg %p91
        %p868 = pneg %p88
        %p869 = pneg %p112
        %p870 = pneg %p109
        %p871 = pneg %p133
        %p872 = pneg %p130
        %p873 = pneg %p154
        %p874 = pneg %p151
        %p875 = pneg %p175
        %p876 = pneg %p172
        %p877 = pneg %p196
        %p878 = pneg %p193
        %p879 = pneg %p217
        %p880 = pneg %p214
        %p881 = pneg %p238
        %p882 = pneg %p235
        %p883 = pneg %p259
        %p884 = pneg %p256
        %p885 = pneg %p280
        %p886 = pneg %p277
        %p887 = pneg %p301
        %p888 = pneg %p298
        %p889 = pneg %p322
        %p890 = pneg %p319
        %p891 = pneg %p343
        %p892 = pneg %p340
        %p893 = pneg %p364
        %p894 = pneg %p361
        %p895 = pneg %p385
        %p896 = pneg %p382
        %p897 = pneg %p406
        %p898 = pneg %p403
        %p899 = pneg %p427
        %p900 = pneg %p424
        %p901 = pneg %p448
        %p902 = pneg %p445
        %p903 = pneg %p469
        %p904 = pneg %p466
        %p905 = pneg %p490
        %p906 = pneg %p487
        %p907 = pneg %p511
        %p908 = pneg %p508
        %p909 = pneg %p532
        %p910 = pneg %p529
        %p911 = pneg %p553
        %p912 = pneg %p550
        %p913 = pneg %p574
        %p914 = pneg %p571
        %p915 = pneg %p595
        %p916 = pneg %p592
        %p917 = pneg %p616
        %p918 = pneg %p613
        %p919 = pneg %p642
        %p920 = pneg %p639
        %s921 = sand.u32 %s629, 1
        %s922 = scalar_lea.sflag [#allocation4], %s921
        %s923 = sand.u32 %s629, 1
        %s924 = scalar_lea.vmem [#allocation11], %s923
        %p925 = pneg %p668
        %p926 = pneg %p665
        %s927 = sand.u32 %s655, 1
        %s928 = scalar_lea.sflag [#allocation13], %s927
        %s929 = sand.u32 %s655, 1
        %s930 = scalar_lea.vmem [#allocation12], %s929
        %p931 = scmp.lt.s32.totalorder %s49, 1
        %s932 = scalar_select %p931, %s49, 1
        %s933 = smul.addr %s932, 2
        %s934 = smul.addr %s933, 8
        %s935 = scalar_lea.vmem %s0, %s934
        %v937 = vld [vmem:[%s935] sm:$0xff]
        %v938 = vld [vmem:[%s935 + $0x8] sm:$0xff]
        %v939 = vpack.c.bf16 %v937, %v937
        %v940 = vpack.c.bf16 %v938, %v938
        %v943 = vunpack.c.l.b16 %v939
        %v944 = vunpack.c.l.b16 %v940
        %v945 = vpack.c.b16 %v944, %v943
        %v947 = vshrl.u32 %v945, 16
        %v949 = vrot.slane %v947, 6
        %v950 = vshll.u32 %v945, 16
        %v952 = vrot.slane %v950, 7
        %v953 = vor.u32 %v949, %v952
        %vm955 = vcmask 1041408
        %vm956 = vsmask.f32 1280
        %vm957 = vmand %vm955, %vm956
        %v958 = vsel %vm957, 0, %v953
        %v959 = vld [vmem:[%s1] sm:$0x3]
        %v960 = vrot.slane %v945, 7
        %vm961 = vcmask 1040384
        %v964 = vsel %vm961, 0, %v960
        %v965 = vld [vmem:[%s1] sm:$0xc]
        %v967 = vunpack.c.l.b16 %v965
        %v968 = vpack.c.b16 %v967, %v967
        %v969 = vrot.slane %v968, 2
        %vm970 = vcmask 31744
        %v971 = vsel %vm970, %v964, 0
        %vm973 = vcmask 1041408
        %v975 = vsel %vm973, %v969, 0
        %977 = vmatpush.bf16.msra.mxu0 0
        %978 = vmatpush.bf16.msra.mxu0 0
        %979 = vmatpush.bf16.msra.mxu0 0
        %980 = vmatpush.bf16.msra.mxu0 0
        %981 = vmatpush.bf16.msra.mxu0 0
        %982 = vmatpush.bf16.msra.mxu0 0
        %983 = vmatpush.bf16.msra.mxu0 0
        %984 = vmatpush.bf16.msra.mxu0 %v975
        %985 = vmatmul.bf16.gmra.mxu0 %v971
        %v986 = vpop.f32.mrf.mxu0
        %v987 = vadd.f32 0.0, %v986
        %v988 = vpop.f32.mrf.mxu0
        %v989 = vadd.f32 0.0, %v988
        %990 = vdwg.mxu0
        %v992 = vsel %vm970, %v958, 0
        %v995 = vsel %vm973, %v959, 0
        %997 = vmatpush.bf16.msra.mxu0 0
        %998 = vmatpush.bf16.msra.mxu0 0
        %999 = vmatpush.bf16.msra.mxu0 0
        %1000 = vmatpush.bf16.msra.mxu0 0
        %1001 = vmatpush.bf16.msra.mxu0 0
        %1002 = vmatpush.bf16.msra.mxu0 0
        %1003 = vmatpush.bf16.msra.mxu0 0
        %1004 = vmatpush.bf16.msra.mxu0 %v995
        %1005 = vmatmul.bf16.gmra.mxu0 %v992
        %v1006 = vpop.f32.mrf.mxu0
        %v1007 = vadd.f32 %v987, %v1006
        %v1008 = vpop.f32.mrf.mxu0
        %v1009 = vadd.f32 %v989, %v1008
        %1010 = vdwg.mxu0
        %v1011 = vrot.slane %v947, 7
        %v1012 = vor.u32 %v1011, %v950
        %vm1014 = vcmask 1040384
        %vm1015 = vsmask.f32 256
        %vm1016 = vmand %vm1014, %vm1015
        %v1017 = vsel %vm1016, 0, %v1012
        %v1018 = vld [vmem:[%s1 + $0x4] sm:$0x3]
        %v1020 = vsel %vm970, %v1017, 0
        %v1023 = vsel %vm973, %v1018, 0
        %1025 = vmatpush.bf16.msra.mxu0 0
        %1026 = vmatpush.bf16.msra.mxu0 0
        %1027 = vmatpush.bf16.msra.mxu0 0
        %1028 = vmatpush.bf16.msra.mxu0 0
        %1029 = vmatpush.bf16.msra.mxu0 0
        %1030 = vmatpush.bf16.msra.mxu0 0
        %1031 = vmatpush.bf16.msra.mxu0 0
        %1032 = vmatpush.bf16.msra.mxu0 %v1023
        %1033 = vmatmul.bf16.gmra.mxu0 %v1020
        %v1034 = vpop.f32.mrf.mxu0
        %v1035 = vadd.f32 0.0, %v1034
        %v1036 = vpop.f32.mrf.mxu0
        %v1037 = vadd.f32 0.0, %v1036
        %1038 = vdwg.mxu0
        %v1039 = vadd.f32 %v1007, %v1035
        %v1040 = vadd.f32 %v1009, %v1037
        %v1041 = vld [vmem:[%s1 + $0x4] sm:$0xc]
        %v1043 = vunpack.c.l.b16 %v1041
        %v1044 = vpack.c.b16 %v1043, %v1043
        %v1045 = vrot.slane %v1044, 2
        %v1046 = vsel %vm970, %v945, 0
        %v1049 = vsel %vm973, %v1045, 0
        %1051 = vmatpush.bf16.msra.mxu0 0
        %1052 = vmatpush.bf16.msra.mxu0 0
        %1053 = vmatpush.bf16.msra.mxu0 0
        %1054 = vmatpush.bf16.msra.mxu0 0
        %1055 = vmatpush.bf16.msra.mxu0 0
        %1056 = vmatpush.bf16.msra.mxu0 0
        %1057 = vmatpush.bf16.msra.mxu0 0
        %1058 = vmatpush.bf16.msra.mxu0 %v1049
        %1059 = vmatmul.bf16.gmra.mxu0 %v1046
        %v1060 = vpop.f32.mrf.mxu0
        %v1061 = vadd.f32 0.0, %v1060
        %v1062 = vpop.f32.mrf.mxu0
        %v1063 = vadd.f32 0.0, %v1062
        %1064 = vdwg.mxu0
        %v1065 = vadd.f32 %v1039, %v1061
        %v1066 = vadd.f32 %v1040, %v1063
        %v1067 = vrot.slane %v950, 1
        %v1068 = vor.u32 %v947, %v1067
        %vm1070 = vcmask 1047552
        %vm1071 = vsmask.f32 7424
        %vm1072 = vmand %vm1070, %vm1071
        %v1073 = vsel %vm1072, %v1068, 0
        %v1074 = vld [vmem:[%s1 + $0x8] sm:$0x3]
        %v1076 = vsel %vm970, %v1073, 0
        %v1079 = vsel %vm973, %v1074, 0
        %1081 = vmatpush.bf16.msra.mxu0 0
        %1082 = vmatpush.bf16.msra.mxu0 0
        %1083 = vmatpush.bf16.msra.mxu0 0
        %1084 = vmatpush.bf16.msra.mxu0 0
        %1085 = vmatpush.bf16.msra.mxu0 0
        %1086 = vmatpush.bf16.msra.mxu0 0
        %1087 = vmatpush.bf16.msra.mxu0 0
        %1088 = vmatpush.bf16.msra.mxu0 %v1079
        %1089 = vmatmul.bf16.gmra.mxu0 %v1076
        %v1090 = vpop.f32.mrf.mxu0
        %v1091 = vadd.f32 0.0, %v1090
        %v1092 = vpop.f32.mrf.mxu0
        %v1093 = vadd.f32 0.0, %v1092
        %1094 = vdwg.mxu0
        %v1095 = vadd.f32 %v1065, %v1091
        %v1096 = vadd.f32 %v1066, %v1093
        %v1097 = vrot.slane %v945, 1
        %vm1098 = vcmask 1046528
        %v1100 = vsel %vm1098, %v1097, 0
        %v1101 = vld [vmem:[%s1 + $0x8] sm:$0xc]
        %v1103 = vunpack.c.l.b16 %v1101
        %v1104 = vpack.c.b16 %v1103, %v1103
        %v1105 = vrot.slane %v1104, 2
        %v1106 = vsel %vm970, %v1100, 0
        %v1109 = vsel %vm973, %v1105, 0
        %1111 = vmatpush.bf16.msra.mxu0 0
        %1112 = vmatpush.bf16.msra.mxu0 0
        %1113 = vmatpush.bf16.msra.mxu0 0
        %1114 = vmatpush.bf16.msra.mxu0 0
        %1115 = vmatpush.bf16.msra.mxu0 0
        %1116 = vmatpush.bf16.msra.mxu0 0
        %1117 = vmatpush.bf16.msra.mxu0 0
        %1118 = vmatpush.bf16.msra.mxu0 %v1109
        %1119 = vmatmul.bf16.gmra.mxu0 %v1106
        %v1120 = vpop.f32.mrf.mxu0
        %v1121 = vadd.f32 0.0, %v1120
        %v1122 = vpop.f32.mrf.mxu0
        %v1123 = vadd.f32 0.0, %v1122
        %1124 = vdwg.mxu0
        %v1125 = vadd.f32 %v1095, %v1121
        %v1126 = vadd.f32 %v1096, %v1123
        %v1127 = vrot.slane %v947, 1
        %v1128 = vrot.slane %v950, 2
        %v1129 = vor.u32 %v1127, %v1128
        %vm1131 = vcmask 1046528
        %vm1132 = vsmask.f32 6400
        %vm1133 = vmand %vm1131, %vm1132
        %v1134 = vsel %vm1133, %v1129, 0
        %v1135 = vld [vmem:[%s1 + $0xc] sm:$0x3]
        %v1137 = vsel %vm970, %v1134, 0
        %v1140 = vsel %vm973, %v1135, 0
        %1142 = vmatpush.bf16.msra.mxu0 0
        %1143 = vmatpush.bf16.msra.mxu0 0
        %1144 = vmatpush.bf16.msra.mxu0 0
        %1145 = vmatpush.bf16.msra.mxu0 0
        %1146 = vmatpush.bf16.msra.mxu0 0
        %1147 = vmatpush.bf16.msra.mxu0 0
        %1148 = vmatpush.bf16.msra.mxu0 0
        %1149 = vmatpush.bf16.msra.mxu0 %v1140
        %1150 = vmatmul.bf16.gmra.mxu0 %v1137
        %v1151 = vpop.f32.mrf.mxu0
        %v1152 = vadd.f32 0.0, %v1151
        %v1153 = vpop.f32.mrf.mxu0
        %v1154 = vadd.f32 0.0, %v1153
        %1155 = vdwg.mxu0
        %v1156 = vadd.f32 %v1125, %v1152
        %v1157 = vadd.f32 %v1126, %v1154
        %v1158 = vld [vmem:[%s2] sm:$0x1]
        %v1160 = vperm.slane %v1158, 0
        %v1162 = vadd.f32 %v1156, %v1160
        %v1163 = vadd.f32 %v1157, %v1160
        %v1164 = vmax.f32 %v1162, 0.0
        %v1165 = vmax.f32 %v1163, 0.0
        %v1166 = vpack.c.bf16 %v1164, %v1164
        %v1167 = vpack.c.bf16 %v1165, %v1165
        %v1170 = vunpack.c.l.b16 %v1166
        %v1171 = vunpack.c.l.b16 %v1167
        %v1172 = vpack.c.b16 %v1171, %v1170
        %v1173 = vrot.slane %v1172, 7
        %v1175 = vsel %vm961, 0, %v1173
        %v1177 = vshrl.u32 %v1172, 16
        %v1179 = vrot.slane %v1177, 7
        %v1180 = vshll.u32 %v1172, 16
        %v1182 = vor.u32 %v1179, %v1180
        %v1184 = vsel %vm1016, 0, %v1182
        %v1185 = vrot.slane %v1180, 1
        %v1186 = vor.u32 %v1177, %v1185
        %v1188 = vsel %vm1072, %v1186, 0
        %1190 = vrot.lane.b32.xlu0 %v1184, 64
        %v1191 = vpop.permute.xlu0 %1190
        %1193 = vrot.lane.b32.xlu0 %v1188, 64
        %v1194 = vpop.permute.xlu0 %1193
        %vm1195 = vcmask 523264
        %v1197 = vsel %vm1195, %v1175, %v1191
        %v1200 = vsel %vm1195, %v1172, %v1194
        %v1202 = vld [vmem:[%s3] sm:$0xf]
        %v1203 = vld [vmem:[%s3 + $0x4] sm:$0xf]
        %v1204 = vld [vmem:[%s3 + $0x8] sm:$0xf]
        %v1205 = vld [vmem:[%s3 + $0xc] sm:$0xf]
        %v1206 = vld [vmem:[%s3 + $0x10] sm:$0xf]
        %v1207 = vld [vmem:[%s3 + $0x14] sm:$0xf]
        %v1208 = vld [vmem:[%s3 + $0x18] sm:$0xf]
        %v1209 = vld [vmem:[%s3 + $0x1c] sm:$0xf]
        %v1210 = vld [vmem:[%s3 + $0x20] sm:$0xf]
        %v1211 = vld [vmem:[%s3 + $0x24] sm:$0xf]
        %v1212 = vld [vmem:[%s3 + $0x28] sm:$0xf]
        %v1213 = vld [vmem:[%s3 + $0x2c] sm:$0xf]
        %v1214 = vld [vmem:[%s3 + $0x30] sm:$0xf]
        %v1215 = vld [vmem:[%s3 + $0x34] sm:$0xf]
        %v1216 = vld [vmem:[%s3 + $0x38] sm:$0xf]
        %v1217 = vld [vmem:[%s3 + $0x3c] sm:$0xf]
        %v1218 = vld [vmem:[%s3 + $0x40] sm:$0xf]
        %v1219 = vld [vmem:[%s3 + $0x44] sm:$0xf]
        %v1220 = vld [vmem:[%s3 + $0x48] sm:$0xf]
        %v1221 = vld [vmem:[%s3 + $0x4c] sm:$0xf]
        %v1222 = vld [vmem:[%s3 + $0x50] sm:$0xf]
        %v1223 = vld [vmem:[%s3 + $0x54] sm:$0xf]
        %v1224 = vld [vmem:[%s3 + $0x58] sm:$0xf]
        %v1225 = vld [vmem:[%s3 + $0x5c] sm:$0xf]
        %v1226 = vld [vmem:[%s3 + $0x60] sm:$0xf]
        %v1227 = vld [vmem:[%s3 + $0x64] sm:$0xf]
        %v1228 = vld [vmem:[%s3 + $0x68] sm:$0xf]
        %v1229 = vld [vmem:[%s3 + $0x6c] sm:$0xf]
        %v1230 = vld [vmem:[%s3 + $0x70] sm:$0xf]
        %v1231 = vld [vmem:[%s3 + $0x74] sm:$0xf]
        %v1232 = vld [vmem:[%s3 + $0x78] sm:$0xf]
        %v1233 = vld [vmem:[%s3 + $0x7c] sm:$0xf]
        %v1234 = vrot.slane %v1172, 1
        %v1236 = vsel %vm1098, %v1234, 0
        %v1237 = vld [vmem:[%s3 + $0x80] sm:$0xf]
        %v1238 = vld [vmem:[%s3 + $0x84] sm:$0xf]
        %v1239 = vld [vmem:[%s3 + $0x88] sm:$0xf]
        %v1240 = vld [vmem:[%s3 + $0x8c] sm:$0xf]
        %v1241 = vld [vmem:[%s3 + $0x90] sm:$0xf]
        %v1242 = vld [vmem:[%s3 + $0x94] sm:$0xf]
        %v1243 = vld [vmem:[%s3 + $0x98] sm:$0xf]
        %v1244 = vld [vmem:[%s3 + $0x9c] sm:$0xf]
        %v1253 = vunpack.c.l.b16 %v1237
        %v1254 = vunpack.c.l.b16 %v1238
        %v1255 = vunpack.c.l.b16 %v1239
        %v1256 = vunpack.c.l.b16 %v1240
        %v1257 = vunpack.c.l.b16 %v1241
        %v1258 = vunpack.c.l.b16 %v1242
        %v1259 = vunpack.c.l.b16 %v1243
        %v1260 = vunpack.c.l.b16 %v1244
        %v1261 = vpack.c.b16 %v1254, %v1253
        %v1262 = vpack.c.b16 %v1256, %v1255
        %v1263 = vpack.c.b16 %v1258, %v1257
        %v1264 = vpack.c.b16 %v1260, %v1259
        %v1269 = vsel %vm1195, %v1236, 0
        %1271 = vmatpush.bf16.msra.mxu0 0
        %1272 = vmatpush.bf16.msra.mxu0 0
        %1273 = vmatpush.bf16.msra.mxu0 0
        %1274 = vmatpush.bf16.msra.mxu0 0
        %1275 = vmatpush.bf16.msra.mxu0 %v1264
        %1276 = vmatpush.bf16.msra.mxu0 %v1263
        %1277 = vmatpush.bf16.msra.mxu0 %v1262
        %1278 = vmatpush.bf16.msra.mxu0 %v1261
        %1279 = vmatmul.bf16.gmra.mxu0 %v1269
        %v1280 = vpop.f32.mrf.mxu0
        %v1281 = vadd.f32 0.0, %v1280
        %v1282 = vpop.f32.mrf.mxu0
        %v1283 = vadd.f32 0.0, %v1282
        %1284 = vdwg.mxu0
        %v1317 = vunpack.c.l.b16 %v1202
        %v1318 = vunpack.c.l.b16 %v1203
        %v1319 = vunpack.c.l.b16 %v1204
        %v1320 = vunpack.c.l.b16 %v1205
        %v1321 = vunpack.c.l.b16 %v1206
        %v1322 = vunpack.c.l.b16 %v1207
        %v1323 = vunpack.c.l.b16 %v1208
        %v1324 = vunpack.c.l.b16 %v1209
        %v1325 = vunpack.c.l.b16 %v1210
        %v1326 = vunpack.c.l.b16 %v1211
        %v1327 = vunpack.c.l.b16 %v1212
        %v1328 = vunpack.c.l.b16 %v1213
        %v1329 = vunpack.c.l.b16 %v1214
        %v1330 = vunpack.c.l.b16 %v1215
        %v1331 = vunpack.c.l.b16 %v1216
        %v1332 = vunpack.c.l.b16 %v1217
        %v1333 = vunpack.c.l.b16 %v1218
        %v1334 = vunpack.c.l.b16 %v1219
        %v1335 = vunpack.c.l.b16 %v1220
        %v1336 = vunpack.c.l.b16 %v1221
        %v1337 = vunpack.c.l.b16 %v1222
        %v1338 = vunpack.c.l.b16 %v1223
        %v1339 = vunpack.c.l.b16 %v1224
        %v1340 = vunpack.c.l.b16 %v1225
        %v1341 = vunpack.c.l.b16 %v1226
        %v1342 = vunpack.c.l.b16 %v1227
        %v1343 = vunpack.c.l.b16 %v1228
        %v1344 = vunpack.c.l.b16 %v1229
        %v1345 = vunpack.c.l.b16 %v1230
        %v1346 = vunpack.c.l.b16 %v1231
        %v1347 = vunpack.c.l.b16 %v1232
        %v1348 = vunpack.c.l.b16 %v1233
        %v1349 = vpack.c.b16 %v1318, %v1317
        %v1350 = vpack.c.b16 %v1320, %v1319
        %v1351 = vpack.c.b16 %v1322, %v1321
        %v1352 = vpack.c.b16 %v1324, %v1323
        %v1353 = vpack.c.b16 %v1326, %v1325
        %v1354 = vpack.c.b16 %v1328, %v1327
        %v1355 = vpack.c.b16 %v1330, %v1329
        %v1356 = vpack.c.b16 %v1332, %v1331
        %v1357 = vpack.c.b16 %v1334, %v1333
        %v1358 = vpack.c.b16 %v1336, %v1335
        %v1359 = vpack.c.b16 %v1338, %v1337
        %v1360 = vpack.c.b16 %v1340, %v1339
        %v1361 = vpack.c.b16 %v1342, %v1341
        %v1362 = vpack.c.b16 %v1344, %v1343
        %v1363 = vpack.c.b16 %v1346, %v1345
        %v1364 = vpack.c.b16 %v1348, %v1347
        %1381 = vmatpush.bf16.msra.mxu0 %v1356
        %1382 = vmatpush.bf16.msra.mxu0 %v1355
        %1383 = vmatpush.bf16.msra.mxu0 %v1354
        %1384 = vmatpush.bf16.msra.mxu0 %v1353
        %1385 = vmatpush.bf16.msra.mxu0 %v1352
        %1386 = vmatpush.bf16.msra.mxu0 %v1351
        %1387 = vmatpush.bf16.msra.mxu0 %v1350
        %1388 = vmatpush.bf16.msra.mxu0 %v1349
        %1389 = vmatmul.bf16.gmra.mxu0 %v1197
        %v1390 = vpop.f32.mrf.mxu0
        %v1391 = vadd.f32 %v1281, %v1390
        %v1392 = vpop.f32.mrf.mxu0
        %v1393 = vadd.f32 %v1283, %v1392
        %1394 = vdwg.mxu0
        %1395 = vmatpush.bf16.msra.mxu0 %v1364
        %1396 = vmatpush.bf16.msra.mxu0 %v1363
        %1397 = vmatpush.bf16.msra.mxu0 %v1362
        %1398 = vmatpush.bf16.msra.mxu0 %v1361
        %1399 = vmatpush.bf16.msra.mxu0 %v1360
        %1400 = vmatpush.bf16.msra.mxu0 %v1359
        %1401 = vmatpush.bf16.msra.mxu0 %v1358
        %1402 = vmatpush.bf16.msra.mxu0 %v1357
        %1403 = vmatmul.bf16.gmra.mxu0 %v1200
        %v1404 = vpop.f32.mrf.mxu0
        %v1405 = vadd.f32 %v1391, %v1404
        %v1406 = vpop.f32.mrf.mxu0
        %v1407 = vadd.f32 %v1393, %v1406
        %1408 = vdwg.mxu0
        %v1409 = vld [vmem:[%s4] sm:$0x1]
        %v1411 = vperm.slane %v1409, 0
        %v1413 = vadd.f32 %v1405, %v1411
        %v1414 = vadd.f32 %v1407, %v1411
        %v1415 = vmax.f32 %v1413, 0.0
        %v1416 = vmax.f32 %v1414, 0.0
        %v1417 = vpack.c.bf16 %v1415, %v1415
        %v1418 = vpack.c.bf16 %v1416, %v1416
        %v1421 = vunpack.c.l.b16 %v1417
        %v1422 = vunpack.c.l.b16 %v1418
        %v1423 = vpack.c.b16 %v1422, %v1421
        %v1425 = vshrl.u32 %v1423, 16
        %v1427 = vrot.slane %v1425, 7
        %v1428 = vshll.u32 %v1423, 16
        %v1430 = vor.u32 %v1427, %v1428
        %v1432 = vsel %vm1016, 0, %v1430
        %v1433 = vrot.slane %v1428, 1
        %v1434 = vor.u32 %v1425, %v1433
        %v1436 = vsel %vm1072, %v1434, 0
        %1437 = vrot.lane.b32.xlu0 %v1423, 64
        %v1438 = vpop.permute.xlu0 %1437
        %v1441 = vsel %vm1195, %v1432, %v1438
        %v1443 = vld [vmem:[%s5] sm:$0xf]
        %v1444 = vld [vmem:[%s5 + $0x4] sm:$0xf]
        %v1445 = vld [vmem:[%s5 + $0x8] sm:$0xf]
        %v1446 = vld [vmem:[%s5 + $0xc] sm:$0xf]
        %v1447 = vld [vmem:[%s5 + $0x10] sm:$0xf]
        %v1448 = vld [vmem:[%s5 + $0x14] sm:$0xf]
        %v1449 = vld [vmem:[%s5 + $0x18] sm:$0xf]
        %v1450 = vld [vmem:[%s5 + $0x1c] sm:$0xf]
        %v1451 = vld [vmem:[%s5 + $0x20] sm:$0xf]
        %v1452 = vld [vmem:[%s5 + $0x24] sm:$0xf]
        %v1453 = vld [vmem:[%s5 + $0x28] sm:$0xf]
        %v1454 = vld [vmem:[%s5 + $0x2c] sm:$0xf]
        %v1455 = vld [vmem:[%s5 + $0x30] sm:$0xf]
        %v1456 = vld [vmem:[%s5 + $0x34] sm:$0xf]
        %v1457 = vld [vmem:[%s5 + $0x38] sm:$0xf]
        %v1458 = vld [vmem:[%s5 + $0x3c] sm:$0xf]
        %v1459 = vld [vmem:[%s5 + $0x40] sm:$0xf]
        %v1460 = vld [vmem:[%s5 + $0x44] sm:$0xf]
        %v1461 = vld [vmem:[%s5 + $0x48] sm:$0xf]
        %v1462 = vld [vmem:[%s5 + $0x4c] sm:$0xf]
        %v1463 = vld [vmem:[%s5 + $0x50] sm:$0xf]
        %v1464 = vld [vmem:[%s5 + $0x54] sm:$0xf]
        %v1465 = vld [vmem:[%s5 + $0x58] sm:$0xf]
        %v1466 = vld [vmem:[%s5 + $0x5c] sm:$0xf]
        %v1467 = vld [vmem:[%s6] sm:$0x1]
        %v1469 = vperm.slane %v1467, 0
        %v1495 = vunpack.c.l.b16 %v1443
        %v1496 = vunpack.c.l.b16 %v1444
        %v1497 = vunpack.c.l.b16 %v1445
        %v1498 = vunpack.c.l.b16 %v1446
        %v1499 = vunpack.c.l.b16 %v1447
        %v1500 = vunpack.c.l.b16 %v1448
        %v1501 = vunpack.c.l.b16 %v1449
        %v1502 = vunpack.c.l.b16 %v1450
        %v1503 = vunpack.c.l.b16 %v1451
        %v1504 = vunpack.c.l.b16 %v1452
        %v1505 = vunpack.c.l.b16 %v1453
        %v1506 = vunpack.c.l.b16 %v1454
        %v1507 = vunpack.c.l.b16 %v1455
        %v1508 = vunpack.c.l.b16 %v1456
        %v1509 = vunpack.c.l.b16 %v1457
        %v1510 = vunpack.c.l.b16 %v1458
        %v1511 = vunpack.c.l.b16 %v1459
        %v1512 = vunpack.c.l.b16 %v1460
        %v1513 = vunpack.c.l.b16 %v1461
        %v1514 = vunpack.c.l.b16 %v1462
        %v1515 = vunpack.c.l.b16 %v1463
        %v1516 = vunpack.c.l.b16 %v1464
        %v1517 = vunpack.c.l.b16 %v1465
        %v1518 = vunpack.c.l.b16 %v1466
        %v1519 = vpack.c.b16 %v1496, %v1495
        %v1520 = vpack.c.b16 %v1498, %v1497
        %v1521 = vpack.c.b16 %v1500, %v1499
        %v1522 = vpack.c.b16 %v1502, %v1501
        %v1523 = vpack.c.b16 %v1504, %v1503
        %v1524 = vpack.c.b16 %v1506, %v1505
        %v1525 = vpack.c.b16 %v1508, %v1507
        %v1526 = vpack.c.b16 %v1510, %v1509
        %v1527 = vpack.c.b16 %v1512, %v1511
        %v1528 = vpack.c.b16 %v1514, %v1513
        %v1529 = vpack.c.b16 %v1516, %v1515
        %v1530 = vpack.c.b16 %v1518, %v1517
        %v1544 = vsel %vm1195, %v1436, 0
        %1546 = vmatpush.bf16.msra.mxu0 %v1526
        %1547 = vmatpush.bf16.msra.mxu0 %v1525
        %1548 = vmatpush.bf16.msra.mxu0 %v1524
        %1549 = vmatpush.bf16.msra.mxu0 %v1523
        %1550 = vmatpush.bf16.msra.mxu0 %v1522
        %1551 = vmatpush.bf16.msra.mxu0 %v1521
        %1552 = vmatpush.bf16.msra.mxu0 %v1520
        %1553 = vmatpush.bf16.msra.mxu0 %v1519
        %1554 = vmatmul.bf16.gmra.mxu0 %v1441
        %v1555 = vpop.f32.mrf.mxu0
        %v1556 = vadd.f32 %v1469, %v1555
        %v1557 = vpop.f32.mrf.mxu0
        %v1558 = vadd.f32 %v1469, %v1557
        %1559 = vdwg.mxu0
        %1560 = vmatpush.bf16.msra.mxu0 0
        %1561 = vmatpush.bf16.msra.mxu0 0
        %1562 = vmatpush.bf16.msra.mxu0 0
        %1563 = vmatpush.bf16.msra.mxu0 0
        %1564 = vmatpush.bf16.msra.mxu0 %v1530
        %1565 = vmatpush.bf16.msra.mxu0 %v1529
        %1566 = vmatpush.bf16.msra.mxu0 %v1528
        %1567 = vmatpush.bf16.msra.mxu0 %v1527
        %1568 = vmatmul.bf16.gmra.mxu0 %v1544
        %v1569 = vpop.f32.mrf.mxu0
        %v1570 = vadd.f32 %v1556, %v1569
        %v1571 = vpop.f32.mrf.mxu0
        %v1572 = vadd.f32 %v1558, %v1571
        %1573 = vdwg.mxu0
        %v1574 = vld [vmem:[%s7] sm:$0x3]
        %v1575 = vld [vmem:[%s8] sm:$0x1]
        %v1577 = vperm.slane %v1575, 0
        %v1580 = vsel %vm973, %v1574, 0
        %1582 = vmatpush.bf16.msra.mxu0 0
        %1583 = vmatpush.bf16.msra.mxu0 0
        %1584 = vmatpush.bf16.msra.mxu0 0
        %1585 = vmatpush.bf16.msra.mxu0 0
        %1586 = vmatpush.bf16.msra.mxu0 0
        %1587 = vmatpush.bf16.msra.mxu0 0
        %1588 = vmatpush.bf16.msra.mxu0 0
        %1589 = vmatpush.bf16.msra.mxu0 %v1580
        %1590 = vmatmul.bf16.gmra.mxu0 %v1046
        %v1591 = vpop.f32.mrf.mxu0
        %v1592 = vadd.f32 %v1577, %v1591
        %v1593 = vpop.f32.mrf.mxu0
        %v1594 = vadd.f32 %v1577, %v1593
        %1595 = vdwg.mxu0
        %v1596 = vadd.f32 %v1570, %v1592
        %v1597 = vadd.f32 %v1572, %v1594
        %v1598 = vmax.f32 %v1596, 0.0
        %v1599 = vmax.f32 %v1597, 0.0
        %v1600 = vpack.c.bf16 %v1598, %v1598
        %v1601 = vpack.c.bf16 %v1599, %v1599
        %v1604 = vunpack.c.l.b16 %v1600
        %v1605 = vunpack.c.l.b16 %v1601
        %v1606 = vpack.c.b16 %v1605, %v1604
        %v1608 = vshrl.u32 %v1606, 16
        %v1610 = vrot.slane %v1608, 6
        %v1611 = vshll.u32 %v1606, 16
        %v1613 = vrot.slane %v1611, 7
        %v1614 = vor.u32 %v1610, %v1613
        %v1616 = vsel %vm957, 0, %v1614
        %v1617 = vrot.slane %v1606, 7
        %v1619 = vsel %vm961, 0, %v1617
        %v1620 = vrot.slane %v1608, 7
        %v1621 = vor.u32 %v1620, %v1611
        %v1623 = vsel %vm1016, 0, %v1621
        %1625 = vrot.lane.b32.xlu0 %v1619, 64
        %v1626 = vpop.permute.xlu0 %1625
        %1627 = vrot.lane.b32.xlu0 %v1606, 64
        %v1628 = vpop.permute.xlu0 %1627
        %v1631 = vsel %vm1195, %v1616, %v1626
        %v1635 = vsel %vm1195, %v1623, %v1628
        %v1637 = vld [vmem:[#allocation2] sm:$0xf]
        %v1638 = vld [vmem:[#allocation2 + $0x4] sm:$0xf]
        %v1639 = vld [vmem:[#allocation2 + $0x8] sm:$0xf]
        %v1640 = vld [vmem:[#allocation2 + $0xc] sm:$0xf]
        %v1641 = vld [vmem:[#allocation2 + $0x10] sm:$0xf]
        %v1642 = vld [vmem:[#allocation2 + $0x14] sm:$0xf]
        %v1643 = vld [vmem:[#allocation2 + $0x18] sm:$0xf]
        %v1644 = vld [vmem:[#allocation2 + $0x1c] sm:$0xf]
        %v1645 = vld [vmem:[#allocation2 + $0x20] sm:$0xf]
        %v1646 = vld [vmem:[#allocation2 + $0x24] sm:$0xf]
        %v1647 = vld [vmem:[#allocation2 + $0x28] sm:$0xf]
        %v1648 = vld [vmem:[#allocation2 + $0x2c] sm:$0xf]
        %v1649 = vld [vmem:[#allocation2 + $0x30] sm:$0xf]
        %v1650 = vld [vmem:[#allocation2 + $0x34] sm:$0xf]
        %v1651 = vld [vmem:[#allocation2 + $0x38] sm:$0xf]
        %v1652 = vld [vmem:[#allocation2 + $0x3c] sm:$0xf]
        %v1653 = vld [vmem:[#allocation2 + $0x40] sm:$0xf]
        %v1654 = vld [vmem:[#allocation2 + $0x44] sm:$0xf]
        %v1655 = vld [vmem:[#allocation2 + $0x48] sm:$0xf]
        %v1656 = vld [vmem:[#allocation2 + $0x4c] sm:$0xf]
        %v1657 = vld [vmem:[#allocation2 + $0x50] sm:$0xf]
        %v1658 = vld [vmem:[#allocation2 + $0x54] sm:$0xf]
        %v1659 = vld [vmem:[#allocation2 + $0x58] sm:$0xf]
        %v1660 = vld [vmem:[#allocation2 + $0x5c] sm:$0xf]
        %v1661 = vld [vmem:[#allocation2 + $0x60] sm:$0xf]
        %v1662 = vld [vmem:[#allocation2 + $0x64] sm:$0xf]
        %v1663 = vld [vmem:[#allocation2 + $0x68] sm:$0xf]
        %v1664 = vld [vmem:[#allocation2 + $0x6c] sm:$0xf]
        %v1665 = vld [vmem:[#allocation2 + $0x70] sm:$0xf]
        %v1666 = vld [vmem:[#allocation2 + $0x74] sm:$0xf]
        %v1667 = vld [vmem:[#allocation2 + $0x78] sm:$0xf]
        %v1668 = vld [vmem:[#allocation2 + $0x7c] sm:$0xf]
        %v1669 = vrot.slane %v1611, 1
        %v1670 = vor.u32 %v1608, %v1669
        %v1672 = vsel %vm1072, %v1670, 0
        %v1673 = vrot.slane %v1606, 1
        %v1675 = vsel %vm1098, %v1673, 0
        %v1676 = vrot.slane %v1608, 1
        %v1677 = vrot.slane %v1611, 2
        %v1678 = vor.u32 %v1676, %v1677
        %v1680 = vsel %vm1133, %v1678, 0
        %1682 = vrot.lane.b32.xlu0 %v1675, 64
        %v1683 = vpop.permute.xlu0 %1682
        %v1686 = vsel %vm1195, %v1672, %v1683
        %v1688 = vld [vmem:[#allocation2 + $0x80] sm:$0xf]
        %v1689 = vld [vmem:[#allocation2 + $0x84] sm:$0xf]
        %v1690 = vld [vmem:[#allocation2 + $0x88] sm:$0xf]
        %v1691 = vld [vmem:[#allocation2 + $0x8c] sm:$0xf]
        %v1692 = vld [vmem:[#allocation2 + $0x90] sm:$0xf]
        %v1693 = vld [vmem:[#allocation2 + $0x94] sm:$0xf]
        %v1694 = vld [vmem:[#allocation2 + $0x98] sm:$0xf]
        %v1695 = vld [vmem:[#allocation2 + $0x9c] sm:$0xf]
        %v1696 = vld [vmem:[#allocation2 + $0xa0] sm:$0xf]
        %v1697 = vld [vmem:[#allocation2 + $0xa4] sm:$0xf]
        %v1698 = vld [vmem:[#allocation2 + $0xa8] sm:$0xf]
        %v1699 = vld [vmem:[#allocation2 + $0xac] sm:$0xf]
        %v1700 = vld [vmem:[#allocation2 + $0xb0] sm:$0xf]
        %v1701 = vld [vmem:[#allocation2 + $0xb4] sm:$0xf]
        %v1702 = vld [vmem:[#allocation2 + $0xb8] sm:$0xf]
        %v1703 = vld [vmem:[#allocation2 + $0xbc] sm:$0xf]
        %v1704 = vld [vmem:[#allocation2 + $0xc0] sm:$0xf]
        %v1705 = vld [vmem:[#allocation2 + $0xc4] sm:$0xf]
        %v1706 = vld [vmem:[#allocation2 + $0xc8] sm:$0xf]
        %v1707 = vld [vmem:[#allocation2 + $0xcc] sm:$0xf]
        %v1708 = vld [vmem:[#allocation2 + $0xd0] sm:$0xf]
        %v1709 = vld [vmem:[#allocation2 + $0xd4] sm:$0xf]
        %v1710 = vld [vmem:[#allocation2 + $0xd8] sm:$0xf]
        %v1711 = vld [vmem:[#allocation2 + $0xdc] sm:$0xf]
        %v1736 = vunpack.c.l.b16 %v1688
        %v1737 = vunpack.c.l.b16 %v1689
        %v1738 = vunpack.c.l.b16 %v1690
        %v1739 = vunpack.c.l.b16 %v1691
        %v1740 = vunpack.c.l.b16 %v1692
        %v1741 = vunpack.c.l.b16 %v1693
        %v1742 = vunpack.c.l.b16 %v1694
        %v1743 = vunpack.c.l.b16 %v1695
        %v1744 = vunpack.c.l.b16 %v1696
        %v1745 = vunpack.c.l.b16 %v1697
        %v1746 = vunpack.c.l.b16 %v1698
        %v1747 = vunpack.c.l.b16 %v1699
        %v1748 = vunpack.c.l.b16 %v1700
        %v1749 = vunpack.c.l.b16 %v1701
        %v1750 = vunpack.c.l.b16 %v1702
        %v1751 = vunpack.c.l.b16 %v1703
        %v1752 = vunpack.c.l.b16 %v1704
        %v1753 = vunpack.c.l.b16 %v1705
        %v1754 = vunpack.c.l.b16 %v1706
        %v1755 = vunpack.c.l.b16 %v1707
        %v1756 = vunpack.c.l.b16 %v1708
        %v1757 = vunpack.c.l.b16 %v1709
        %v1758 = vunpack.c.l.b16 %v1710
        %v1759 = vunpack.c.l.b16 %v1711
        %v1760 = vpack.c.b16 %v1737, %v1736
        %v1761 = vpack.c.b16 %v1739, %v1738
        %v1762 = vpack.c.b16 %v1741, %v1740
        %v1763 = vpack.c.b16 %v1743, %v1742
        %v1764 = vpack.c.b16 %v1745, %v1744
        %v1765 = vpack.c.b16 %v1747, %v1746
        %v1766 = vpack.c.b16 %v1749, %v1748
        %v1767 = vpack.c.b16 %v1751, %v1750
        %v1768 = vpack.c.b16 %v1753, %v1752
        %v1769 = vpack.c.b16 %v1755, %v1754
        %v1770 = vpack.c.b16 %v1757, %v1756
        %v1771 = vpack.c.b16 %v1759, %v1758
        %v1785 = vsel %vm1195, %v1680, 0
        %1787 = vmatpush.bf16.msra.mxu0 %v1767
        %1788 = vmatpush.bf16.msra.mxu0 %v1766
        %1789 = vmatpush.bf16.msra.mxu0 %v1765
        %1790 = vmatpush.bf16.msra.mxu0 %v1764
        %1791 = vmatpush.bf16.msra.mxu0 %v1763
        %1792 = vmatpush.bf16.msra.mxu0 %v1762
        %1793 = vmatpush.bf16.msra.mxu0 %v1761
        %1794 = vmatpush.bf16.msra.mxu0 %v1760
        %1795 = vmatmul.bf16.gmra.mxu0 %v1686
        %v1796 = vpop.f32.mrf.mxu0
        %v1797 = vadd.f32 0.0, %v1796
        %v1798 = vpop.f32.mrf.mxu0
        %v1799 = vadd.f32 0.0, %v1798
        %1800 = vdwg.mxu0
        %1801 = vmatpush.bf16.msra.mxu0 0
        %1802 = vmatpush.bf16.msra.mxu0 0
        %1803 = vmatpush.bf16.msra.mxu0 0
        %1804 = vmatpush.bf16.msra.mxu0 0
        %1805 = vmatpush.bf16.msra.mxu0 %v1771
        %1806 = vmatpush.bf16.msra.mxu0 %v1770
        %1807 = vmatpush.bf16.msra.mxu0 %v1769
        %1808 = vmatpush.bf16.msra.mxu0 %v1768
        %1809 = vmatmul.bf16.gmra.mxu0 %v1785
        %v1810 = vpop.f32.mrf.mxu0
        %v1811 = vadd.f32 %v1797, %v1810
        %v1812 = vpop.f32.mrf.mxu0
        %v1813 = vadd.f32 %v1799, %v1812
        %1814 = vdwg.mxu0
        %v1847 = vunpack.c.l.b16 %v1637
        %v1848 = vunpack.c.l.b16 %v1638
        %v1849 = vunpack.c.l.b16 %v1639
        %v1850 = vunpack.c.l.b16 %v1640
        %v1851 = vunpack.c.l.b16 %v1641
        %v1852 = vunpack.c.l.b16 %v1642
        %v1853 = vunpack.c.l.b16 %v1643
        %v1854 = vunpack.c.l.b16 %v1644
        %v1855 = vunpack.c.l.b16 %v1645
        %v1856 = vunpack.c.l.b16 %v1646
        %v1857 = vunpack.c.l.b16 %v1647
        %v1858 = vunpack.c.l.b16 %v1648
        %v1859 = vunpack.c.l.b16 %v1649
        %v1860 = vunpack.c.l.b16 %v1650
        %v1861 = vunpack.c.l.b16 %v1651
        %v1862 = vunpack.c.l.b16 %v1652
        %v1863 = vunpack.c.l.b16 %v1653
        %v1864 = vunpack.c.l.b16 %v1654
        %v1865 = vunpack.c.l.b16 %v1655
        %v1866 = vunpack.c.l.b16 %v1656
        %v1867 = vunpack.c.l.b16 %v1657
        %v1868 = vunpack.c.l.b16 %v1658
        %v1869 = vunpack.c.l.b16 %v1659
        %v1870 = vunpack.c.l.b16 %v1660
        %v1871 = vunpack.c.l.b16 %v1661
        %v1872 = vunpack.c.l.b16 %v1662
        %v1873 = vunpack.c.l.b16 %v1663
        %v1874 = vunpack.c.l.b16 %v1664
        %v1875 = vunpack.c.l.b16 %v1665
        %v1876 = vunpack.c.l.b16 %v1666
        %v1877 = vunpack.c.l.b16 %v1667
        %v1878 = vunpack.c.l.b16 %v1668
        %v1879 = vpack.c.b16 %v1848, %v1847
        %v1880 = vpack.c.b16 %v1850, %v1849
        %v1881 = vpack.c.b16 %v1852, %v1851
        %v1882 = vpack.c.b16 %v1854, %v1853
        %v1883 = vpack.c.b16 %v1856, %v1855
        %v1884 = vpack.c.b16 %v1858, %v1857
        %v1885 = vpack.c.b16 %v1860, %v1859
        %v1886 = vpack.c.b16 %v1862, %v1861
        %v1887 = vpack.c.b16 %v1864, %v1863
        %v1888 = vpack.c.b16 %v1866, %v1865
        %v1889 = vpack.c.b16 %v1868, %v1867
        %v1890 = vpack.c.b16 %v1870, %v1869
        %v1891 = vpack.c.b16 %v1872, %v1871
        %v1892 = vpack.c.b16 %v1874, %v1873
        %v1893 = vpack.c.b16 %v1876, %v1875
        %v1894 = vpack.c.b16 %v1878, %v1877
        %1911 = vmatpush.bf16.msra.mxu0 %v1886
        %1912 = vmatpush.bf16.msra.mxu0 %v1885
        %1913 = vmatpush.bf16.msra.mxu0 %v1884
        %1914 = vmatpush.bf16.msra.mxu0 %v1883
        %1915 = vmatpush.bf16.msra.mxu0 %v1882
        %1916 = vmatpush.bf16.msra.mxu0 %v1881
        %1917 = vmatpush.bf16.msra.mxu0 %v1880
        %1918 = vmatpush.bf16.msra.mxu0 %v1879
        %1919 = vmatmul.bf16.gmra.mxu0 %v1631
        %v1920 = vpop.f32.mrf.mxu0
        %v1921 = vadd.f32 %v1811, %v1920
        %v1922 = vpop.f32.mrf.mxu0
        %v1923 = vadd.f32 %v1813, %v1922
        %1924 = vdwg.mxu0
        %1925 = vmatpush.bf16.msra.mxu0 %v1894
        %1926 = vmatpush.bf16.msra.mxu0 %v1893
        %1927 = vmatpush.bf16.msra.mxu0 %v1892
        %1928 = vmatpush.bf16.msra.mxu0 %v1891
        %1929 = vmatpush.bf16.msra.mxu0 %v1890
        %1930 = vmatpush.bf16.msra.mxu0 %v1889
        %1931 = vmatpush.bf16.msra.mxu0 %v1888
        %1932 = vmatpush.bf16.msra.mxu0 %v1887
        %1933 = vmatmul.bf16.gmra.mxu0 %v1635
        %v1934 = vpop.f32.mrf.mxu0
        %v1935 = vadd.f32 %v1921, %v1934
        %v1936 = vpop.f32.mrf.mxu0
        %v1937 = vadd.f32 %v1923, %v1936
        %1938 = vdwg.mxu0
        %v1939 = vld [vmem:[%s10] sm:$0x1]
        %v1941 = vperm.slane %v1939, 0
        %v1943 = vadd.f32 %v1935, %v1941
        %v1944 = vadd.f32 %v1937, %v1941
        %v1945 = vmax.f32 %v1943, 0.0
        %v1946 = vmax.f32 %v1944, 0.0
        %v1947 = vpack.c.bf16 %v1945, %v1945
        %v1948 = vpack.c.bf16 %v1946, %v1946
        %v1951 = vunpack.c.l.b16 %v1947
        %v1952 = vunpack.c.l.b16 %v1948
        %v1953 = vpack.c.b16 %v1952, %v1951
        %v1954 = vrot.slane %v1953, 7
        %v1956 = vsel %vm961, 0, %v1954
        %v1959 = vshrl.u32 %v1953, 16
        %v1961 = vrot.slane %v1959, 7
        %v1962 = vshll.u32 %v1953, 16
        %v1964 = vor.u32 %v1961, %v1962
        %v1966 = vsel %vm1016, 0, %v1964
        %v1967 = vld [vmem:[%s11] sm:$0xf]
        %v1968 = vld [vmem:[%s11 + $0x4] sm:$0xf]
        %v1969 = vld [vmem:[%s11 + $0x8] sm:$0xf]
        %v1970 = vld [vmem:[%s11 + $0xc] sm:$0xf]
        %v1971 = vld [vmem:[%s11 + $0x10] sm:$0xf]
        %v1972 = vld [vmem:[%s11 + $0x14] sm:$0xf]
        %v1973 = vld [vmem:[%s11 + $0x18] sm:$0xf]
        %v1974 = vld [vmem:[%s11 + $0x1c] sm:$0xf]
        %v1975 = vld [vmem:[%s11 + $0x20] sm:$0xf]
        %v1976 = vld [vmem:[%s11 + $0x24] sm:$0xf]
        %v1977 = vld [vmem:[%s11 + $0x28] sm:$0xf]
        %v1978 = vld [vmem:[%s11 + $0x2c] sm:$0xf]
        %v1979 = vld [vmem:[%s11 + $0x30] sm:$0xf]
        %v1980 = vld [vmem:[%s11 + $0x34] sm:$0xf]
        %v1981 = vld [vmem:[%s11 + $0x38] sm:$0xf]
        %v1982 = vld [vmem:[%s11 + $0x3c] sm:$0xf]
        %v1983 = vld [vmem:[%s11 + $0x40] sm:$0xf]
        %v1984 = vld [vmem:[%s11 + $0x44] sm:$0xf]
        %v1985 = vld [vmem:[%s11 + $0x48] sm:$0xf]
        %v1986 = vld [vmem:[%s11 + $0x4c] sm:$0xf]
        %v1987 = vld [vmem:[%s11 + $0x50] sm:$0xf]
        %v1988 = vld [vmem:[%s11 + $0x54] sm:$0xf]
        %v1989 = vld [vmem:[%s11 + $0x58] sm:$0xf]
        %v1990 = vld [vmem:[%s11 + $0x5c] sm:$0xf]
        %v1991 = vld [vmem:[%s11 + $0x60] sm:$0xf]
        %v1992 = vld [vmem:[%s11 + $0x64] sm:$0xf]
        %v1993 = vld [vmem:[%s11 + $0x68] sm:$0xf]
        %v1994 = vld [vmem:[%s11 + $0x6c] sm:$0xf]
        %v1995 = vld [vmem:[%s11 + $0x70] sm:$0xf]
        %v1996 = vld [vmem:[%s11 + $0x74] sm:$0xf]
        %v1997 = vld [vmem:[%s11 + $0x78] sm:$0xf]
        %v1998 = vld [vmem:[%s11 + $0x7c] sm:$0xf]
        %v1999 = vrot.slane %v1962, 1
        %v2000 = vor.u32 %v1959, %v1999
        %v2002 = vsel %vm1072, %v2000, 0
        %v2004 = vld [vmem:[%s11 + $0x80] sm:$0xf]
        %v2005 = vld [vmem:[%s11 + $0x84] sm:$0xf]
        %v2006 = vld [vmem:[%s11 + $0x88] sm:$0xf]
        %v2007 = vld [vmem:[%s11 + $0x8c] sm:$0xf]
        %v2008 = vld [vmem:[%s11 + $0x90] sm:$0xf]
        %v2009 = vld [vmem:[%s11 + $0x94] sm:$0xf]
        %v2010 = vld [vmem:[%s11 + $0x98] sm:$0xf]
        %v2011 = vld [vmem:[%s11 + $0x9c] sm:$0xf]
        %v2012 = vld [vmem:[%s11 + $0xa0] sm:$0xf]
        %v2013 = vld [vmem:[%s11 + $0xa4] sm:$0xf]
        %v2014 = vld [vmem:[%s11 + $0xa8] sm:$0xf]
        %v2015 = vld [vmem:[%s11 + $0xac] sm:$0xf]
        %v2016 = vld [vmem:[%s11 + $0xb0] sm:$0xf]
        %v2017 = vld [vmem:[%s11 + $0xb4] sm:$0xf]
        %v2018 = vld [vmem:[%s11 + $0xb8] sm:$0xf]
        %v2019 = vld [vmem:[%s11 + $0xbc] sm:$0xf]
        %v2020 = vld [vmem:[%s11 + $0xc0] sm:$0xf]
        %v2021 = vld [vmem:[%s11 + $0xc4] sm:$0xf]
        %v2022 = vld [vmem:[%s11 + $0xc8] sm:$0xf]
        %v2023 = vld [vmem:[%s11 + $0xcc] sm:$0xf]
        %v2024 = vld [vmem:[%s11 + $0xd0] sm:$0xf]
        %v2025 = vld [vmem:[%s11 + $0xd4] sm:$0xf]
        %v2026 = vld [vmem:[%s11 + $0xd8] sm:$0xf]
        %v2027 = vld [vmem:[%s11 + $0xdc] sm:$0xf]
        %v2028 = vld [vmem:[%s11 + $0xe0] sm:$0xf]
        %v2029 = vld [vmem:[%s11 + $0xe4] sm:$0xf]
        %v2030 = vld [vmem:[%s11 + $0xe8] sm:$0xf]
        %v2031 = vld [vmem:[%s11 + $0xec] sm:$0xf]
        %v2032 = vld [vmem:[%s11 + $0xf0] sm:$0xf]
        %v2033 = vld [vmem:[%s11 + $0xf4] sm:$0xf]
        %v2034 = vld [vmem:[%s11 + $0xf8] sm:$0xf]
        %v2035 = vld [vmem:[%s11 + $0xfc] sm:$0xf]
        %v2068 = vunpack.c.l.b16 %v2004
        %v2069 = vunpack.c.l.b16 %v2005
        %v2070 = vunpack.c.l.b16 %v2006
        %v2071 = vunpack.c.l.b16 %v2007
        %v2072 = vunpack.c.l.b16 %v2008
        %v2073 = vunpack.c.l.b16 %v2009
        %v2074 = vunpack.c.l.b16 %v2010
        %v2075 = vunpack.c.l.b16 %v2011
        %v2076 = vunpack.c.l.b16 %v2012
        %v2077 = vunpack.c.l.b16 %v2013
        %v2078 = vunpack.c.l.b16 %v2014
        %v2079 = vunpack.c.l.b16 %v2015
        %v2080 = vunpack.c.l.b16 %v2016
        %v2081 = vunpack.c.l.b16 %v2017
        %v2082 = vunpack.c.l.b16 %v2018
        %v2083 = vunpack.c.l.b16 %v2019
        %v2084 = vunpack.c.l.b16 %v2020
        %v2085 = vunpack.c.l.b16 %v2021
        %v2086 = vunpack.c.l.b16 %v2022
        %v2087 = vunpack.c.l.b16 %v2023
        %v2088 = vunpack.c.l.b16 %v2024
        %v2089 = vunpack.c.l.b16 %v2025
        %v2090 = vunpack.c.l.b16 %v2026
        %v2091 = vunpack.c.l.b16 %v2027
        %v2092 = vunpack.c.l.b16 %v2028
        %v2093 = vunpack.c.l.b16 %v2029
        %v2094 = vunpack.c.l.b16 %v2030
        %v2095 = vunpack.c.l.b16 %v2031
        %v2096 = vunpack.c.l.b16 %v2032
        %v2097 = vunpack.c.l.b16 %v2033
        %v2098 = vunpack.c.l.b16 %v2034
        %v2099 = vunpack.c.l.b16 %v2035
        %v2100 = vpack.c.b16 %v2069, %v2068
        %v2101 = vpack.c.b16 %v2071, %v2070
        %v2102 = vpack.c.b16 %v2073, %v2072
        %v2103 = vpack.c.b16 %v2075, %v2074
        %v2104 = vpack.c.b16 %v2077, %v2076
        %v2105 = vpack.c.b16 %v2079, %v2078
        %v2106 = vpack.c.b16 %v2081, %v2080
        %v2107 = vpack.c.b16 %v2083, %v2082
        %v2108 = vpack.c.b16 %v2085, %v2084
        %v2109 = vpack.c.b16 %v2087, %v2086
        %v2110 = vpack.c.b16 %v2089, %v2088
        %v2111 = vpack.c.b16 %v2091, %v2090
        %v2112 = vpack.c.b16 %v2093, %v2092
        %v2113 = vpack.c.b16 %v2095, %v2094
        %v2114 = vpack.c.b16 %v2097, %v2096
        %v2115 = vpack.c.b16 %v2099, %v2098
        %2132 = vmatpush.bf16.msra.mxu0 %v2107
        %2133 = vmatpush.bf16.msra.mxu0 %v2106
        %2134 = vmatpush.bf16.msra.mxu0 %v2105
        %2135 = vmatpush.bf16.msra.mxu0 %v2104
        %2136 = vmatpush.bf16.msra.mxu0 %v2103
        %2137 = vmatpush.bf16.msra.mxu0 %v2102
        %2138 = vmatpush.bf16.msra.mxu0 %v2101
        %2139 = vmatpush.bf16.msra.mxu0 %v2100
        %2140 = vmatmul.bf16.gmra.mxu0 %v1953
        %v2141 = vpop.f32.mrf.mxu0
        %v2142 = vadd.f32 0.0, %v2141
        %v2143 = vpop.f32.mrf.mxu0
        %v2144 = vadd.f32 0.0, %v2143
        %2145 = vdwg.mxu0
        %2146 = vmatpush.bf16.msra.mxu0 %v2115
        %2147 = vmatpush.bf16.msra.mxu0 %v2114
        %2148 = vmatpush.bf16.msra.mxu0 %v2113
        %2149 = vmatpush.bf16.msra.mxu0 %v2112
        %2150 = vmatpush.bf16.msra.mxu0 %v2111
        %2151 = vmatpush.bf16.msra.mxu0 %v2110
        %2152 = vmatpush.bf16.msra.mxu0 %v2109
        %2153 = vmatpush.bf16.msra.mxu0 %v2108
        %2154 = vmatmul.bf16.gmra.mxu0 %v2002
        %v2155 = vpop.f32.mrf.mxu0
        %v2156 = vadd.f32 %v2142, %v2155
        %v2157 = vpop.f32.mrf.mxu0
        %v2158 = vadd.f32 %v2144, %v2157
        %2159 = vdwg.mxu0
        %v2192 = vunpack.c.l.b16 %v1967
        %v2193 = vunpack.c.l.b16 %v1968
        %v2194 = vunpack.c.l.b16 %v1969
        %v2195 = vunpack.c.l.b16 %v1970
        %v2196 = vunpack.c.l.b16 %v1971
        %v2197 = vunpack.c.l.b16 %v1972
        %v2198 = vunpack.c.l.b16 %v1973
        %v2199 = vunpack.c.l.b16 %v1974
        %v2200 = vunpack.c.l.b16 %v1975
        %v2201 = vunpack.c.l.b16 %v1976
        %v2202 = vunpack.c.l.b16 %v1977
        %v2203 = vunpack.c.l.b16 %v1978
        %v2204 = vunpack.c.l.b16 %v1979
        %v2205 = vunpack.c.l.b16 %v1980
        %v2206 = vunpack.c.l.b16 %v1981
        %v2207 = vunpack.c.l.b16 %v1982
        %v2208 = vunpack.c.l.b16 %v1983
        %v2209 = vunpack.c.l.b16 %v1984
        %v2210 = vunpack.c.l.b16 %v1985
        %v2211 = vunpack.c.l.b16 %v1986
        %v2212 = vunpack.c.l.b16 %v1987
        %v2213 = vunpack.c.l.b16 %v1988
        %v2214 = vunpack.c.l.b16 %v1989
        %v2215 = vunpack.c.l.b16 %v1990
        %v2216 = vunpack.c.l.b16 %v1991
        %v2217 = vunpack.c.l.b16 %v1992
        %v2218 = vunpack.c.l.b16 %v1993
        %v2219 = vunpack.c.l.b16 %v1994
        %v2220 = vunpack.c.l.b16 %v1995
        %v2221 = vunpack.c.l.b16 %v1996
        %v2222 = vunpack.c.l.b16 %v1997
        %v2223 = vunpack.c.l.b16 %v1998
        %v2224 = vpack.c.b16 %v2193, %v2192
        %v2225 = vpack.c.b16 %v2195, %v2194
        %v2226 = vpack.c.b16 %v2197, %v2196
        %v2227 = vpack.c.b16 %v2199, %v2198
        %v2228 = vpack.c.b16 %v2201, %v2200
        %v2229 = vpack.c.b16 %v2203, %v2202
        %v2230 = vpack.c.b16 %v2205, %v2204
        %v2231 = vpack.c.b16 %v2207, %v2206
        %v2232 = vpack.c.b16 %v2209, %v2208
        %v2233 = vpack.c.b16 %v2211, %v2210
        %v2234 = vpack.c.b16 %v2213, %v2212
        %v2235 = vpack.c.b16 %v2215, %v2214
        %v2236 = vpack.c.b16 %v2217, %v2216
        %v2237 = vpack.c.b16 %v2219, %v2218
        %v2238 = vpack.c.b16 %v2221, %v2220
        %v2239 = vpack.c.b16 %v2223, %v2222
        %2256 = vmatpush.bf16.msra.mxu0 %v2231
        %2257 = vmatpush.bf16.msra.mxu0 %v2230
        %2258 = vmatpush.bf16.msra.mxu0 %v2229
        %2259 = vmatpush.bf16.msra.mxu0 %v2228
        %2260 = vmatpush.bf16.msra.mxu0 %v2227
        %2261 = vmatpush.bf16.msra.mxu0 %v2226
        %2262 = vmatpush.bf16.msra.mxu0 %v2225
        %2263 = vmatpush.bf16.msra.mxu0 %v2224
        %2264 = vmatmul.bf16.gmra.mxu0 %v1956
        %v2265 = vpop.f32.mrf.mxu0
        %v2266 = vadd.f32 %v2156, %v2265
        %v2267 = vpop.f32.mrf.mxu0
        %v2268 = vadd.f32 %v2158, %v2267
        %2269 = vdwg.mxu0
        %2270 = vmatpush.bf16.msra.mxu0 %v2239
        %2271 = vmatpush.bf16.msra.mxu0 %v2238
        %2272 = vmatpush.bf16.msra.mxu0 %v2237
        %2273 = vmatpush.bf16.msra.mxu0 %v2236
        %2274 = vmatpush.bf16.msra.mxu0 %v2235
        %2275 = vmatpush.bf16.msra.mxu0 %v2234
        %2276 = vmatpush.bf16.msra.mxu0 %v2233
        %2277 = vmatpush.bf16.msra.mxu0 %v2232
        %2278 = vmatmul.bf16.gmra.mxu0 %v1966
        %v2279 = vpop.f32.mrf.mxu0
        %v2280 = vadd.f32 %v2266, %v2279
        %v2281 = vpop.f32.mrf.mxu0
        %v2282 = vadd.f32 %v2268, %v2281
        %2283 = vdwg.mxu0
        %v2284 = vrot.slane %v1953, 1
        %v2286 = vsel %vm1098, %v2284, 0
        %v2288 = vld [vmem:[%s11 + $0x100] sm:$0xf]
        %v2289 = vld [vmem:[%s11 + $0x104] sm:$0xf]
        %v2290 = vld [vmem:[%s11 + $0x108] sm:$0xf]
        %v2291 = vld [vmem:[%s11 + $0x10c] sm:$0xf]
        %v2292 = vld [vmem:[%s11 + $0x110] sm:$0xf]
        %v2293 = vld [vmem:[%s11 + $0x114] sm:$0xf]
        %v2294 = vld [vmem:[%s11 + $0x118] sm:$0xf]
        %v2295 = vld [vmem:[%s11 + $0x11c] sm:$0xf]
        %v2296 = vld [vmem:[%s11 + $0x120] sm:$0xf]
        %v2297 = vld [vmem:[%s11 + $0x124] sm:$0xf]
        %v2298 = vld [vmem:[%s11 + $0x128] sm:$0xf]
        %v2299 = vld [vmem:[%s11 + $0x12c] sm:$0xf]
        %v2300 = vld [vmem:[%s11 + $0x130] sm:$0xf]
        %v2301 = vld [vmem:[%s11 + $0x134] sm:$0xf]
        %v2302 = vld [vmem:[%s11 + $0x138] sm:$0xf]
        %v2303 = vld [vmem:[%s11 + $0x13c] sm:$0xf]
        %v2320 = vunpack.c.l.b16 %v2288
        %v2321 = vunpack.c.l.b16 %v2289
        %v2322 = vunpack.c.l.b16 %v2290
        %v2323 = vunpack.c.l.b16 %v2291
        %v2324 = vunpack.c.l.b16 %v2292
        %v2325 = vunpack.c.l.b16 %v2293
        %v2326 = vunpack.c.l.b16 %v2294
        %v2327 = vunpack.c.l.b16 %v2295
        %v2328 = vunpack.c.l.b16 %v2296
        %v2329 = vunpack.c.l.b16 %v2297
        %v2330 = vunpack.c.l.b16 %v2298
        %v2331 = vunpack.c.l.b16 %v2299
        %v2332 = vunpack.c.l.b16 %v2300
        %v2333 = vunpack.c.l.b16 %v2301
        %v2334 = vunpack.c.l.b16 %v2302
        %v2335 = vunpack.c.l.b16 %v2303
        %v2336 = vpack.c.b16 %v2321, %v2320
        %v2337 = vpack.c.b16 %v2323, %v2322
        %v2338 = vpack.c.b16 %v2325, %v2324
        %v2339 = vpack.c.b16 %v2327, %v2326
        %v2340 = vpack.c.b16 %v2329, %v2328
        %v2341 = vpack.c.b16 %v2331, %v2330
        %v2342 = vpack.c.b16 %v2333, %v2332
        %v2343 = vpack.c.b16 %v2335, %v2334
        %2352 = vmatpush.bf16.msra.mxu0 %v2343
        %2353 = vmatpush.bf16.msra.mxu0 %v2342
        %2354 = vmatpush.bf16.msra.mxu0 %v2341
        %2355 = vmatpush.bf16.msra.mxu0 %v2340
        %2356 = vmatpush.bf16.msra.mxu0 %v2339
        %2357 = vmatpush.bf16.msra.mxu0 %v2338
        %2358 = vmatpush.bf16.msra.mxu0 %v2337
        %2359 = vmatpush.bf16.msra.mxu0 %v2336
        %2360 = vmatmul.bf16.gmra.mxu0 %v2286
        %v2361 = vpop.f32.mrf.mxu0
        %v2362 = vadd.f32 0.0, %v2361
        %v2363 = vpop.f32.mrf.mxu0
        %v2364 = vadd.f32 0.0, %v2363
        %2365 = vdwg.mxu0
        %v2366 = vadd.f32 %v2280, %v2362
        %v2367 = vadd.f32 %v2282, %v2364
        %v2368 = vld [vmem:[%s12] sm:$0x1]
        %v2370 = vperm.slane %v2368, 0
        %v2372 = vadd.f32 %v2366, %v2370
        %v2373 = vadd.f32 %v2367, %v2370
        %v2374 = vmax.f32 %v2372, 0.0
        %v2375 = vmax.f32 %v2373, 0.0
        %v2376 = vpack.c.bf16 %v2374, %v2374
        %v2377 = vpack.c.bf16 %v2375, %v2375
        %v2380 = vunpack.c.l.b16 %v2376
        %v2381 = vunpack.c.l.b16 %v2377
        %v2382 = vpack.c.b16 %v2381, %v2380
        %v2384 = vshrl.u32 %v2382, 16
        %v2386 = vrot.slane %v2384, 7
        %v2387 = vshll.u32 %v2382, 16
        %v2389 = vor.u32 %v2386, %v2387
        %v2391 = vsel %vm1016, 0, %v2389
        %v2393 = vld [vmem:[#allocation5] sm:$0xf]
        %v2394 = vld [vmem:[#allocation5 + $0x4] sm:$0xf]
        %v2395 = vld [vmem:[#allocation5 + $0x8] sm:$0xf]
        %v2396 = vld [vmem:[#allocation5 + $0xc] sm:$0xf]
        %v2397 = vld [vmem:[#allocation5 + $0x10] sm:$0xf]
        %v2398 = vld [vmem:[#allocation5 + $0x14] sm:$0xf]
        %v2399 = vld [vmem:[#allocation5 + $0x18] sm:$0xf]
        %v2400 = vld [vmem:[#allocation5 + $0x1c] sm:$0xf]
        %v2401 = vld [vmem:[#allocation5 + $0x20] sm:$0xf]
        %v2402 = vld [vmem:[#allocation5 + $0x24] sm:$0xf]
        %v2403 = vld [vmem:[#allocation5 + $0x28] sm:$0xf]
        %v2404 = vld [vmem:[#allocation5 + $0x2c] sm:$0xf]
        %v2405 = vld [vmem:[#allocation5 + $0x30] sm:$0xf]
        %v2406 = vld [vmem:[#allocation5 + $0x34] sm:$0xf]
        %v2407 = vld [vmem:[#allocation5 + $0x38] sm:$0xf]
        %v2408 = vld [vmem:[#allocation5 + $0x3c] sm:$0xf]
        %v2409 = vld [vmem:[#allocation5 + $0x40] sm:$0xf]
        %v2410 = vld [vmem:[#allocation5 + $0x44] sm:$0xf]
        %v2411 = vld [vmem:[#allocation5 + $0x48] sm:$0xf]
        %v2412 = vld [vmem:[#allocation5 + $0x4c] sm:$0xf]
        %v2413 = vld [vmem:[#allocation5 + $0x50] sm:$0xf]
        %v2414 = vld [vmem:[#allocation5 + $0x54] sm:$0xf]
        %v2415 = vld [vmem:[#allocation5 + $0x58] sm:$0xf]
        %v2416 = vld [vmem:[#allocation5 + $0x5c] sm:$0xf]
        %v2417 = vld [vmem:[#allocation5 + $0x60] sm:$0xf]
        %v2418 = vld [vmem:[#allocation5 + $0x64] sm:$0xf]
        %v2419 = vld [vmem:[#allocation5 + $0x68] sm:$0xf]
        %v2420 = vld [vmem:[#allocation5 + $0x6c] sm:$0xf]
        %v2421 = vld [vmem:[#allocation5 + $0x70] sm:$0xf]
        %v2422 = vld [vmem:[#allocation5 + $0x74] sm:$0xf]
        %v2423 = vld [vmem:[#allocation5 + $0x78] sm:$0xf]
        %v2424 = vld [vmem:[#allocation5 + $0x7c] sm:$0xf]
        %v2425 = vrot.slane %v2387, 1
        %v2426 = vor.u32 %v2384, %v2425
        %v2428 = vsel %vm1072, %v2426, 0
        %v2429 = vld [vmem:[#allocation5 + $0x80] sm:$0xf]
        %v2430 = vld [vmem:[#allocation5 + $0x84] sm:$0xf]
        %v2431 = vld [vmem:[#allocation5 + $0x88] sm:$0xf]
        %v2432 = vld [vmem:[#allocation5 + $0x8c] sm:$0xf]
        %v2433 = vld [vmem:[#allocation5 + $0x90] sm:$0xf]
        %v2434 = vld [vmem:[#allocation5 + $0x94] sm:$0xf]
        %v2435 = vld [vmem:[#allocation5 + $0x98] sm:$0xf]
        %v2436 = vld [vmem:[#allocation5 + $0x9c] sm:$0xf]
        %v2437 = vld [vmem:[#allocation5 + $0xa0] sm:$0xf]
        %v2438 = vld [vmem:[#allocation5 + $0xa4] sm:$0xf]
        %v2439 = vld [vmem:[#allocation5 + $0xa8] sm:$0xf]
        %v2440 = vld [vmem:[#allocation5 + $0xac] sm:$0xf]
        %v2441 = vld [vmem:[#allocation5 + $0xb0] sm:$0xf]
        %v2442 = vld [vmem:[#allocation5 + $0xb4] sm:$0xf]
        %v2443 = vld [vmem:[#allocation5 + $0xb8] sm:$0xf]
        %v2444 = vld [vmem:[#allocation5 + $0xbc] sm:$0xf]
        %v2461 = vunpack.c.l.b16 %v2429
        %v2462 = vunpack.c.l.b16 %v2430
        %v2463 = vunpack.c.l.b16 %v2431
        %v2464 = vunpack.c.l.b16 %v2432
        %v2465 = vunpack.c.l.b16 %v2433
        %v2466 = vunpack.c.l.b16 %v2434
        %v2467 = vunpack.c.l.b16 %v2435
        %v2468 = vunpack.c.l.b16 %v2436
        %v2469 = vunpack.c.l.b16 %v2437
        %v2470 = vunpack.c.l.b16 %v2438
        %v2471 = vunpack.c.l.b16 %v2439
        %v2472 = vunpack.c.l.b16 %v2440
        %v2473 = vunpack.c.l.b16 %v2441
        %v2474 = vunpack.c.l.b16 %v2442
        %v2475 = vunpack.c.l.b16 %v2443
        %v2476 = vunpack.c.l.b16 %v2444
        %v2477 = vpack.c.b16 %v2462, %v2461
        %v2478 = vpack.c.b16 %v2464, %v2463
        %v2479 = vpack.c.b16 %v2466, %v2465
        %v2480 = vpack.c.b16 %v2468, %v2467
        %v2481 = vpack.c.b16 %v2470, %v2469
        %v2482 = vpack.c.b16 %v2472, %v2471
        %v2483 = vpack.c.b16 %v2474, %v2473
        %v2484 = vpack.c.b16 %v2476, %v2475
        %2493 = vmatpush.bf16.msra.mxu0 %v2484
        %2494 = vmatpush.bf16.msra.mxu0 %v2483
        %2495 = vmatpush.bf16.msra.mxu0 %v2482
        %2496 = vmatpush.bf16.msra.mxu0 %v2481
        %2497 = vmatpush.bf16.msra.mxu0 %v2480
        %2498 = vmatpush.bf16.msra.mxu0 %v2479
        %2499 = vmatpush.bf16.msra.mxu0 %v2478
        %2500 = vmatpush.bf16.msra.mxu0 %v2477
        %2501 = vmatmul.bf16.gmra.mxu0 %v2428
        %v2502 = vpop.f32.mrf.mxu0
        %v2503 = vadd.f32 0.0, %v2502
        %v2504 = vpop.f32.mrf.mxu0
        %v2505 = vadd.f32 0.0, %v2504
        %2506 = vdwg.mxu0
        %v2539 = vunpack.c.l.b16 %v2393
        %v2540 = vunpack.c.l.b16 %v2394
        %v2541 = vunpack.c.l.b16 %v2395
        %v2542 = vunpack.c.l.b16 %v2396
        %v2543 = vunpack.c.l.b16 %v2397
        %v2544 = vunpack.c.l.b16 %v2398
        %v2545 = vunpack.c.l.b16 %v2399
        %v2546 = vunpack.c.l.b16 %v2400
        %v2547 = vunpack.c.l.b16 %v2401
        %v2548 = vunpack.c.l.b16 %v2402
        %v2549 = vunpack.c.l.b16 %v2403
        %v2550 = vunpack.c.l.b16 %v2404
        %v2551 = vunpack.c.l.b16 %v2405
        %v2552 = vunpack.c.l.b16 %v2406
        %v2553 = vunpack.c.l.b16 %v2407
        %v2554 = vunpack.c.l.b16 %v2408
        %v2555 = vunpack.c.l.b16 %v2409
        %v2556 = vunpack.c.l.b16 %v2410
        %v2557 = vunpack.c.l.b16 %v2411
        %v2558 = vunpack.c.l.b16 %v2412
        %v2559 = vunpack.c.l.b16 %v2413
        %v2560 = vunpack.c.l.b16 %v2414
        %v2561 = vunpack.c.l.b16 %v2415
        %v2562 = vunpack.c.l.b16 %v2416
        %v2563 = vunpack.c.l.b16 %v2417
        %v2564 = vunpack.c.l.b16 %v2418
        %v2565 = vunpack.c.l.b16 %v2419
        %v2566 = vunpack.c.l.b16 %v2420
        %v2567 = vunpack.c.l.b16 %v2421
        %v2568 = vunpack.c.l.b16 %v2422
        %v2569 = vunpack.c.l.b16 %v2423
        %v2570 = vunpack.c.l.b16 %v2424
        %v2571 = vpack.c.b16 %v2540, %v2539
        %v2572 = vpack.c.b16 %v2542, %v2541
        %v2573 = vpack.c.b16 %v2544, %v2543
        %v2574 = vpack.c.b16 %v2546, %v2545
        %v2575 = vpack.c.b16 %v2548, %v2547
        %v2576 = vpack.c.b16 %v2550, %v2549
        %v2577 = vpack.c.b16 %v2552, %v2551
        %v2578 = vpack.c.b16 %v2554, %v2553
        %v2579 = vpack.c.b16 %v2556, %v2555
        %v2580 = vpack.c.b16 %v2558, %v2557
        %v2581 = vpack.c.b16 %v2560, %v2559
        %v2582 = vpack.c.b16 %v2562, %v2561
        %v2583 = vpack.c.b16 %v2564, %v2563
        %v2584 = vpack.c.b16 %v2566, %v2565
        %v2585 = vpack.c.b16 %v2568, %v2567
        %v2586 = vpack.c.b16 %v2570, %v2569
        %2603 = vmatpush.bf16.msra.mxu0 %v2578
        %2604 = vmatpush.bf16.msra.mxu0 %v2577
        %2605 = vmatpush.bf16.msra.mxu0 %v2576
        %2606 = vmatpush.bf16.msra.mxu0 %v2575
        %2607 = vmatpush.bf16.msra.mxu0 %v2574
        %2608 = vmatpush.bf16.msra.mxu0 %v2573
        %2609 = vmatpush.bf16.msra.mxu0 %v2572
        %2610 = vmatpush.bf16.msra.mxu0 %v2571
        %2611 = vmatmul.bf16.gmra.mxu0 %v2391
        %v2612 = vpop.f32.mrf.mxu0
        %v2613 = vadd.f32 %v2503, %v2612
        %v2614 = vpop.f32.mrf.mxu0
        %v2615 = vadd.f32 %v2505, %v2614
        %2616 = vdwg.mxu0
        %2617 = vmatpush.bf16.msra.mxu0 %v2586
        %2618 = vmatpush.bf16.msra.mxu0 %v2585
        %2619 = vmatpush.bf16.msra.mxu0 %v2584
        %2620 = vmatpush.bf16.msra.mxu0 %v2583
        %2621 = vmatpush.bf16.msra.mxu0 %v2582
        %2622 = vmatpush.bf16.msra.mxu0 %v2581
        %2623 = vmatpush.bf16.msra.mxu0 %v2580
        %2624 = vmatpush.bf16.msra.mxu0 %v2579
        %2625 = vmatmul.bf16.gmra.mxu0 %v2382
        %v2626 = vpop.f32.mrf.mxu0
        %v2627 = vadd.f32 %v2613, %v2626
        %v2628 = vpop.f32.mrf.mxu0
        %v2629 = vadd.f32 %v2615, %v2628
        %2630 = vdwg.mxu0
        %v2631 = vld [vmem:[%s14] sm:$0x1]
        %v2633 = vperm.slane %v2631, 0
        %v2635 = vadd.f32 %v2627, %v2633
        %v2636 = vadd.f32 %v2629, %v2633
        %v2637 = vld [vmem:[%s15] sm:$0xf]
        %v2638 = vld [vmem:[%s15 + $0x4] sm:$0xf]
        %v2639 = vld [vmem:[%s15 + $0x8] sm:$0xf]
        %v2640 = vld [vmem:[%s15 + $0xc] sm:$0xf]
        %v2641 = vld [vmem:[%s15 + $0x10] sm:$0xf]
        %v2642 = vld [vmem:[%s15 + $0x14] sm:$0xf]
        %v2643 = vld [vmem:[%s15 + $0x18] sm:$0xf]
        %v2644 = vld [vmem:[%s15 + $0x1c] sm:$0xf]
        %v2645 = vld [vmem:[%s16] sm:$0x1]
        %v2647 = vperm.slane %v2645, 0
        %v2657 = vunpack.c.l.b16 %v2637
        %v2658 = vunpack.c.l.b16 %v2638
        %v2659 = vunpack.c.l.b16 %v2639
        %v2660 = vunpack.c.l.b16 %v2640
        %v2661 = vunpack.c.l.b16 %v2641
        %v2662 = vunpack.c.l.b16 %v2642
        %v2663 = vunpack.c.l.b16 %v2643
        %v2664 = vunpack.c.l.b16 %v2644
        %v2665 = vpack.c.b16 %v2658, %v2657
        %v2666 = vpack.c.b16 %v2660, %v2659
        %v2667 = vpack.c.b16 %v2662, %v2661
        %v2668 = vpack.c.b16 %v2664, %v2663
        %v2673 = vsel %vm1195, %v1606, 0
        %2675 = vmatpush.bf16.msra.mxu0 0
        %2676 = vmatpush.bf16.msra.mxu0 0
        %2677 = vmatpush.bf16.msra.mxu0 0
        %2678 = vmatpush.bf16.msra.mxu0 0
        %2679 = vmatpush.bf16.msra.mxu0 %v2668
        %2680 = vmatpush.bf16.msra.mxu0 %v2667
        %2681 = vmatpush.bf16.msra.mxu0 %v2666
        %2682 = vmatpush.bf16.msra.mxu0 %v2665
        %2683 = vmatmul.bf16.gmra.mxu0 %v2673
        %v2684 = vpop.f32.mrf.mxu0
        %v2685 = vadd.f32 %v2647, %v2684
        %v2686 = vpop.f32.mrf.mxu0
        %v2687 = vadd.f32 %v2647, %v2686
        %2688 = vdwg.mxu0
        %v2689 = vadd.f32 %v2635, %v2685
        %v2690 = vadd.f32 %v2636, %v2687
        %v2691 = vmax.f32 %v2689, 0.0
        %v2692 = vmax.f32 %v2690, 0.0
        %v2693 = vpack.c.bf16 %v2691, %v2691
        %v2694 = vpack.c.bf16 %v2692, %v2692
        %v2697 = vunpack.c.l.b16 %v2693
        %v2698 = vunpack.c.l.b16 %v2694
        %v2699 = vpack.c.b16 %v2698, %v2697
        %v2701 = vshrl.u32 %v2699, 16
        %v2703 = vrot.slane %v2701, 6
        %v2704 = vshll.u32 %v2699, 16
        %v2706 = vrot.slane %v2704, 7
        %v2707 = vor.u32 %v2703, %v2706
        %v2709 = vsel %vm957, 0, %v2707
        %v2710 = vrot.slane %v2699, 7
        %v2712 = vsel %vm961, 0, %v2710
        %v2714 = vld [vmem:[#allocation7] sm:$0xf]
        %v2715 = vld [vmem:[#allocation7 + $0x4] sm:$0xf]
        %v2716 = vld [vmem:[#allocation7 + $0x8] sm:$0xf]
        %v2717 = vld [vmem:[#allocation7 + $0xc] sm:$0xf]
        %v2718 = vld [vmem:[#allocation7 + $0x10] sm:$0xf]
        %v2719 = vld [vmem:[#allocation7 + $0x14] sm:$0xf]
        %v2720 = vld [vmem:[#allocation7 + $0x18] sm:$0xf]
        %v2721 = vld [vmem:[#allocation7 + $0x1c] sm:$0xf]
        %v2722 = vld [vmem:[#allocation7 + $0x20] sm:$0xf]
        %v2723 = vld [vmem:[#allocation7 + $0x24] sm:$0xf]
        %v2724 = vld [vmem:[#allocation7 + $0x28] sm:$0xf]
        %v2725 = vld [vmem:[#allocation7 + $0x2c] sm:$0xf]
        %v2726 = vld [vmem:[#allocation7 + $0x30] sm:$0xf]
        %v2727 = vld [vmem:[#allocation7 + $0x34] sm:$0xf]
        %v2728 = vld [vmem:[#allocation7 + $0x38] sm:$0xf]
        %v2729 = vld [vmem:[#allocation7 + $0x3c] sm:$0xf]
        %v2730 = vld [vmem:[#allocation7 + $0x40] sm:$0xf]
        %v2731 = vld [vmem:[#allocation7 + $0x44] sm:$0xf]
        %v2732 = vld [vmem:[#allocation7 + $0x48] sm:$0xf]
        %v2733 = vld [vmem:[#allocation7 + $0x4c] sm:$0xf]
        %v2734 = vld [vmem:[#allocation7 + $0x50] sm:$0xf]
        %v2735 = vld [vmem:[#allocation7 + $0x54] sm:$0xf]
        %v2736 = vld [vmem:[#allocation7 + $0x58] sm:$0xf]
        %v2737 = vld [vmem:[#allocation7 + $0x5c] sm:$0xf]
        %v2738 = vld [vmem:[#allocation7 + $0x60] sm:$0xf]
        %v2739 = vld [vmem:[#allocation7 + $0x64] sm:$0xf]
        %v2740 = vld [vmem:[#allocation7 + $0x68] sm:$0xf]
        %v2741 = vld [vmem:[#allocation7 + $0x6c] sm:$0xf]
        %v2742 = vld [vmem:[#allocation7 + $0x70] sm:$0xf]
        %v2743 = vld [vmem:[#allocation7 + $0x74] sm:$0xf]
        %v2744 = vld [vmem:[#allocation7 + $0x78] sm:$0xf]
        %v2745 = vld [vmem:[#allocation7 + $0x7c] sm:$0xf]
        %v2746 = vrot.slane %v2701, 7
        %v2747 = vor.u32 %v2746, %v2704
        %v2749 = vsel %vm1016, 0, %v2747
        %v2751 = vld [vmem:[#allocation7 + $0x80] sm:$0xf]
        %v2752 = vld [vmem:[#allocation7 + $0x84] sm:$0xf]
        %v2753 = vld [vmem:[#allocation7 + $0x88] sm:$0xf]
        %v2754 = vld [vmem:[#allocation7 + $0x8c] sm:$0xf]
        %v2755 = vld [vmem:[#allocation7 + $0x90] sm:$0xf]
        %v2756 = vld [vmem:[#allocation7 + $0x94] sm:$0xf]
        %v2757 = vld [vmem:[#allocation7 + $0x98] sm:$0xf]
        %v2758 = vld [vmem:[#allocation7 + $0x9c] sm:$0xf]
        %v2759 = vld [vmem:[#allocation7 + $0xa0] sm:$0xf]
        %v2760 = vld [vmem:[#allocation7 + $0xa4] sm:$0xf]
        %v2761 = vld [vmem:[#allocation7 + $0xa8] sm:$0xf]
        %v2762 = vld [vmem:[#allocation7 + $0xac] sm:$0xf]
        %v2763 = vld [vmem:[#allocation7 + $0xb0] sm:$0xf]
        %v2764 = vld [vmem:[#allocation7 + $0xb4] sm:$0xf]
        %v2765 = vld [vmem:[#allocation7 + $0xb8] sm:$0xf]
        %v2766 = vld [vmem:[#allocation7 + $0xbc] sm:$0xf]
        %v2767 = vld [vmem:[#allocation7 + $0xc0] sm:$0xf]
        %v2768 = vld [vmem:[#allocation7 + $0xc4] sm:$0xf]
        %v2769 = vld [vmem:[#allocation7 + $0xc8] sm:$0xf]
        %v2770 = vld [vmem:[#allocation7 + $0xcc] sm:$0xf]
        %v2771 = vld [vmem:[#allocation7 + $0xd0] sm:$0xf]
        %v2772 = vld [vmem:[#allocation7 + $0xd4] sm:$0xf]
        %v2773 = vld [vmem:[#allocation7 + $0xd8] sm:$0xf]
        %v2774 = vld [vmem:[#allocation7 + $0xdc] sm:$0xf]
        %v2775 = vld [vmem:[#allocation7 + $0xe0] sm:$0xf]
        %v2776 = vld [vmem:[#allocation7 + $0xe4] sm:$0xf]
        %v2777 = vld [vmem:[#allocation7 + $0xe8] sm:$0xf]
        %v2778 = vld [vmem:[#allocation7 + $0xec] sm:$0xf]
        %v2779 = vld [vmem:[#allocation7 + $0xf0] sm:$0xf]
        %v2780 = vld [vmem:[#allocation7 + $0xf4] sm:$0xf]
        %v2781 = vld [vmem:[#allocation7 + $0xf8] sm:$0xf]
        %v2782 = vld [vmem:[#allocation7 + $0xfc] sm:$0xf]
        %v2815 = vunpack.c.l.b16 %v2751
        %v2816 = vunpack.c.l.b16 %v2752
        %v2817 = vunpack.c.l.b16 %v2753
        %v2818 = vunpack.c.l.b16 %v2754
        %v2819 = vunpack.c.l.b16 %v2755
        %v2820 = vunpack.c.l.b16 %v2756
        %v2821 = vunpack.c.l.b16 %v2757
        %v2822 = vunpack.c.l.b16 %v2758
        %v2823 = vunpack.c.l.b16 %v2759
        %v2824 = vunpack.c.l.b16 %v2760
        %v2825 = vunpack.c.l.b16 %v2761
        %v2826 = vunpack.c.l.b16 %v2762
        %v2827 = vunpack.c.l.b16 %v2763
        %v2828 = vunpack.c.l.b16 %v2764
        %v2829 = vunpack.c.l.b16 %v2765
        %v2830 = vunpack.c.l.b16 %v2766
        %v2831 = vunpack.c.l.b16 %v2767
        %v2832 = vunpack.c.l.b16 %v2768
        %v2833 = vunpack.c.l.b16 %v2769
        %v2834 = vunpack.c.l.b16 %v2770
        %v2835 = vunpack.c.l.b16 %v2771
        %v2836 = vunpack.c.l.b16 %v2772
        %v2837 = vunpack.c.l.b16 %v2773
        %v2838 = vunpack.c.l.b16 %v2774
        %v2839 = vunpack.c.l.b16 %v2775
        %v2840 = vunpack.c.l.b16 %v2776
        %v2841 = vunpack.c.l.b16 %v2777
        %v2842 = vunpack.c.l.b16 %v2778
        %v2843 = vunpack.c.l.b16 %v2779
        %v2844 = vunpack.c.l.b16 %v2780
        %v2845 = vunpack.c.l.b16 %v2781
        %v2846 = vunpack.c.l.b16 %v2782
        %v2847 = vpack.c.b16 %v2816, %v2815
        %v2848 = vpack.c.b16 %v2818, %v2817
        %v2849 = vpack.c.b16 %v2820, %v2819
        %v2850 = vpack.c.b16 %v2822, %v2821
        %v2851 = vpack.c.b16 %v2824, %v2823
        %v2852 = vpack.c.b16 %v2826, %v2825
        %v2853 = vpack.c.b16 %v2828, %v2827
        %v2854 = vpack.c.b16 %v2830, %v2829
        %v2855 = vpack.c.b16 %v2832, %v2831
        %v2856 = vpack.c.b16 %v2834, %v2833
        %v2857 = vpack.c.b16 %v2836, %v2835
        %v2858 = vpack.c.b16 %v2838, %v2837
        %v2859 = vpack.c.b16 %v2840, %v2839
        %v2860 = vpack.c.b16 %v2842, %v2841
        %v2861 = vpack.c.b16 %v2844, %v2843
        %v2862 = vpack.c.b16 %v2846, %v2845
        %2879 = vmatpush.bf16.msra.mxu0 %v2854
        %2880 = vmatpush.bf16.msra.mxu0 %v2853
        %2881 = vmatpush.bf16.msra.mxu0 %v2852
        %2882 = vmatpush.bf16.msra.mxu0 %v2851
        %2883 = vmatpush.bf16.msra.mxu0 %v2850
        %2884 = vmatpush.bf16.msra.mxu0 %v2849
        %2885 = vmatpush.bf16.msra.mxu0 %v2848
        %2886 = vmatpush.bf16.msra.mxu0 %v2847
        %2887 = vmatmul.bf16.gmra.mxu0 %v2749
        %v2888 = vpop.f32.mrf.mxu0
        %v2889 = vadd.f32 0.0, %v2888
        %v2890 = vpop.f32.mrf.mxu0
        %v2891 = vadd.f32 0.0, %v2890
        %2892 = vdwg.mxu0
        %2893 = vmatpush.bf16.msra.mxu0 %v2862
        %2894 = vmatpush.bf16.msra.mxu0 %v2861
        %2895 = vmatpush.bf16.msra.mxu0 %v2860
        %2896 = vmatpush.bf16.msra.mxu0 %v2859
        %2897 = vmatpush.bf16.msra.mxu0 %v2858
        %2898 = vmatpush.bf16.msra.mxu0 %v2857
        %2899 = vmatpush.bf16.msra.mxu0 %v2856
        %2900 = vmatpush.bf16.msra.mxu0 %v2855
        %2901 = vmatmul.bf16.gmra.mxu0 %v2699
        %v2902 = vpop.f32.mrf.mxu0
        %v2903 = vadd.f32 %v2889, %v2902
        %v2904 = vpop.f32.mrf.mxu0
        %v2905 = vadd.f32 %v2891, %v2904
        %2906 = vdwg.mxu0
        %v2939 = vunpack.c.l.b16 %v2714
        %v2940 = vunpack.c.l.b16 %v2715
        %v2941 = vunpack.c.l.b16 %v2716
        %v2942 = vunpack.c.l.b16 %v2717
        %v2943 = vunpack.c.l.b16 %v2718
        %v2944 = vunpack.c.l.b16 %v2719
        %v2945 = vunpack.c.l.b16 %v2720
        %v2946 = vunpack.c.l.b16 %v2721
        %v2947 = vunpack.c.l.b16 %v2722
        %v2948 = vunpack.c.l.b16 %v2723
        %v2949 = vunpack.c.l.b16 %v2724
        %v2950 = vunpack.c.l.b16 %v2725
        %v2951 = vunpack.c.l.b16 %v2726
        %v2952 = vunpack.c.l.b16 %v2727
        %v2953 = vunpack.c.l.b16 %v2728
        %v2954 = vunpack.c.l.b16 %v2729
        %v2955 = vunpack.c.l.b16 %v2730
        %v2956 = vunpack.c.l.b16 %v2731
        %v2957 = vunpack.c.l.b16 %v2732
        %v2958 = vunpack.c.l.b16 %v2733
        %v2959 = vunpack.c.l.b16 %v2734
        %v2960 = vunpack.c.l.b16 %v2735
        %v2961 = vunpack.c.l.b16 %v2736
        %v2962 = vunpack.c.l.b16 %v2737
        %v2963 = vunpack.c.l.b16 %v2738
        %v2964 = vunpack.c.l.b16 %v2739
        %v2965 = vunpack.c.l.b16 %v2740
        %v2966 = vunpack.c.l.b16 %v2741
        %v2967 = vunpack.c.l.b16 %v2742
        %v2968 = vunpack.c.l.b16 %v2743
        %v2969 = vunpack.c.l.b16 %v2744
        %v2970 = vunpack.c.l.b16 %v2745
        %v2971 = vpack.c.b16 %v2940, %v2939
        %v2972 = vpack.c.b16 %v2942, %v2941
        %v2973 = vpack.c.b16 %v2944, %v2943
        %v2974 = vpack.c.b16 %v2946, %v2945
        %v2975 = vpack.c.b16 %v2948, %v2947
        %v2976 = vpack.c.b16 %v2950, %v2949
        %v2977 = vpack.c.b16 %v2952, %v2951
        %v2978 = vpack.c.b16 %v2954, %v2953
        %v2979 = vpack.c.b16 %v2956, %v2955
        %v2980 = vpack.c.b16 %v2958, %v2957
        %v2981 = vpack.c.b16 %v2960, %v2959
        %v2982 = vpack.c.b16 %v2962, %v2961
        %v2983 = vpack.c.b16 %v2964, %v2963
        %v2984 = vpack.c.b16 %v2966, %v2965
        %v2985 = vpack.c.b16 %v2968, %v2967
        %v2986 = vpack.c.b16 %v2970, %v2969
        %3003 = vmatpush.bf16.msra.mxu0 %v2978
        %3004 = vmatpush.bf16.msra.mxu0 %v2977
        %3005 = vmatpush.bf16.msra.mxu0 %v2976
        %3006 = vmatpush.bf16.msra.mxu0 %v2975
        %3007 = vmatpush.bf16.msra.mxu0 %v2974
        %3008 = vmatpush.bf16.msra.mxu0 %v2973
        %3009 = vmatpush.bf16.msra.mxu0 %v2972
        %3010 = vmatpush.bf16.msra.mxu0 %v2971
        %3011 = vmatmul.bf16.gmra.mxu0 %v2709
        %v3012 = vpop.f32.mrf.mxu0
        %v3013 = vadd.f32 %v2903, %v3012
        %v3014 = vpop.f32.mrf.mxu0
        %v3015 = vadd.f32 %v2905, %v3014
        %3016 = vdwg.mxu0
        %3017 = vmatpush.bf16.msra.mxu0 %v2986
        %3018 = vmatpush.bf16.msra.mxu0 %v2985
        %3019 = vmatpush.bf16.msra.mxu0 %v2984
        %3020 = vmatpush.bf16.msra.mxu0 %v2983
        %3021 = vmatpush.bf16.msra.mxu0 %v2982
        %3022 = vmatpush.bf16.msra.mxu0 %v2981
        %3023 = vmatpush.bf16.msra.mxu0 %v2980
        %3024 = vmatpush.bf16.msra.mxu0 %v2979
        %3025 = vmatmul.bf16.gmra.mxu0 %v2712
        %v3026 = vpop.f32.mrf.mxu0
        %v3027 = vadd.f32 %v3013, %v3026
        %v3028 = vpop.f32.mrf.mxu0
        %v3029 = vadd.f32 %v3015, %v3028
        %3030 = vdwg.mxu0
        %v3031 = vrot.slane %v2704, 1
        %v3032 = vor.u32 %v2701, %v3031
        %v3034 = vsel %vm1072, %v3032, 0
        %v3035 = vrot.slane %v2699, 1
        %v3037 = vsel %vm1098, %v3035, 0
        %v3039 = vld [vmem:[#allocation7 + $0x100] sm:$0xf]
        %v3040 = vld [vmem:[#allocation7 + $0x104] sm:$0xf]
        %v3041 = vld [vmem:[#allocation7 + $0x108] sm:$0xf]
        %v3042 = vld [vmem:[#allocation7 + $0x10c] sm:$0xf]
        %v3043 = vld [vmem:[#allocation7 + $0x110] sm:$0xf]
        %v3044 = vld [vmem:[#allocation7 + $0x114] sm:$0xf]
        %v3045 = vld [vmem:[#allocation7 + $0x118] sm:$0xf]
        %v3046 = vld [vmem:[#allocation7 + $0x11c] sm:$0xf]
        %v3047 = vld [vmem:[#allocation7 + $0x120] sm:$0xf]
        %v3048 = vld [vmem:[#allocation7 + $0x124] sm:$0xf]
        %v3049 = vld [vmem:[#allocation7 + $0x128] sm:$0xf]
        %v3050 = vld [vmem:[#allocation7 + $0x12c] sm:$0xf]
        %v3051 = vld [vmem:[#allocation7 + $0x130] sm:$0xf]
        %v3052 = vld [vmem:[#allocation7 + $0x134] sm:$0xf]
        %v3053 = vld [vmem:[#allocation7 + $0x138] sm:$0xf]
        %v3054 = vld [vmem:[#allocation7 + $0x13c] sm:$0xf]
        %v3055 = vld [vmem:[#allocation7 + $0x140] sm:$0xf]
        %v3056 = vld [vmem:[#allocation7 + $0x144] sm:$0xf]
        %v3057 = vld [vmem:[#allocation7 + $0x148] sm:$0xf]
        %v3058 = vld [vmem:[#allocation7 + $0x14c] sm:$0xf]
        %v3059 = vld [vmem:[#allocation7 + $0x150] sm:$0xf]
        %v3060 = vld [vmem:[#allocation7 + $0x154] sm:$0xf]
        %v3061 = vld [vmem:[#allocation7 + $0x158] sm:$0xf]
        %v3062 = vld [vmem:[#allocation7 + $0x15c] sm:$0xf]
        %v3063 = vld [vmem:[#allocation7 + $0x160] sm:$0xf]
        %v3064 = vld [vmem:[#allocation7 + $0x164] sm:$0xf]
        %v3065 = vld [vmem:[#allocation7 + $0x168] sm:$0xf]
        %v3066 = vld [vmem:[#allocation7 + $0x16c] sm:$0xf]
        %v3067 = vld [vmem:[#allocation7 + $0x170] sm:$0xf]
        %v3068 = vld [vmem:[#allocation7 + $0x174] sm:$0xf]
        %v3069 = vld [vmem:[#allocation7 + $0x178] sm:$0xf]
        %v3070 = vld [vmem:[#allocation7 + $0x17c] sm:$0xf]
        %v3103 = vunpack.c.l.b16 %v3039
        %v3104 = vunpack.c.l.b16 %v3040
        %v3105 = vunpack.c.l.b16 %v3041
        %v3106 = vunpack.c.l.b16 %v3042
        %v3107 = vunpack.c.l.b16 %v3043
        %v3108 = vunpack.c.l.b16 %v3044
        %v3109 = vunpack.c.l.b16 %v3045
        %v3110 = vunpack.c.l.b16 %v3046
        %v3111 = vunpack.c.l.b16 %v3047
        %v3112 = vunpack.c.l.b16 %v3048
        %v3113 = vunpack.c.l.b16 %v3049
        %v3114 = vunpack.c.l.b16 %v3050
        %v3115 = vunpack.c.l.b16 %v3051
        %v3116 = vunpack.c.l.b16 %v3052
        %v3117 = vunpack.c.l.b16 %v3053
        %v3118 = vunpack.c.l.b16 %v3054
        %v3119 = vunpack.c.l.b16 %v3055
        %v3120 = vunpack.c.l.b16 %v3056
        %v3121 = vunpack.c.l.b16 %v3057
        %v3122 = vunpack.c.l.b16 %v3058
        %v3123 = vunpack.c.l.b16 %v3059
        %v3124 = vunpack.c.l.b16 %v3060
        %v3125 = vunpack.c.l.b16 %v3061
        %v3126 = vunpack.c.l.b16 %v3062
        %v3127 = vunpack.c.l.b16 %v3063
        %v3128 = vunpack.c.l.b16 %v3064
        %v3129 = vunpack.c.l.b16 %v3065
        %v3130 = vunpack.c.l.b16 %v3066
        %v3131 = vunpack.c.l.b16 %v3067
        %v3132 = vunpack.c.l.b16 %v3068
        %v3133 = vunpack.c.l.b16 %v3069
        %v3134 = vunpack.c.l.b16 %v3070
        %v3135 = vpack.c.b16 %v3104, %v3103
        %v3136 = vpack.c.b16 %v3106, %v3105
        %v3137 = vpack.c.b16 %v3108, %v3107
        %v3138 = vpack.c.b16 %v3110, %v3109
        %v3139 = vpack.c.b16 %v3112, %v3111
        %v3140 = vpack.c.b16 %v3114, %v3113
        %v3141 = vpack.c.b16 %v3116, %v3115
        %v3142 = vpack.c.b16 %v3118, %v3117
        %v3143 = vpack.c.b16 %v3120, %v3119
        %v3144 = vpack.c.b16 %v3122, %v3121
        %v3145 = vpack.c.b16 %v3124, %v3123
        %v3146 = vpack.c.b16 %v3126, %v3125
        %v3147 = vpack.c.b16 %v3128, %v3127
        %v3148 = vpack.c.b16 %v3130, %v3129
        %v3149 = vpack.c.b16 %v3132, %v3131
        %v3150 = vpack.c.b16 %v3134, %v3133
        %3167 = vmatpush.bf16.msra.mxu0 %v3142
        %3168 = vmatpush.bf16.msra.mxu0 %v3141
        %3169 = vmatpush.bf16.msra.mxu0 %v3140
        %3170 = vmatpush.bf16.msra.mxu0 %v3139
        %3171 = vmatpush.bf16.msra.mxu0 %v3138
        %3172 = vmatpush.bf16.msra.mxu0 %v3137
        %3173 = vmatpush.bf16.msra.mxu0 %v3136
        %3174 = vmatpush.bf16.msra.mxu0 %v3135
        %3175 = vmatmul.bf16.gmra.mxu0 %v3034
        %v3176 = vpop.f32.mrf.mxu0
        %v3177 = vadd.f32 0.0, %v3176
        %v3178 = vpop.f32.mrf.mxu0
        %v3179 = vadd.f32 0.0, %v3178
        %3180 = vdwg.mxu0
        %3181 = vmatpush.bf16.msra.mxu0 %v3150
        %3182 = vmatpush.bf16.msra.mxu0 %v3149
        %3183 = vmatpush.bf16.msra.mxu0 %v3148
        %3184 = vmatpush.bf16.msra.mxu0 %v3147
        %3185 = vmatpush.bf16.msra.mxu0 %v3146
        %3186 = vmatpush.bf16.msra.mxu0 %v3145
        %3187 = vmatpush.bf16.msra.mxu0 %v3144
        %3188 = vmatpush.bf16.msra.mxu0 %v3143
        %3189 = vmatmul.bf16.gmra.mxu0 %v3037
        %v3190 = vpop.f32.mrf.mxu0
        %v3191 = vadd.f32 %v3177, %v3190
        %v3192 = vpop.f32.mrf.mxu0
        %v3193 = vadd.f32 %v3179, %v3192
        %3194 = vdwg.mxu0
        %v3195 = vadd.f32 %v3027, %v3191
        %v3196 = vadd.f32 %v3029, %v3193
        %v3197 = vrot.slane %v2701, 1
        %v3198 = vrot.slane %v2704, 2
        %v3199 = vor.u32 %v3197, %v3198
        %v3201 = vsel %vm1133, %v3199, 0
        %v3202 = vld [vmem:[#allocation7 + $0x180] sm:$0xf]
        %v3203 = vld [vmem:[#allocation7 + $0x184] sm:$0xf]
        %v3204 = vld [vmem:[#allocation7 + $0x188] sm:$0xf]
        %v3205 = vld [vmem:[#allocation7 + $0x18c] sm:$0xf]
        %v3206 = vld [vmem:[#allocation7 + $0x190] sm:$0xf]
        %v3207 = vld [vmem:[#allocation7 + $0x194] sm:$0xf]
        %v3208 = vld [vmem:[#allocation7 + $0x198] sm:$0xf]
        %v3209 = vld [vmem:[#allocation7 + $0x19c] sm:$0xf]
        %v3210 = vld [vmem:[#allocation7 + $0x1a0] sm:$0xf]
        %v3211 = vld [vmem:[#allocation7 + $0x1a4] sm:$0xf]
        %v3212 = vld [vmem:[#allocation7 + $0x1a8] sm:$0xf]
        %v3213 = vld [vmem:[#allocation7 + $0x1ac] sm:$0xf]
        %v3214 = vld [vmem:[#allocation7 + $0x1b0] sm:$0xf]
        %v3215 = vld [vmem:[#allocation7 + $0x1b4] sm:$0xf]
        %v3216 = vld [vmem:[#allocation7 + $0x1b8] sm:$0xf]
        %v3217 = vld [vmem:[#allocation7 + $0x1bc] sm:$0xf]
        %v3234 = vunpack.c.l.b16 %v3202
        %v3235 = vunpack.c.l.b16 %v3203
        %v3236 = vunpack.c.l.b16 %v3204
        %v3237 = vunpack.c.l.b16 %v3205
        %v3238 = vunpack.c.l.b16 %v3206
        %v3239 = vunpack.c.l.b16 %v3207
        %v3240 = vunpack.c.l.b16 %v3208
        %v3241 = vunpack.c.l.b16 %v3209
        %v3242 = vunpack.c.l.b16 %v3210
        %v3243 = vunpack.c.l.b16 %v3211
        %v3244 = vunpack.c.l.b16 %v3212
        %v3245 = vunpack.c.l.b16 %v3213
        %v3246 = vunpack.c.l.b16 %v3214
        %v3247 = vunpack.c.l.b16 %v3215
        %v3248 = vunpack.c.l.b16 %v3216
        %v3249 = vunpack.c.l.b16 %v3217
        %v3250 = vpack.c.b16 %v3235, %v3234
        %v3251 = vpack.c.b16 %v3237, %v3236
        %v3252 = vpack.c.b16 %v3239, %v3238
        %v3253 = vpack.c.b16 %v3241, %v3240
        %v3254 = vpack.c.b16 %v3243, %v3242
        %v3255 = vpack.c.b16 %v3245, %v3244
        %v3256 = vpack.c.b16 %v3247, %v3246
        %v3257 = vpack.c.b16 %v3249, %v3248
        %3266 = vmatpush.bf16.msra.mxu0 %v3257
        %3267 = vmatpush.bf16.msra.mxu0 %v3256
        %3268 = vmatpush.bf16.msra.mxu0 %v3255
        %3269 = vmatpush.bf16.msra.mxu0 %v3254
        %3270 = vmatpush.bf16.msra.mxu0 %v3253
        %3271 = vmatpush.bf16.msra.mxu0 %v3252
        %3272 = vmatpush.bf16.msra.mxu0 %v3251
        %3273 = vmatpush.bf16.msra.mxu0 %v3250
        %3274 = vmatmul.bf16.gmra.mxu0 %v3201
        %v3275 = vpop.f32.mrf.mxu0
        %v3276 = vadd.f32 0.0, %v3275
        %v3277 = vpop.f32.mrf.mxu0
        %v3278 = vadd.f32 0.0, %v3277
        %3279 = vdwg.mxu0
        %v3280 = vadd.f32 %v3195, %v3276
        %v3281 = vadd.f32 %v3196, %v3278
        %v3282 = vld [vmem:[%s18] sm:$0x1]
        %v3284 = vperm.slane %v3282, 0
        %v3286 = vadd.f32 %v3280, %v3284
        %v3287 = vadd.f32 %v3281, %v3284
        %v3288 = vmax.f32 %v3286, 0.0
        %v3289 = vmax.f32 %v3287, 0.0
        %v3290 = vpack.c.bf16 %v3288, %v3288
        %v3291 = vpack.c.bf16 %v3289, %v3289
        %v3294 = vunpack.c.l.b16 %v3290
        %v3295 = vunpack.c.l.b16 %v3291
        %v3296 = vpack.c.b16 %v3295, %v3294
        %v3297 = vrot.slane %v3296, 7
        %v3299 = vsel %vm961, 0, %v3297
        %v3302 = vshrl.u32 %v3296, 16
        %v3304 = vrot.slane %v3302, 7
        %v3305 = vshll.u32 %v3296, 16
        %v3307 = vor.u32 %v3304, %v3305
        %v3309 = vsel %vm1016, 0, %v3307
        %v3310 = vld [vmem:[#allocation8] sm:$0xf]
        %v3311 = vld [vmem:[#allocation8 + $0x4] sm:$0xf]
        %v3312 = vld [vmem:[#allocation8 + $0x8] sm:$0xf]
        %v3313 = vld [vmem:[#allocation8 + $0xc] sm:$0xf]
        %v3314 = vld [vmem:[#allocation8 + $0x10] sm:$0xf]
        %v3315 = vld [vmem:[#allocation8 + $0x14] sm:$0xf]
        %v3316 = vld [vmem:[#allocation8 + $0x18] sm:$0xf]
        %v3317 = vld [vmem:[#allocation8 + $0x1c] sm:$0xf]
        %v3318 = vld [vmem:[#allocation8 + $0x20] sm:$0xf]
        %v3319 = vld [vmem:[#allocation8 + $0x24] sm:$0xf]
        %v3320 = vld [vmem:[#allocation8 + $0x28] sm:$0xf]
        %v3321 = vld [vmem:[#allocation8 + $0x2c] sm:$0xf]
        %v3322 = vld [vmem:[#allocation8 + $0x30] sm:$0xf]
        %v3323 = vld [vmem:[#allocation8 + $0x34] sm:$0xf]
        %v3324 = vld [vmem:[#allocation8 + $0x38] sm:$0xf]
        %v3325 = vld [vmem:[#allocation8 + $0x3c] sm:$0xf]
        %v3326 = vld [vmem:[#allocation8 + $0x40] sm:$0xf]
        %v3327 = vld [vmem:[#allocation8 + $0x44] sm:$0xf]
        %v3328 = vld [vmem:[#allocation8 + $0x48] sm:$0xf]
        %v3329 = vld [vmem:[#allocation8 + $0x4c] sm:$0xf]
        %v3330 = vld [vmem:[#allocation8 + $0x50] sm:$0xf]
        %v3331 = vld [vmem:[#allocation8 + $0x54] sm:$0xf]
        %v3332 = vld [vmem:[#allocation8 + $0x58] sm:$0xf]
        %v3333 = vld [vmem:[#allocation8 + $0x5c] sm:$0xf]
        %v3334 = vld [vmem:[#allocation8 + $0x60] sm:$0xf]
        %v3335 = vld [vmem:[#allocation8 + $0x64] sm:$0xf]
        %v3336 = vld [vmem:[#allocation8 + $0x68] sm:$0xf]
        %v3337 = vld [vmem:[#allocation8 + $0x6c] sm:$0xf]
        %v3338 = vld [vmem:[#allocation8 + $0x70] sm:$0xf]
        %v3339 = vld [vmem:[#allocation8 + $0x74] sm:$0xf]
        %v3340 = vld [vmem:[#allocation8 + $0x78] sm:$0xf]
        %v3341 = vld [vmem:[#allocation8 + $0x7c] sm:$0xf]
        %v3342 = vrot.slane %v3305, 1
        %v3343 = vor.u32 %v3302, %v3342
        %v3345 = vsel %vm1072, %v3343, 0
        %v3347 = vld [vmem:[#allocation8 + $0x80] sm:$0xf]
        %v3348 = vld [vmem:[#allocation8 + $0x84] sm:$0xf]
        %v3349 = vld [vmem:[#allocation8 + $0x88] sm:$0xf]
        %v3350 = vld [vmem:[#allocation8 + $0x8c] sm:$0xf]
        %v3351 = vld [vmem:[#allocation8 + $0x90] sm:$0xf]
        %v3352 = vld [vmem:[#allocation8 + $0x94] sm:$0xf]
        %v3353 = vld [vmem:[#allocation8 + $0x98] sm:$0xf]
        %v3354 = vld [vmem:[#allocation8 + $0x9c] sm:$0xf]
        %v3355 = vld [vmem:[#allocation8 + $0xa0] sm:$0xf]
        %v3356 = vld [vmem:[#allocation8 + $0xa4] sm:$0xf]
        %v3357 = vld [vmem:[#allocation8 + $0xa8] sm:$0xf]
        %v3358 = vld [vmem:[#allocation8 + $0xac] sm:$0xf]
        %v3359 = vld [vmem:[#allocation8 + $0xb0] sm:$0xf]
        %v3360 = vld [vmem:[#allocation8 + $0xb4] sm:$0xf]
        %v3361 = vld [vmem:[#allocation8 + $0xb8] sm:$0xf]
        %v3362 = vld [vmem:[#allocation8 + $0xbc] sm:$0xf]
        %v3363 = vld [vmem:[#allocation8 + $0xc0] sm:$0xf]
        %v3364 = vld [vmem:[#allocation8 + $0xc4] sm:$0xf]
        %v3365 = vld [vmem:[#allocation8 + $0xc8] sm:$0xf]
        %v3366 = vld [vmem:[#allocation8 + $0xcc] sm:$0xf]
        %v3367 = vld [vmem:[#allocation8 + $0xd0] sm:$0xf]
        %v3368 = vld [vmem:[#allocation8 + $0xd4] sm:$0xf]
        %v3369 = vld [vmem:[#allocation8 + $0xd8] sm:$0xf]
        %v3370 = vld [vmem:[#allocation8 + $0xdc] sm:$0xf]
        %v3371 = vld [vmem:[#allocation8 + $0xe0] sm:$0xf]
        %v3372 = vld [vmem:[#allocation8 + $0xe4] sm:$0xf]
        %v3373 = vld [vmem:[#allocation8 + $0xe8] sm:$0xf]
        %v3374 = vld [vmem:[#allocation8 + $0xec] sm:$0xf]
        %v3375 = vld [vmem:[#allocation8 + $0xf0] sm:$0xf]
        %v3376 = vld [vmem:[#allocation8 + $0xf4] sm:$0xf]
        %v3377 = vld [vmem:[#allocation8 + $0xf8] sm:$0xf]
        %v3378 = vld [vmem:[#allocation8 + $0xfc] sm:$0xf]
        %v3411 = vunpack.c.l.b16 %v3347
        %v3412 = vunpack.c.l.b16 %v3348
        %v3413 = vunpack.c.l.b16 %v3349
        %v3414 = vunpack.c.l.b16 %v3350
        %v3415 = vunpack.c.l.b16 %v3351
        %v3416 = vunpack.c.l.b16 %v3352
        %v3417 = vunpack.c.l.b16 %v3353
        %v3418 = vunpack.c.l.b16 %v3354
        %v3419 = vunpack.c.l.b16 %v3355
        %v3420 = vunpack.c.l.b16 %v3356
        %v3421 = vunpack.c.l.b16 %v3357
        %v3422 = vunpack.c.l.b16 %v3358
        %v3423 = vunpack.c.l.b16 %v3359
        %v3424 = vunpack.c.l.b16 %v3360
        %v3425 = vunpack.c.l.b16 %v3361
        %v3426 = vunpack.c.l.b16 %v3362
        %v3427 = vunpack.c.l.b16 %v3363
        %v3428 = vunpack.c.l.b16 %v3364
        %v3429 = vunpack.c.l.b16 %v3365
        %v3430 = vunpack.c.l.b16 %v3366
        %v3431 = vunpack.c.l.b16 %v3367
        %v3432 = vunpack.c.l.b16 %v3368
        %v3433 = vunpack.c.l.b16 %v3369
        %v3434 = vunpack.c.l.b16 %v3370
        %v3435 = vunpack.c.l.b16 %v3371
        %v3436 = vunpack.c.l.b16 %v3372
        %v3437 = vunpack.c.l.b16 %v3373
        %v3438 = vunpack.c.l.b16 %v3374
        %v3439 = vunpack.c.l.b16 %v3375
        %v3440 = vunpack.c.l.b16 %v3376
        %v3441 = vunpack.c.l.b16 %v3377
        %v3442 = vunpack.c.l.b16 %v3378
        %v3443 = vpack.c.b16 %v3412, %v3411
        %v3444 = vpack.c.b16 %v3414, %v3413
        %v3445 = vpack.c.b16 %v3416, %v3415
        %v3446 = vpack.c.b16 %v3418, %v3417
        %v3447 = vpack.c.b16 %v3420, %v3419
        %v3448 = vpack.c.b16 %v3422, %v3421
        %v3449 = vpack.c.b16 %v3424, %v3423
        %v3450 = vpack.c.b16 %v3426, %v3425
        %v3451 = vpack.c.b16 %v3428, %v3427
        %v3452 = vpack.c.b16 %v3430, %v3429
        %v3453 = vpack.c.b16 %v3432, %v3431
        %v3454 = vpack.c.b16 %v3434, %v3433
        %v3455 = vpack.c.b16 %v3436, %v3435
        %v3456 = vpack.c.b16 %v3438, %v3437
        %v3457 = vpack.c.b16 %v3440, %v3439
        %v3458 = vpack.c.b16 %v3442, %v3441
        %3475 = vmatpush.bf16.msra.mxu0 %v3450
        %3476 = vmatpush.bf16.msra.mxu0 %v3449
        %3477 = vmatpush.bf16.msra.mxu0 %v3448
        %3478 = vmatpush.bf16.msra.mxu0 %v3447
        %3479 = vmatpush.bf16.msra.mxu0 %v3446
        %3480 = vmatpush.bf16.msra.mxu0 %v3445
        %3481 = vmatpush.bf16.msra.mxu0 %v3444
        %3482 = vmatpush.bf16.msra.mxu0 %v3443
        %3483 = vmatmul.bf16.gmra.mxu0 %v3296
        %v3484 = vpop.f32.mrf.mxu0
        %v3485 = vadd.f32 0.0, %v3484
        %v3486 = vpop.f32.mrf.mxu0
        %v3487 = vadd.f32 0.0, %v3486
        %3488 = vdwg.mxu0
        %3489 = vmatpush.bf16.msra.mxu0 %v3458
        %3490 = vmatpush.bf16.msra.mxu0 %v3457
        %3491 = vmatpush.bf16.msra.mxu0 %v3456
        %3492 = vmatpush.bf16.msra.mxu0 %v3455
        %3493 = vmatpush.bf16.msra.mxu0 %v3454
        %3494 = vmatpush.bf16.msra.mxu0 %v3453
        %3495 = vmatpush.bf16.msra.mxu0 %v3452
        %3496 = vmatpush.bf16.msra.mxu0 %v3451
        %3497 = vmatmul.bf16.gmra.mxu0 %v3345
        %v3498 = vpop.f32.mrf.mxu0
        %v3499 = vadd.f32 %v3485, %v3498
        %v3500 = vpop.f32.mrf.mxu0
        %v3501 = vadd.f32 %v3487, %v3500
        %3502 = vdwg.mxu0
        %v3535 = vunpack.c.l.b16 %v3310
        %v3536 = vunpack.c.l.b16 %v3311
        %v3537 = vunpack.c.l.b16 %v3312
        %v3538 = vunpack.c.l.b16 %v3313
        %v3539 = vunpack.c.l.b16 %v3314
        %v3540 = vunpack.c.l.b16 %v3315
        %v3541 = vunpack.c.l.b16 %v3316
        %v3542 = vunpack.c.l.b16 %v3317
        %v3543 = vunpack.c.l.b16 %v3318
        %v3544 = vunpack.c.l.b16 %v3319
        %v3545 = vunpack.c.l.b16 %v3320
        %v3546 = vunpack.c.l.b16 %v3321
        %v3547 = vunpack.c.l.b16 %v3322
        %v3548 = vunpack.c.l.b16 %v3323
        %v3549 = vunpack.c.l.b16 %v3324
        %v3550 = vunpack.c.l.b16 %v3325
        %v3551 = vunpack.c.l.b16 %v3326
        %v3552 = vunpack.c.l.b16 %v3327
        %v3553 = vunpack.c.l.b16 %v3328
        %v3554 = vunpack.c.l.b16 %v3329
        %v3555 = vunpack.c.l.b16 %v3330
        %v3556 = vunpack.c.l.b16 %v3331
        %v3557 = vunpack.c.l.b16 %v3332
        %v3558 = vunpack.c.l.b16 %v3333
        %v3559 = vunpack.c.l.b16 %v3334
        %v3560 = vunpack.c.l.b16 %v3335
        %v3561 = vunpack.c.l.b16 %v3336
        %v3562 = vunpack.c.l.b16 %v3337
        %v3563 = vunpack.c.l.b16 %v3338
        %v3564 = vunpack.c.l.b16 %v3339
        %v3565 = vunpack.c.l.b16 %v3340
        %v3566 = vunpack.c.l.b16 %v3341
        %v3567 = vpack.c.b16 %v3536, %v3535
        %v3568 = vpack.c.b16 %v3538, %v3537
        %v3569 = vpack.c.b16 %v3540, %v3539
        %v3570 = vpack.c.b16 %v3542, %v3541
        %v3571 = vpack.c.b16 %v3544, %v3543
        %v3572 = vpack.c.b16 %v3546, %v3545
        %v3573 = vpack.c.b16 %v3548, %v3547
        %v3574 = vpack.c.b16 %v3550, %v3549
        %v3575 = vpack.c.b16 %v3552, %v3551
        %v3576 = vpack.c.b16 %v3554, %v3553
        %v3577 = vpack.c.b16 %v3556, %v3555
        %v3578 = vpack.c.b16 %v3558, %v3557
        %v3579 = vpack.c.b16 %v3560, %v3559
        %v3580 = vpack.c.b16 %v3562, %v3561
        %v3581 = vpack.c.b16 %v3564, %v3563
        %v3582 = vpack.c.b16 %v3566, %v3565
        %3599 = vmatpush.bf16.msra.mxu0 %v3574
        %3600 = vmatpush.bf16.msra.mxu0 %v3573
        %3601 = vmatpush.bf16.msra.mxu0 %v3572
        %3602 = vmatpush.bf16.msra.mxu0 %v3571
        %3603 = vmatpush.bf16.msra.mxu0 %v3570
        %3604 = vmatpush.bf16.msra.mxu0 %v3569
        %3605 = vmatpush.bf16.msra.mxu0 %v3568
        %3606 = vmatpush.bf16.msra.mxu0 %v3567
        %3607 = vmatmul.bf16.gmra.mxu0 %v3299
        %v3608 = vpop.f32.mrf.mxu0
        %v3609 = vadd.f32 %v3499, %v3608
        %v3610 = vpop.f32.mrf.mxu0
        %v3611 = vadd.f32 %v3501, %v3610
        %3612 = vdwg.mxu0
        %3613 = vmatpush.bf16.msra.mxu0 %v3582
        %3614 = vmatpush.bf16.msra.mxu0 %v3581
        %3615 = vmatpush.bf16.msra.mxu0 %v3580
        %3616 = vmatpush.bf16.msra.mxu0 %v3579
        %3617 = vmatpush.bf16.msra.mxu0 %v3578
        %3618 = vmatpush.bf16.msra.mxu0 %v3577
        %3619 = vmatpush.bf16.msra.mxu0 %v3576
        %3620 = vmatpush.bf16.msra.mxu0 %v3575
        %3621 = vmatmul.bf16.gmra.mxu0 %v3309
        %v3622 = vpop.f32.mrf.mxu0
        %v3623 = vadd.f32 %v3609, %v3622
        %v3624 = vpop.f32.mrf.mxu0
        %v3625 = vadd.f32 %v3611, %v3624
        %3626 = vdwg.mxu0
        %v3627 = vrot.slane %v3296, 1
        %v3629 = vsel %vm1098, %v3627, 0
        %v3631 = vld [vmem:[#allocation8 + $0x100] sm:$0xf]
        %v3632 = vld [vmem:[#allocation8 + $0x104] sm:$0xf]
        %v3633 = vld [vmem:[#allocation8 + $0x108] sm:$0xf]
        %v3634 = vld [vmem:[#allocation8 + $0x10c] sm:$0xf]
        %v3635 = vld [vmem:[#allocation8 + $0x110] sm:$0xf]
        %v3636 = vld [vmem:[#allocation8 + $0x114] sm:$0xf]
        %v3637 = vld [vmem:[#allocation8 + $0x118] sm:$0xf]
        %v3638 = vld [vmem:[#allocation8 + $0x11c] sm:$0xf]
        %v3639 = vld [vmem:[#allocation8 + $0x120] sm:$0xf]
        %v3640 = vld [vmem:[#allocation8 + $0x124] sm:$0xf]
        %v3641 = vld [vmem:[#allocation8 + $0x128] sm:$0xf]
        %v3642 = vld [vmem:[#allocation8 + $0x12c] sm:$0xf]
        %v3643 = vld [vmem:[#allocation8 + $0x130] sm:$0xf]
        %v3644 = vld [vmem:[#allocation8 + $0x134] sm:$0xf]
        %v3645 = vld [vmem:[#allocation8 + $0x138] sm:$0xf]
        %v3646 = vld [vmem:[#allocation8 + $0x13c] sm:$0xf]
        %v3663 = vunpack.c.l.b16 %v3631
        %v3664 = vunpack.c.l.b16 %v3632
        %v3665 = vunpack.c.l.b16 %v3633
        %v3666 = vunpack.c.l.b16 %v3634
        %v3667 = vunpack.c.l.b16 %v3635
        %v3668 = vunpack.c.l.b16 %v3636
        %v3669 = vunpack.c.l.b16 %v3637
        %v3670 = vunpack.c.l.b16 %v3638
        %v3671 = vunpack.c.l.b16 %v3639
        %v3672 = vunpack.c.l.b16 %v3640
        %v3673 = vunpack.c.l.b16 %v3641
        %v3674 = vunpack.c.l.b16 %v3642
        %v3675 = vunpack.c.l.b16 %v3643
        %v3676 = vunpack.c.l.b16 %v3644
        %v3677 = vunpack.c.l.b16 %v3645
        %v3678 = vunpack.c.l.b16 %v3646
        %v3679 = vpack.c.b16 %v3664, %v3663
        %v3680 = vpack.c.b16 %v3666, %v3665
        %v3681 = vpack.c.b16 %v3668, %v3667
        %v3682 = vpack.c.b16 %v3670, %v3669
        %v3683 = vpack.c.b16 %v3672, %v3671
        %v3684 = vpack.c.b16 %v3674, %v3673
        %v3685 = vpack.c.b16 %v3676, %v3675
        %v3686 = vpack.c.b16 %v3678, %v3677
        %3695 = vmatpush.bf16.msra.mxu0 %v3686
        %3696 = vmatpush.bf16.msra.mxu0 %v3685
        %3697 = vmatpush.bf16.msra.mxu0 %v3684
        %3698 = vmatpush.bf16.msra.mxu0 %v3683
        %3699 = vmatpush.bf16.msra.mxu0 %v3682
        %3700 = vmatpush.bf16.msra.mxu0 %v3681
        %3701 = vmatpush.bf16.msra.mxu0 %v3680
        %3702 = vmatpush.bf16.msra.mxu0 %v3679
        %3703 = vmatmul.bf16.gmra.mxu0 %v3629
        %v3704 = vpop.f32.mrf.mxu0
        %v3705 = vadd.f32 0.0, %v3704
        %v3706 = vpop.f32.mrf.mxu0
        %v3707 = vadd.f32 0.0, %v3706
        %3708 = vdwg.mxu0
        %v3709 = vadd.f32 %v3623, %v3705
        %v3710 = vadd.f32 %v3625, %v3707
        %v3711 = vld [vmem:[%s20] sm:$0x1]
        %v3713 = vperm.slane %v3711, 0
        %v3715 = vadd.f32 %v3709, %v3713
        %v3716 = vadd.f32 %v3710, %v3713
        %v3717 = vmax.f32 %v3715, 0.0
        %v3718 = vmax.f32 %v3716, 0.0
        %v3719 = vpack.c.bf16 %v3717, %v3717
        %v3720 = vpack.c.bf16 %v3718, %v3718
        %v3723 = vunpack.c.l.b16 %v3719
        %v3724 = vunpack.c.l.b16 %v3720
        %v3725 = vpack.c.b16 %v3724, %v3723
        %v3727 = vshrl.u32 %v3725, 16
        %v3729 = vrot.slane %v3727, 7
        %v3730 = vshll.u32 %v3725, 16
        %v3732 = vor.u32 %v3729, %v3730
        %v3734 = vsel %vm1016, 0, %v3732
        %v3736 = vld [vmem:[#allocation10] sm:$0xf]
        %v3737 = vld [vmem:[#allocation10 + $0x4] sm:$0xf]
        %v3738 = vld [vmem:[#allocation10 + $0x8] sm:$0xf]
        %v3739 = vld [vmem:[#allocation10 + $0xc] sm:$0xf]
        %v3740 = vld [vmem:[#allocation10 + $0x10] sm:$0xf]
        %v3741 = vld [vmem:[#allocation10 + $0x14] sm:$0xf]
        %v3742 = vld [vmem:[#allocation10 + $0x18] sm:$0xf]
        %v3743 = vld [vmem:[#allocation10 + $0x1c] sm:$0xf]
        %v3744 = vld [vmem:[#allocation10 + $0x20] sm:$0xf]
        %v3745 = vld [vmem:[#allocation10 + $0x24] sm:$0xf]
        %v3746 = vld [vmem:[#allocation10 + $0x28] sm:$0xf]
        %v3747 = vld [vmem:[#allocation10 + $0x2c] sm:$0xf]
        %v3748 = vld [vmem:[#allocation10 + $0x30] sm:$0xf]
        %v3749 = vld [vmem:[#allocation10 + $0x34] sm:$0xf]
        %v3750 = vld [vmem:[#allocation10 + $0x38] sm:$0xf]
        %v3751 = vld [vmem:[#allocation10 + $0x3c] sm:$0xf]
        %v3752 = vld [vmem:[#allocation10 + $0x40] sm:$0xf]
        %v3753 = vld [vmem:[#allocation10 + $0x44] sm:$0xf]
        %v3754 = vld [vmem:[#allocation10 + $0x48] sm:$0xf]
        %v3755 = vld [vmem:[#allocation10 + $0x4c] sm:$0xf]
        %v3756 = vld [vmem:[#allocation10 + $0x50] sm:$0xf]
        %v3757 = vld [vmem:[#allocation10 + $0x54] sm:$0xf]
        %v3758 = vld [vmem:[#allocation10 + $0x58] sm:$0xf]
        %v3759 = vld [vmem:[#allocation10 + $0x5c] sm:$0xf]
        %v3760 = vld [vmem:[#allocation10 + $0x60] sm:$0xf]
        %v3761 = vld [vmem:[#allocation10 + $0x64] sm:$0xf]
        %v3762 = vld [vmem:[#allocation10 + $0x68] sm:$0xf]
        %v3763 = vld [vmem:[#allocation10 + $0x6c] sm:$0xf]
        %v3764 = vld [vmem:[#allocation10 + $0x70] sm:$0xf]
        %v3765 = vld [vmem:[#allocation10 + $0x74] sm:$0xf]
        %v3766 = vld [vmem:[#allocation10 + $0x78] sm:$0xf]
        %v3767 = vld [vmem:[#allocation10 + $0x7c] sm:$0xf]
        %v3768 = vrot.slane %v3730, 1
        %v3769 = vor.u32 %v3727, %v3768
        %v3771 = vsel %vm1072, %v3769, 0
        %v3772 = vld [vmem:[#allocation10 + $0x80] sm:$0xf]
        %v3773 = vld [vmem:[#allocation10 + $0x84] sm:$0xf]
        %v3774 = vld [vmem:[#allocation10 + $0x88] sm:$0xf]
        %v3775 = vld [vmem:[#allocation10 + $0x8c] sm:$0xf]
        %v3776 = vld [vmem:[#allocation10 + $0x90] sm:$0xf]
        %v3777 = vld [vmem:[#allocation10 + $0x94] sm:$0xf]
        %v3778 = vld [vmem:[#allocation10 + $0x98] sm:$0xf]
        %v3779 = vld [vmem:[#allocation10 + $0x9c] sm:$0xf]
        %v3780 = vld [vmem:[#allocation10 + $0xa0] sm:$0xf]
        %v3781 = vld [vmem:[#allocation10 + $0xa4] sm:$0xf]
        %v3782 = vld [vmem:[#allocation10 + $0xa8] sm:$0xf]
        %v3783 = vld [vmem:[#allocation10 + $0xac] sm:$0xf]
        %v3784 = vld [vmem:[#allocation10 + $0xb0] sm:$0xf]
        %v3785 = vld [vmem:[#allocation10 + $0xb4] sm:$0xf]
        %v3786 = vld [vmem:[#allocation10 + $0xb8] sm:$0xf]
        %v3787 = vld [vmem:[#allocation10 + $0xbc] sm:$0xf]
        %v3804 = vunpack.c.l.b16 %v3772
        %v3805 = vunpack.c.l.b16 %v3773
        %v3806 = vunpack.c.l.b16 %v3774
        %v3807 = vunpack.c.l.b16 %v3775
        %v3808 = vunpack.c.l.b16 %v3776
        %v3809 = vunpack.c.l.b16 %v3777
        %v3810 = vunpack.c.l.b16 %v3778
        %v3811 = vunpack.c.l.b16 %v3779
        %v3812 = vunpack.c.l.b16 %v3780
        %v3813 = vunpack.c.l.b16 %v3781
        %v3814 = vunpack.c.l.b16 %v3782
        %v3815 = vunpack.c.l.b16 %v3783
        %v3816 = vunpack.c.l.b16 %v3784
        %v3817 = vunpack.c.l.b16 %v3785
        %v3818 = vunpack.c.l.b16 %v3786
        %v3819 = vunpack.c.l.b16 %v3787
        %v3820 = vpack.c.b16 %v3805, %v3804
        %v3821 = vpack.c.b16 %v3807, %v3806
        %v3822 = vpack.c.b16 %v3809, %v3808
        %v3823 = vpack.c.b16 %v3811, %v3810
        %v3824 = vpack.c.b16 %v3813, %v3812
        %v3825 = vpack.c.b16 %v3815, %v3814
        %v3826 = vpack.c.b16 %v3817, %v3816
        %v3827 = vpack.c.b16 %v3819, %v3818
        %3836 = vmatpush.bf16.msra.mxu0 %v3827
        %3837 = vmatpush.bf16.msra.mxu0 %v3826
        %3838 = vmatpush.bf16.msra.mxu0 %v3825
        %3839 = vmatpush.bf16.msra.mxu0 %v3824
        %3840 = vmatpush.bf16.msra.mxu0 %v3823
        %3841 = vmatpush.bf16.msra.mxu0 %v3822
        %3842 = vmatpush.bf16.msra.mxu0 %v3821
        %3843 = vmatpush.bf16.msra.mxu0 %v3820
        %3844 = vmatmul.bf16.gmra.mxu0 %v3771
        %v3845 = vpop.f32.mrf.mxu0
        %v3846 = vadd.f32 0.0, %v3845
        %v3847 = vpop.f32.mrf.mxu0
        %v3848 = vadd.f32 0.0, %v3847
        %3849 = vdwg.mxu0
        %v3882 = vunpack.c.l.b16 %v3736
        %v3883 = vunpack.c.l.b16 %v3737
        %v3884 = vunpack.c.l.b16 %v3738
        %v3885 = vunpack.c.l.b16 %v3739
        %v3886 = vunpack.c.l.b16 %v3740
        %v3887 = vunpack.c.l.b16 %v3741
        %v3888 = vunpack.c.l.b16 %v3742
        %v3889 = vunpack.c.l.b16 %v3743
        %v3890 = vunpack.c.l.b16 %v3744
        %v3891 = vunpack.c.l.b16 %v3745
        %v3892 = vunpack.c.l.b16 %v3746
        %v3893 = vunpack.c.l.b16 %v3747
        %v3894 = vunpack.c.l.b16 %v3748
        %v3895 = vunpack.c.l.b16 %v3749
        %v3896 = vunpack.c.l.b16 %v3750
        %v3897 = vunpack.c.l.b16 %v3751
        %v3898 = vunpack.c.l.b16 %v3752
        %v3899 = vunpack.c.l.b16 %v3753
        %v3900 = vunpack.c.l.b16 %v3754
        %v3901 = vunpack.c.l.b16 %v3755
        %v3902 = vunpack.c.l.b16 %v3756
        %v3903 = vunpack.c.l.b16 %v3757
        %v3904 = vunpack.c.l.b16 %v3758
        %v3905 = vunpack.c.l.b16 %v3759
        %v3906 = vunpack.c.l.b16 %v3760
        %v3907 = vunpack.c.l.b16 %v3761
        %v3908 = vunpack.c.l.b16 %v3762
        %v3909 = vunpack.c.l.b16 %v3763
        %v3910 = vunpack.c.l.b16 %v3764
        %v3911 = vunpack.c.l.b16 %v3765
        %v3912 = vunpack.c.l.b16 %v3766
        %v3913 = vunpack.c.l.b16 %v3767
        %v3914 = vpack.c.b16 %v3883, %v3882
        %v3915 = vpack.c.b16 %v3885, %v3884
        %v3916 = vpack.c.b16 %v3887, %v3886
        %v3917 = vpack.c.b16 %v3889, %v3888
        %v3918 = vpack.c.b16 %v3891, %v3890
        %v3919 = vpack.c.b16 %v3893, %v3892
        %v3920 = vpack.c.b16 %v3895, %v3894
        %v3921 = vpack.c.b16 %v3897, %v3896
        %v3922 = vpack.c.b16 %v3899, %v3898
        %v3923 = vpack.c.b16 %v3901, %v3900
        %v3924 = vpack.c.b16 %v3903, %v3902
        %v3925 = vpack.c.b16 %v3905, %v3904
        %v3926 = vpack.c.b16 %v3907, %v3906
        %v3927 = vpack.c.b16 %v3909, %v3908
        %v3928 = vpack.c.b16 %v3911, %v3910
        %v3929 = vpack.c.b16 %v3913, %v3912
        %3946 = vmatpush.bf16.msra.mxu0 %v3921
        %3947 = vmatpush.bf16.msra.mxu0 %v3920
        %3948 = vmatpush.bf16.msra.mxu0 %v3919
        %3949 = vmatpush.bf16.msra.mxu0 %v3918
        %3950 = vmatpush.bf16.msra.mxu0 %v3917
        %3951 = vmatpush.bf16.msra.mxu0 %v3916
        %3952 = vmatpush.bf16.msra.mxu0 %v3915
        %3953 = vmatpush.bf16.msra.mxu0 %v3914
        %3954 = vmatmul.bf16.gmra.mxu0 %v3734
        %v3955 = vpop.f32.mrf.mxu0
        %v3956 = vadd.f32 %v3846, %v3955
        %v3957 = vpop.f32.mrf.mxu0
        %v3958 = vadd.f32 %v3848, %v3957
        %3959 = vdwg.mxu0
        %3960 = vmatpush.bf16.msra.mxu0 %v3929
        %3961 = vmatpush.bf16.msra.mxu0 %v3928
        %3962 = vmatpush.bf16.msra.mxu0 %v3927
        %3963 = vmatpush.bf16.msra.mxu0 %v3926
        %3964 = vmatpush.bf16.msra.mxu0 %v3925
        %3965 = vmatpush.bf16.msra.mxu0 %v3924
        %3966 = vmatpush.bf16.msra.mxu0 %v3923
        %3967 = vmatpush.bf16.msra.mxu0 %v3922
        %3968 = vmatmul.bf16.gmra.mxu0 %v3725
        %v3969 = vpop.f32.mrf.mxu0
        %v3970 = vadd.f32 %v3956, %v3969
        %v3971 = vpop.f32.mrf.mxu0
        %v3972 = vadd.f32 %v3958, %v3971
        %3973 = vdwg.mxu0
        %v3974 = vld [vmem:[%s22] sm:$0x1]
        %v3976 = vperm.slane %v3974, 0
        %v3978 = vadd.f32 %v3970, %v3976
        %v3979 = vadd.f32 %v3972, %v3976
        %v3980 = vld [vmem:[%s23] sm:$0x1]
        %v3982 = vperm.slane %v3980, 0
        %v3984 = vmul.f32 %v2691, %v3982
        %v3985 = vmul.f32 %v2692, %v3982
        %v3986 = vld [vmem:[%s24] sm:$0x1]
        %v3988 = vperm.slane %v3986, 0
        %v3990 = vadd.f32 %v3984, %v3988
        %v3991 = vadd.f32 %v3985, %v3988
        %v3992 = vadd.f32 %v3978, %v3990
        %v3993 = vadd.f32 %v3979, %v3991
        %v3994 = vmax.f32 %v3992, 0.0
        %v3995 = vmax.f32 %v3993, 0.0
        %v3996 = vadd.f32 %v3994, %v3995
        %v3997 = vrot.slane %v3996, 4
        %v3998 = vadd.f32 %v3996, %v3997
        %v3999 = vrot.slane %v3998, 2
        %v4000 = vadd.f32 %v3998, %v3999
        %v4001 = vrot.slane %v4000, 1
        %v4002 = vadd.f32 %v4000, %v4001
        %v4003 = vrcp.pop 16.0
        %v4004 = vmul.f32 16.0, %v4003
        %v4005 = vsub.f32 1.0, %v4004
        %v4006 = vmul.f32 %v4003, %v4005
        %v4007 = vadd.f32 %v4003, %v4006
        %vm4008 = vweird.f32 %v4003
        %v4009 = vsel %vm4008, %v4003, %v4007
        %v4010 = vmul.f32 %v4002, %v4009
        %v4011 = vpack.c.bf16 %v4010, %v4010
        %v4012 = vld [vmem:[%s25] sm:$0xf]
        %v4013 = vld [vmem:[%s25 + $0x4] sm:$0xf]
        %v4014 = vld [vmem:[%s25 + $0x8] sm:$0xf]
        %v4015 = vld [vmem:[%s25 + $0xc] sm:$0xf]
        %v4016 = vld [vmem:[%s25 + $0x10] sm:$0xf]
        %v4017 = vld [vmem:[%s25 + $0x14] sm:$0xf]
        %v4018 = vld [vmem:[%s25 + $0x18] sm:$0xf]
        %v4019 = vld [vmem:[%s25 + $0x1c] sm:$0xf]
        %v4020 = vld [vmem:[%s25 + $0x20] sm:$0xf]
        %v4021 = vld [vmem:[%s25 + $0x24] sm:$0xf]
        %v4022 = vld [vmem:[%s25 + $0x28] sm:$0xf]
        %v4023 = vld [vmem:[%s25 + $0x2c] sm:$0xf]
        %v4024 = vld [vmem:[%s25 + $0x30] sm:$0xf]
        %v4025 = vld [vmem:[%s25 + $0x34] sm:$0xf]
        %v4026 = vld [vmem:[%s25 + $0x38] sm:$0xf]
        %v4027 = vld [vmem:[%s25 + $0x3c] sm:$0xf]
        %v4028 = vld [vmem:[%s26] sm:$0x1]
        %v4045 = vunpack.c.l.b16 %v4012
        %v4046 = vunpack.c.l.b16 %v4013
        %v4047 = vunpack.c.l.b16 %v4014
        %v4048 = vunpack.c.l.b16 %v4015
        %v4049 = vunpack.c.l.b16 %v4016
        %v4050 = vunpack.c.l.b16 %v4017
        %v4051 = vunpack.c.l.b16 %v4018
        %v4052 = vunpack.c.l.b16 %v4019
        %v4053 = vunpack.c.l.b16 %v4020
        %v4054 = vunpack.c.l.b16 %v4021
        %v4055 = vunpack.c.l.b16 %v4022
        %v4056 = vunpack.c.l.b16 %v4023
        %v4057 = vunpack.c.l.b16 %v4024
        %v4058 = vunpack.c.l.b16 %v4025
        %v4059 = vunpack.c.l.b16 %v4026
        %v4060 = vunpack.c.l.b16 %v4027
        %v4061 = vpack.c.b16 %v4046, %v4045
        %v4062 = vpack.c.b16 %v4048, %v4047
        %v4063 = vpack.c.b16 %v4050, %v4049
        %v4064 = vpack.c.b16 %v4052, %v4051
        %v4065 = vpack.c.b16 %v4054, %v4053
        %v4066 = vpack.c.b16 %v4056, %v4055
        %v4067 = vpack.c.b16 %v4058, %v4057
        %v4068 = vpack.c.b16 %v4060, %v4059
        %4077 = vmatpush.bf16.msra.mxu0 %v4068
        %4078 = vmatpush.bf16.msra.mxu0 %v4067
        %4079 = vmatpush.bf16.msra.mxu0 %v4066
        %4080 = vmatpush.bf16.msra.mxu0 %v4065
        %4081 = vmatpush.bf16.msra.mxu0 %v4064
        %4082 = vmatpush.bf16.msra.mxu0 %v4063
        %4083 = vmatpush.bf16.msra.mxu0 %v4062
        %4084 = vmatpush.bf16.msra.mxu0 %v4061
        %4085 = vmatmul.bf16.gmra.mxu0 %v4011
        %v4086 = vpop.f32.mrf.mxu0
        %v4087 = vadd.f32 %v4028, %v4086
        %v4088 = vpop.f32.mrf.mxu0
        %4089 = vdwg.mxu0
        %4090 = vst [vmem:[%s924] sm:$0x1] %v4010
        %4091 = vst [vmem:[%s930] sm:$0x1] %v4087
        %s4092 = sand.u32 %s629, 1
        %s4093 = scalar_lea.sflag [#allocation4], %s4092
        %s4094 = sand.u32 %s629, 1
        %s4095 = scalar_lea.vmem [#allocation11], %s4094
        %s4096 = sand.u32 %s655, 1
        %s4097 = scalar_lea.sflag [#allocation13], %s4096
        %s4098 = sand.u32 %s655, 1
        %s4099 = scalar_lea.vmem [#allocation12], %s4098
        // Predicated region
        $region149: #{resnet_forward.1} parent=127 // pred_check
          %p4100 = pneg %p639
        $region150: #{resnet_forward.1} parent=127 // pred_check_branch
          %4102 = sbr.rel (%p4100) target = $region152
        $region151: #{resnet_forward.1} parent=127 // pred_region
          %4104 = vsyncadd %s4093, 0
          %s4105 = scalar_lea.hbm %s27, %s49
          %s4107 = sshll.u32 %s4095, 4
          %s4108 = int_to_ptr.vmem [resolvable:$true] %s4107
          %s4109 = sshll.u32 %s4105, 4
          %s4110 = int_to_ptr.hbm [resolvable:$true] %s4109
          %4112 = dma.vmem_to_hbm [thread:$0]  %s4108, 16, %s4110, %s4093
        $region152: #{resnet_forward.1} parent=127 // pred_fallthru
          _
        // Predicated region
        $region153: #{resnet_forward.1} parent=127 // pred_check
          %p4113 = pneg %p665
        $region154: #{resnet_forward.1} parent=127 // pred_check_branch
          %4115 = sbr.rel (%p4113) target = $region156
        $region155: #{resnet_forward.1} parent=127 // pred_region
          %4117 = vsyncadd %s4097, 0
          %s4118 = scalar_lea.hbm %s28, %s49
          %s4120 = sshll.u32 %s4099, 4
          %s4121 = int_to_ptr.vmem [resolvable:$true] %s4120
          %s4122 = sshll.u32 %s4118, 4
          %s4123 = int_to_ptr.hbm [resolvable:$true] %s4122
          %4125 = dma.vmem_to_hbm [thread:$0]  %s4121, 16, %s4123, %s4097
        $region156: #{resnet_forward.1} parent=127 // pred_fallthru
          _
      $region128: #{resnet_forward.1} parent=5 // pred_fallthru
        _
      %p4126 = scmp.le.s32.totalorder 2, %s44
      // Predicated region
      $region157: #{resnet_forward.1} parent=5 // pred_check
        %p4127 = pneg %p4126
      $region158: #{resnet_forward.1} parent=5 // pred_check_branch
        %4129 = sbr.rel (%p4127) target = $region160
      $region159: #{resnet_forward.1} parent=5 // pred_region
        %s4130 = ssub.s32 %s44, 2
        // Predicated region
        $region161: #{resnet_forward.1} parent=159 // pred_check
          %p4131 = pneg %p645
        $region162: #{resnet_forward.1} parent=159 // pred_check_branch
          %4133 = sbr.rel (%p4131) target = $region164
        $region163: #{resnet_forward.1} parent=159 // pred_region
          %s4134 = sand.u32 %s630, 1
          %s4135 = scalar_lea.sflag [#allocation4], %s4134
          %s4136 = sand.u32 %s630, 1
          %s4137 = scalar_lea.vmem [#allocation11], %s4136
          %4139 = dma.done %s4135, 16
        $region164: #{resnet_forward.1} parent=159 // pred_fallthru
          _
        // Predicated region
        $region165: #{resnet_forward.1} parent=159 // pred_check
          %p4140 = pneg %p671
        $region166: #{resnet_forward.1} parent=159 // pred_check_branch
          %4142 = sbr.rel (%p4140) target = $region168
        $region167: #{resnet_forward.1} parent=159 // pred_region
          %s4143 = sand.u32 %s656, 1
          %s4144 = scalar_lea.sflag [#allocation13], %s4143
          %s4145 = sand.u32 %s656, 1
          %s4146 = scalar_lea.vmem [#allocation12], %s4145
          %4148 = dma.done %s4144, 16
        $region168: #{resnet_forward.1} parent=159 // pred_fallthru
          _
      $region160: #{resnet_forward.1} parent=5 // pred_fallthru
        _
    $region6: #{resnet_forward.1} parent=1 // loop_footer
      %s48 = sadd.s32 1, %s44
    $region7: #{resnet_forward.1} parent=1 // loop_footer_branch
      %43 = sbr.rel target = $region3
    $region8: #{resnet_forward.1} parent=1 // loop_exit
      _
    %4149 = vsyncpa [#allocation3], 1
    %s4150 = scalar_lea.sflag [#allocation3], 1
    %4151 = vsyncpa %s4150, 1
    %4152 = vsyncpa [#allocation6], 1
    %4153 = vsyncpa [#allocation9], 1
    %4154 = vsyncpa [#allocation4], 1
    %s4155 = scalar_lea.sflag [#allocation4], 1
    %4156 = vsyncpa %s4155, 1
    %4157 = vsyncpa [#allocation13], 1
    %s4158 = scalar_lea.sflag [#allocation13], 1
    %4159 = vsyncpa %s4158, 1

</llo_original>
